<compile_context>
chip_gen: v6e
topology: v6e:2x2x1
jax: 0.10.0
libtpu: 0.0.40
codegen_flags: <defaults>
</compile_context>

<pallas_src>
import jax
import jax.numpy as jnp
from jax import lax
from jax.experimental import pallas as pl
from jax.experimental.pallas import tpu as pltpu

KSIZE = 3
BN_EPS = 1e-5
LANE = 128

_MAX_UNTILED_L = 1024   # above this, tile L (bounds VMEM; could derive from get_tpu_info)
_L_TILE = 512           # multiple of 128 -> aligned window loads / output blocks
_TARGET_MXU_ROWS = 512  # fold batch into matmul rows up to ~this many rows


# ------------------------------- tiling plan ---------------------------------

def _choose_tiles(B, L, num_blocks):
    if L <= _MAX_UNTILED_L:
        Lt, H = L, 0                         # single L tile, no halo needed
    else:
        Lt, H = _L_TILE, 2 * num_blocks      # halo = conv radius * convs per stack, per side
    n_lt = -(-L // Lt)
    Lw = Lt + 2 * H
    Bt = 1
    for bt in range(1, B + 1):               # largest divisor of B within the row budget
        if B % bt == 0 and bt * Lw <= max(_TARGET_MXU_ROWS, Lw):
            Bt = bt
    return Bt, Lt, H, n_lt


def _vmem_limit_bytes(args, *, Bt, Lw, Lt, Lp, cin_k, cpad, cout):
    const_bytes = sum(int(a.size) * a.dtype.itemsize for a in args[1:])
    x_block = Bt * Lp * cin_k * 4
    o_block = Bt * Lt * cout * 4
    m = Bt * Lw
    act = m * cpad * 4 * 8 + m * 3 * cpad * 2 * 2       # rough f32 temps + bf16 conv LHS
    est = 2 * const_bytes + 2 * x_block + 2 * o_block + act + (4 << 20)
    return int(min(110 << 20, max(est, 32 << 20)))


# --------------------------------- kernel ------------------------------------

def _make_convnet_kernel(meta, *, Lt, Lw, H, L, tiled):
    """meta: per-block trace-time dicts {fuse1, fuse2, has_proj, i1, i2, ir}."""

    def kernel(*refs):
        x_ref, sh_ref, o_ref = refs[0], refs[1], refs[-1]
        w_refs = refs[2:-1]
        Bt = x_ref.shape[0]
        M = Bt * Lw
        lt = pl.program_id(1)

        # ---- load the (Bt, Lw, Cin) halo window; fold batch into matmul rows ----
        if tiled:
            start = pl.multiple_of(lt * Lt, Lt)
            xw = x_ref[:, pl.ds(start, Lw), :]
        else:
            xw = x_ref[...]
        x = xw.reshape(M, xw.shape[-1])                              # (M, Cin) f32

        # ---- hoisted "same"-padding masks, keyed on GLOBAL sequence position ----
        win_row = lax.broadcasted_iota(jnp.int32, (Bt, Lw, 1), 1).reshape(M, 1)
        grow = win_row + (lt * Lt - H)                               # global row index
        prev_ok = grow != 0                                          # left sequence edge
        next_ok = grow != (L - 1)                                    # right sequence edge

        def conv3(xb, w_ref, shift_idx, fused):
            """'same' K=3 conv + folded bias/BN shift on a bf16 (M, C) input."""
            zrow = jnp.zeros((1, xb.shape[1]), xb.dtype)
            xp = jnp.where(prev_ok, jnp.concatenate([zrow, xb[:-1]], axis=0), 0)
            xn = jnp.where(next_ok, jnp.concatenate([xb[1:], zrow], axis=0), 0)
            if fused:        # lane-concat LHS -> single MXU matmul (256-deep MXUs)
                lhs = jnp.concatenate([xp, xb, xn], axis=1)          # (M, 3C)
                acc = jnp.dot(lhs, w_ref[...], preferred_element_type=jnp.float32)
            else:            # 3-dot accumulate (tiny first conv / 128-deep MXUs)
                acc = jnp.dot(xp, w_ref[0], preferred_element_type=jnp.float32)
                acc += jnp.dot(xb, w_ref[1], preferred_element_type=jnp.float32)
                acc += jnp.dot(xn, w_ref[2], preferred_element_type=jnp.float32)
            return acc + sh_ref[pl.ds(shift_idx, 1), :]

        wi = 0
        for m in meta:                 # small fixed stack -> unrolled
            # TODO(synk): for deep stacks, pack identical blocks and use lax.fori_loop.
            w1, w2 = w_refs[wi], w_refs[wi + 1]
            wi += 2
            xb = x.astype(jnp.bfloat16)                              # one cast per conv input
            h1 = jnp.maximum(conv3(xb, w1, m["i1"], m["fuse1"]), 0.0)
            h2 = conv3(h1.astype(jnp.bfloat16), w2, m["i2"], m["fuse2"])
            if m["has_proj"]:
                wr = w_refs[wi]
                wi += 1
                r = jnp.dot(xb, wr[...], preferred_element_type=jnp.float32)
                r = r + sh_ref[pl.ds(m["ir"], 1), :]
            else:
                r = x
            x = jnp.maximum(h2 + r, 0.0)

        # ---- store: central Lt rows only, UNPADDED channels, channels-last ----
        cout = o_ref.shape[-1]
        y = x.reshape(Bt, Lw, x.shape[-1])[:, H:H + Lt, :cout]
        o_ref[...] = y.astype(o_ref.dtype)
        # TODO(synk): when Lt % 128 == 0, transpose here and store (Bt, cout, Lt)
        #             directly (lane-dense NCL) to also drop the wrapper transpose.

    return kernel


# -------------------------------- wrapper ------------------------------------

def _const_index_map(nd):
    def im(b, t):
        return (0,) * nd
    return im


def convnet_pallas(x_ncl, plan):
    """x_ncl: (B, Cin, L) as in PyTorch. Returns (B, Cout, L) float32."""
    B, cin, L = x_ncl.shape
    cpad, cout, cin_k = plan["cpad"], plan["cout"], plan["cin_k"]
    meta = plan["meta"]
    Bt, Lt, H, n_lt = _choose_tiles(B, L, len(meta))
    Lw = Lt + 2 * H
    Lp = n_lt * Lt + 2 * H

    # channels-last + zero halo/tile pad (L -> Lp) + channel pad (cin -> cin_k).
    x = jnp.transpose(x_ncl, (0, 2, 1)).astype(jnp.float32)
    x = jnp.pad(x, ((0, 0), (H, Lp - L - H), (0, cin_k - cin)))

    args = [x, plan["shifts"], *plan["weights"]]
    vmem_limit = _vmem_limit_bytes(args, Bt=Bt, Lw=Lw, Lt=Lt, Lp=Lp,
                                   cin_k=cin_k, cpad=cpad, cout=cout)

    def call(single_buffer_weights):
        def const_spec(a):
            kw = ({"pipeline_mode": pl.Buffered(1)}   # constants: 1 VMEM copy, no re-DMA
                  if single_buffer_weights else {})
            return pl.BlockSpec(a.shape, _const_index_map(a.ndim), **kw)

        in_specs = [pl.BlockSpec((Bt, Lp, cin_k), lambda b, t: (b, 0, 0))]
        in_specs += [const_spec(a) for a in args[1:]]

        return pl.pallas_call(
            _make_convnet_kernel(meta, Lt=Lt, Lw=Lw, H=H, L=L, tiled=n_lt > 1),
            out_shape=jax.ShapeDtypeStruct((B, L, cout), jnp.float32),
            grid_spec=pltpu.PrefetchScalarGridSpec(
                num_scalar_prefetch=0,
                grid=(B // Bt, n_lt),
                in_specs=in_specs,
                out_specs=pl.BlockSpec((Bt, Lt, cout), lambda b, t: (b, t, 0)),
            ),
            compiler_params=pltpu.CompilerParams(
                dimension_semantics=("parallel", "parallel"),
                vmem_limit_bytes=vmem_limit),
        )(*args)

    try:
        out = call(True)
    except Exception:       # pl.Buffered(1) rejected on this JAX -> default buffering
        out = call(False)

    return jnp.transpose(out, (0, 2, 1))                             # NLC -> NCL


# --------------------------- parameter preparation ---------------------------

def _fold_bn(w_oik, b_o, bn):
    """Fold eval-mode BN + conv bias: BN(conv(x)) == conv(x; w') + c'."""
    s = bn["gamma"] * lax.rsqrt(bn["var"] + BN_EPS)
    return w_oik * s[:, None, None], (b_o - bn["mean"]) * s + bn["beta"]


def _pack_conv3_w(w_oik, cin_blk, cpad, tap_fuse_ok):
    co, ci, K = w_oik.shape
    wk = jnp.transpose(w_oik, (2, 1, 0))                             # (K, Ci, Co)
    wk = jnp.pad(wk, ((0, 0), (0, cin_blk - ci), (0, cpad - co))).astype(jnp.bfloat16)
    if tap_fuse_ok and cin_blk % LANE == 0:
        return wk.reshape(K * cin_blk, cpad), True                   # fused-tap matmul
    return wk, False                                                 # 3-dot accumulate


def _pad_row(c_o, cpad):
    return jnp.pad(c_o, (0, cpad - c_o.shape[0])).astype(jnp.float32)


def _mxu_likes_fused_taps():
    # v6e/v7x contract 256 deep -> the (M, 3C) lane-concat LHS saves an MXU pass.
    # On 128-deep chips (v5e and older) it is 3 passes either way: skip the concat.
    try:
        kind = jax.devices()[0].device_kind.lower()
    except Exception:
        return True
    return not any(t in kind for t in ("v2", "v3", "v4", "v5"))


def prepare_convnet(raw_params, in_channels, tap_fuse_ok=None):
    """Fold BN+bias, pad channels, pack bf16 weights and per-channel shifts."""
    if tap_fuse_ok is None:
        tap_fuse_ok = _mxu_likes_fused_taps()
    couts = [p["w1"].shape[0] for p in raw_params]
    assert all(c == couts[0] for c in couts), "varying d_model across blocks unsupported"
    cout = couts[-1]
    cpad = -(-cout // LANE) * LANE
    # Identity-residual hazard: if block 0 has no projection, pad its input width
    # to cpad so `h2 + x` is well shaped; otherwise round cin up to 8 sublanes.
    first_has_proj = "wr" in raw_params[0]
    cin_k = (-(-in_channels // 8) * 8) if first_has_proj else cpad

    weights, shift_rows, meta = [], [], []
    cin_blk = cin_k
    for p in raw_params:
        w1f, c1 = _fold_bn(p["w1"], p["b1"], p["bn1"])
        w2f, c2 = _fold_bn(p["w2"], p["b2"], p["bn2"])
        w1, fuse1 = _pack_conv3_w(w1f, cin_blk, cpad, tap_fuse_ok)
        w2, fuse2 = _pack_conv3_w(w2f, cpad, cpad, tap_fuse_ok)
        weights += [w1, w2]
        m = {"fuse1": fuse1, "fuse2": fuse2, "has_proj": "wr" in p,
             "i1": len(shift_rows), "i2": len(shift_rows) + 1, "ir": -1}
        shift_rows += [_pad_row(c1, cpad), _pad_row(c2, cpad)]
        if m["has_proj"]:
            wrf, cr = _fold_bn(p["wr"], p["br"], p["bnr"])
            wr = jnp.pad(jnp.transpose(wrf[:, :, 0], (1, 0)),
                         ((0, cin_blk - wrf.shape[1]), (0, cpad - wrf.shape[0])))
            weights.append(wr.astype(jnp.bfloat16))
            m["ir"] = len(shift_rows)
            shift_rows.append(_pad_row(cr, cpad))
        meta.append(m)
        cin_blk = cpad
    shifts = jnp.stack(shift_rows, axis=0)                           # (n_shifts, cpad) f32
    return {"weights": weights, "shifts": shifts, "meta": meta,
            "cpad": cpad, "cout": cout, "cin_k": cin_k}


# ------------------------- raw parameter construction ------------------------

def _init_conv(key, co, ci, k):
    bound = 1.0 / (ci * k) ** 0.5
    kw, kb = jax.random.split(key)
    w = jax.random.uniform(kw, (co, ci, k), jnp.float32, -bound, bound)
    b = jax.random.uniform(kb, (co,), jnp.float32, -bound, bound)
    return w, b


def _init_bn(key, c):
    k1, k2, k3, k4 = jax.random.split(key, 4)
    return {"gamma": 1.0 + 0.1 * jax.random.normal(k1, (c,), jnp.float32),
            "beta": 0.1 * jax.random.normal(k2, (c,), jnp.float32),
            "mean": 0.1 * jax.random.normal(k3, (c,), jnp.float32),
            "var": jax.random.uniform(k4, (c,), jnp.float32, 0.5, 1.5)}


def init_resblock_params(key, cin, cout):
    ks = jax.random.split(key, 6)
    p = {}
    p["w1"], p["b1"] = _init_conv(ks[0], cout, cin, KSIZE)
    p["bn1"] = _init_bn(ks[1], cout)
    p["w2"], p["b2"] = _init_conv(ks[2], cout, cout, KSIZE)
    p["bn2"] = _init_bn(ks[3], cout)
    if cin != cout:                          # stride==1 here; projection iff cin != cout
        p["wr"], p["br"] = _init_conv(ks[4], cout, cin, 1)
        p["bnr"] = _init_bn(ks[5], cout)
    return p


def init_convnet_params(key, in_channels, d_model, num_blocks=2):
    keys = jax.random.split(key, num_blocks)
    params = [init_resblock_params(keys[0], in_channels, d_model)]
    for i in range(1, num_blocks):
        params.append(init_resblock_params(keys[i], d_model, d_model))
    return params


# ----------------------------- plain-JAX reference ---------------------------

def _conv1d_ref(x_blc, w_oik, b_o):
    _, L, _ = x_blc.shape
    K = w_oik.shape[2]
    pad = (K - 1) // 2
    xp = jnp.pad(x_blc, ((0, 0), (pad, pad), (0, 0)))
    acc = sum(jnp.einsum("blc,oc->blo", xp[:, k:k + L, :], w_oik[:, :, k],
                         precision=lax.Precision.HIGHEST) for k in range(K))
    return acc + b_o


def _bn_ref(h, bn):
    s = bn["gamma"] / jnp.sqrt(bn["var"] + BN_EPS)
    return (h - bn["mean"]) * s + bn["beta"]


def _resblock_ref(x, p):
    h = jax.nn.relu(_bn_ref(_conv1d_ref(x, p["w1"], p["b1"]), p["bn1"]))
    h = _bn_ref(_conv1d_ref(h, p["w2"], p["b2"]), p["bn2"])
    r = _bn_ref(_conv1d_ref(x, p["wr"], p["br"]), p["bnr"]) if "wr" in p else x
    return jax.nn.relu(h + r)


def convnet_ref(x_ncl, raw_params):
    x = jnp.transpose(x_ncl, (0, 2, 1)).astype(jnp.float32)
    for p in raw_params:
        x = _resblock_ref(x, p)
    return jnp.transpose(x, (0, 2, 1))


# ----------------------------------- main ------------------------------------

if __name__ == "__main__":
    root = jax.random.PRNGKey(0)
    k1, k2, k3, k4 = jax.random.split(root, 4)

    # --- test 1: toy shapes implied by the module (B=2, cin=4, d=32, L=16) ----
    B, IN_CH, D_MODEL, L, NUM_BLOCKS = 2, 4, 32, 16, 2
    x = jax.random.normal(k1, (B, IN_CH, L), dtype=jnp.float32)      # PyTorch NCL layout
    raw = init_convnet_params(k2, IN_CH, D_MODEL, num_blocks=NUM_BLOCKS)
    plan = prepare_convnet(raw, IN_CH)
    out = jax.block_until_ready(convnet_pallas(x, plan))
    assert out.shape == (B, D_MODEL, L), out.shape
    ref = convnet_ref(x, raw)
    err = float(jnp.max(jnp.abs(out - ref)))
    assert jnp.allclose(out, ref, rtol=5e-2, atol=5e-2), err         # bf16 MXU operands

    # --- test 2: longer sequence -> exercises the L-tile + halo path ----------
    L2 = 1280                                                        # ragged: 3 tiles of 512
    x2 = jax.random.normal(k3, (B, IN_CH, L2), dtype=jnp.float32)
    raw2 = init_convnet_params(k4, IN_CH, D_MODEL, num_blocks=NUM_BLOCKS)
    plan2 = prepare_convnet(raw2, IN_CH)
    out2 = jax.block_until_ready(convnet_pallas(x2, plan2))
    assert out2.shape == (B, D_MODEL, L2), out2.shape
    ref2 = convnet_ref(x2, raw2)
    err2 = float(jnp.max(jnp.abs(out2 - ref2)))
    assert jnp.allclose(out2, ref2, rtol=5e-2, atol=5e-2), err2

    print("KERNEL_OK")
</pallas_src>

<mosaic_0001>
module attributes {stable_mosaic.version = 11 : i64} {
  func.func @kernel(%arg0: i32, %arg1: i32, %arg2: memref<2x16x8xf32, #tpu.memory_space<vmem>>, %arg3: memref<5x128xf32, #tpu.memory_space<vmem>>, %arg4: memref<3x8x128xbf16, #tpu.memory_space<vmem>>, %arg5: memref<384x128xbf16, #tpu.memory_space<vmem>>, %arg6: memref<8x128xbf16, #tpu.memory_space<vmem>>, %arg7: memref<384x128xbf16, #tpu.memory_space<vmem>>, %arg8: memref<384x128xbf16, #tpu.memory_space<vmem>>, %arg9: memref<2x16x32xf32, #tpu.memory_space<vmem>>) attributes {dimension_semantics = [#tpu.dimension_semantics<parallel>, #tpu.dimension_semantics<parallel>], iteration_bounds = array<i64: 1, 1>, scalar_prefetch = 0 : i64, scratch_operands = 0 : i64, tpu.core_type = #tpu.core_type<tc>, window_params = [{transform_indices = @transform_0, window_bounds = array<i64: 2, 16, 8>}, {pipeline_mode = #tpu.pipeline_mode<synchronous>, transform_indices = @transform_1, window_bounds = array<i64: 5, 128>}, {pipeline_mode = #tpu.pipeline_mode<synchronous>, transform_indices = @transform_2, window_bounds = array<i64: 3, 8, 128>}, {pipeline_mode = #tpu.pipeline_mode<synchronous>, transform_indices = @transform_3, window_bounds = array<i64: 384, 128>}, {pipeline_mode = #tpu.pipeline_mode<synchronous>, transform_indices = @transform_4, window_bounds = array<i64: 8, 128>}, {pipeline_mode = #tpu.pipeline_mode<synchronous>, transform_indices = @transform_5, window_bounds = array<i64: 384, 128>}, {pipeline_mode = #tpu.pipeline_mode<synchronous>, transform_indices = @transform_6, window_bounds = array<i64: 384, 128>}, {transform_indices = @transform_7, window_bounds = array<i64: 2, 16, 32>}]} {
    %c0 = arith.constant 0 : index
    %c0_0 = arith.constant 0 : index
    %c0_1 = arith.constant 0 : index
    %0 = vector.load %arg2[%c0, %c0_0, %c0_1] : memref<2x16x8xf32, #tpu.memory_space<vmem>>, vector<2x16x8xf32>
    %1 = vector.shape_cast %0 : vector<2x16x8xf32> to vector<32x8xf32>
    %2 = tpu.iota {dimensions = array<i32: 1>} : vector<2x16x1xi32>
    %3 = vector.shape_cast %2 : vector<2x16x1xi32> to vector<32x1xi32>
    %c16_i32 = arith.constant 16 : i32
    %4 = arith.muli %arg1, %c16_i32 : i32
    %c0_i32 = arith.constant 0 : i32
    %5 = arith.subi %4, %c0_i32 : i32
    %6 = vector.broadcast %5 : i32 to vector<32x1xi32>
    %7 = arith.addi %3, %6 : vector<32x1xi32>
    %c0_i32_2 = arith.constant 0 : i32
    %8 = vector.broadcast %c0_i32_2 : i32 to vector<32x1xi32>
    %9 = arith.cmpi ne, %7, %8 : vector<32x1xi32>
    %c15_i32 = arith.constant 15 : i32
    %10 = vector.broadcast %c15_i32 : i32 to vector<32x1xi32>
    %11 = arith.cmpi ne, %7, %10 : vector<32x1xi32>
    %12 = arith.truncf %1 : vector<32x8xf32> to vector<32x8xbf16>
    %cst = arith.constant 0.000000e+00 : bf16
    %13 = vector.broadcast %cst : bf16 to vector<1x8xbf16>
    %14 = vector.extract_strided_slice %12 {offsets = [0, 0], sizes = [31, 8], strides = [1, 1]} : vector<32x8xbf16> to vector<31x8xbf16>
    %15 = tpu.concatenate %13, %14 in 0 : vector<1x8xbf16>, vector<31x8xbf16> -> vector<32x8xbf16>
    %c0_i32_3 = arith.constant 0 : i32
    %16 = arith.sitofp %c0_i32_3 : i32 to bf16
    %17 = vector.shape_cast %9 : vector<32x1xi1> to vector<32x1xi1>
    %18 = vector.broadcast %17 : vector<32x1xi1> to vector<32x8xi1>
    %19 = vector.broadcast %16 : bf16 to vector<32x8xbf16>
    %20 = arith.select %18, %15, %19 : vector<32x8xi1>, vector<32x8xbf16>
    %21 = vector.extract_strided_slice %12 {offsets = [1, 0], sizes = [31, 8], strides = [1, 1]} : vector<32x8xbf16> to vector<31x8xbf16>
    %22 = tpu.concatenate %21, %13 in 0 : vector<31x8xbf16>, vector<1x8xbf16> -> vector<32x8xbf16>
    %c0_i32_4 = arith.constant 0 : i32
    %23 = arith.sitofp %c0_i32_4 : i32 to bf16
    %24 = vector.shape_cast %11 : vector<32x1xi1> to vector<32x1xi1>
    %25 = vector.broadcast %24 : vector<32x1xi1> to vector<32x8xi1>
    %26 = vector.broadcast %23 : bf16 to vector<32x8xbf16>
    %27 = arith.select %25, %22, %26 : vector<32x8xi1>, vector<32x8xbf16>
    %c0_5 = arith.constant 0 : index
    %c0_6 = arith.constant 0 : index
    %c0_7 = arith.constant 0 : index
    %28 = vector.load %arg4[%c0_5, %c0_6, %c0_7] : memref<3x8x128xbf16, #tpu.memory_space<vmem>>, vector<1x8x128xbf16>
    %29 = vector.shape_cast %28 : vector<1x8x128xbf16> to vector<8x128xbf16>
    %cst_8 = arith.constant dense<0.000000e+00> : vector<32x128xf32>
    %30 = tpu.matmul %20, %29, %cst_8 {dimension_numbers = #tpu.dot_dimension_numbers<[1], [0], [0], [1], [0, 0, 1, 1], [], []>} : vector<32x8xbf16>, vector<8x128xbf16>, vector<32x128xf32> -> vector<32x128xf32>
    %c1 = arith.constant 1 : index
    %c0_9 = arith.constant 0 : index
    %c0_10 = arith.constant 0 : index
    %31 = vector.load %arg4[%c1, %c0_9, %c0_10] : memref<3x8x128xbf16, #tpu.memory_space<vmem>>, vector<1x8x128xbf16>
    %32 = vector.shape_cast %31 : vector<1x8x128xbf16> to vector<8x128xbf16>
    %cst_11 = arith.constant dense<0.000000e+00> : vector<32x128xf32>
    %33 = tpu.matmul %12, %32, %cst_11 {dimension_numbers = #tpu.dot_dimension_numbers<[1], [0], [0], [1], [0, 0, 1, 1], [], []>} : vector<32x8xbf16>, vector<8x128xbf16>, vector<32x128xf32> -> vector<32x128xf32>
    %34 = arith.addf %30, %33 : vector<32x128xf32>
    %c2 = arith.constant 2 : index
    %c0_12 = arith.constant 0 : index
    %c0_13 = arith.constant 0 : index
    %35 = vector.load %arg4[%c2, %c0_12, %c0_13] : memref<3x8x128xbf16, #tpu.memory_space<vmem>>, vector<1x8x128xbf16>
    %36 = vector.shape_cast %35 : vector<1x8x128xbf16> to vector<8x128xbf16>
    %cst_14 = arith.constant dense<0.000000e+00> : vector<32x128xf32>
    %37 = tpu.matmul %27, %36, %cst_14 {dimension_numbers = #tpu.dot_dimension_numbers<[1], [0], [0], [1], [0, 0, 1, 1], [], []>} : vector<32x8xbf16>, vector<8x128xbf16>, vector<32x128xf32> -> vector<32x128xf32>
    %38 = arith.addf %34, %37 : vector<32x128xf32>
    %c0_15 = arith.constant 0 : index
    %c0_16 = arith.constant 0 : index
    %39 = vector.load %arg3[%c0_15, %c0_16] : memref<5x128xf32, #tpu.memory_space<vmem>>, vector<1x128xf32>
    %40 = vector.broadcast %39 : vector<1x128xf32> to vector<32x128xf32>
    %41 = arith.addf %38, %40 : vector<32x128xf32>
    %cst_17 = arith.constant 0.000000e+00 : f32
    %42 = vector.broadcast %cst_17 : f32 to vector<32x128xf32>
    %43 = arith.maximumf %41, %42 : vector<32x128xf32>
    %44 = arith.truncf %43 : vector<32x128xf32> to vector<32x128xbf16>
    %cst_18 = arith.constant 0.000000e+00 : bf16
    %45 = vector.broadcast %cst_18 : bf16 to vector<1x128xbf16>
    %46 = vector.extract_strided_slice %44 {offsets = [0, 0], sizes = [31, 128], strides = [1, 1]} : vector<32x128xbf16> to vector<31x128xbf16>
    %47 = tpu.concatenate %45, %46 in 0 : vector<1x128xbf16>, vector<31x128xbf16> -> vector<32x128xbf16>
    %c0_i32_19 = arith.constant 0 : i32
    %48 = arith.sitofp %c0_i32_19 : i32 to bf16
    %49 = vector.shape_cast %9 : vector<32x1xi1> to vector<32x1xi1>
    %50 = vector.broadcast %49 : vector<32x1xi1> to vector<32x128xi1>
    %51 = vector.broadcast %48 : bf16 to vector<32x128xbf16>
    %52 = arith.select %50, %47, %51 : vector<32x128xi1>, vector<32x128xbf16>
    %53 = vector.extract_strided_slice %44 {offsets = [1, 0], sizes = [31, 128], strides = [1, 1]} : vector<32x128xbf16> to vector<31x128xbf16>
    %54 = tpu.concatenate %53, %45 in 0 : vector<31x128xbf16>, vector<1x128xbf16> -> vector<32x128xbf16>
    %c0_i32_20 = arith.constant 0 : i32
    %55 = arith.sitofp %c0_i32_20 : i32 to bf16
    %56 = vector.shape_cast %11 : vector<32x1xi1> to vector<32x1xi1>
    %57 = vector.broadcast %56 : vector<32x1xi1> to vector<32x128xi1>
    %58 = vector.broadcast %55 : bf16 to vector<32x128xbf16>
    %59 = arith.select %57, %54, %58 : vector<32x128xi1>, vector<32x128xbf16>
    %60 = tpu.concatenate %52, %44, %59 in 1 : vector<32x128xbf16>, vector<32x128xbf16>, vector<32x128xbf16> -> vector<32x384xbf16>
    %c0_21 = arith.constant 0 : index
    %c0_22 = arith.constant 0 : index
    %61 = vector.load %arg5[%c0_21, %c0_22] : memref<384x128xbf16, #tpu.memory_space<vmem>>, vector<384x128xbf16>
    %cst_23 = arith.constant dense<0.000000e+00> : vector<32x128xf32>
    %62 = tpu.matmul %60, %61, %cst_23 {dimension_numbers = #tpu.dot_dimension_numbers<[1], [0], [0], [1], [0, 0, 1, 1], [], []>} : vector<32x384xbf16>, vector<384x128xbf16>, vector<32x128xf32> -> vector<32x128xf32>
    %c1_24 = arith.constant 1 : index
    %c0_25 = arith.constant 0 : index
    %63 = vector.load %arg3[%c1_24, %c0_25] : memref<5x128xf32, #tpu.memory_space<vmem>>, vector<1x128xf32>
    %64 = vector.broadcast %63 : vector<1x128xf32> to vector<32x128xf32>
    %65 = arith.addf %62, %64 : vector<32x128xf32>
    %c0_26 = arith.constant 0 : index
    %c0_27 = arith.constant 0 : index
    %66 = vector.load %arg6[%c0_26, %c0_27] : memref<8x128xbf16, #tpu.memory_space<vmem>>, vector<8x128xbf16>
    %cst_28 = arith.constant dense<0.000000e+00> : vector<32x128xf32>
    %67 = tpu.matmul %12, %66, %cst_28 {dimension_numbers = #tpu.dot_dimension_numbers<[1], [0], [0], [1], [0, 0, 1, 1], [], []>} : vector<32x8xbf16>, vector<8x128xbf16>, vector<32x128xf32> -> vector<32x128xf32>
    %c2_29 = arith.constant 2 : index
    %c0_30 = arith.constant 0 : index
    %68 = vector.load %arg3[%c2_29, %c0_30] : memref<5x128xf32, #tpu.memory_space<vmem>>, vector<1x128xf32>
    %69 = vector.broadcast %68 : vector<1x128xf32> to vector<32x128xf32>
    %70 = arith.addf %67, %69 : vector<32x128xf32>
    %71 = arith.addf %65, %70 : vector<32x128xf32>
    %cst_31 = arith.constant 0.000000e+00 : f32
    %72 = vector.broadcast %cst_31 : f32 to vector<32x128xf32>
    %73 = arith.maximumf %71, %72 : vector<32x128xf32>
    %74 = arith.truncf %73 : vector<32x128xf32> to vector<32x128xbf16>
    %cst_32 = arith.constant 0.000000e+00 : bf16
    %75 = vector.broadcast %cst_32 : bf16 to vector<1x128xbf16>
    %76 = vector.extract_strided_slice %74 {offsets = [0, 0], sizes = [31, 128], strides = [1, 1]} : vector<32x128xbf16> to vector<31x128xbf16>
    %77 = tpu.concatenate %75, %76 in 0 : vector<1x128xbf16>, vector<31x128xbf16> -> vector<32x128xbf16>
    %c0_i32_33 = arith.constant 0 : i32
    %78 = arith.sitofp %c0_i32_33 : i32 to bf16
    %79 = vector.shape_cast %9 : vector<32x1xi1> to vector<32x1xi1>
    %80 = vector.broadcast %79 : vector<32x1xi1> to vector<32x128xi1>
    %81 = vector.broadcast %78 : bf16 to vector<32x128xbf16>
    %82 = arith.select %80, %77, %81 : vector<32x128xi1>, vector<32x128xbf16>
    %83 = vector.extract_strided_slice %74 {offsets = [1, 0], sizes = [31, 128], strides = [1, 1]} : vector<32x128xbf16> to vector<31x128xbf16>
    %84 = tpu.concatenate %83, %75 in 0 : vector<31x128xbf16>, vector<1x128xbf16> -> vector<32x128xbf16>
    %c0_i32_34 = arith.constant 0 : i32
    %85 = arith.sitofp %c0_i32_34 : i32 to bf16
    %86 = vector.shape_cast %11 : vector<32x1xi1> to vector<32x1xi1>
    %87 = vector.broadcast %86 : vector<32x1xi1> to vector<32x128xi1>
    %88 = vector.broadcast %85 : bf16 to vector<32x128xbf16>
    %89 = arith.select %87, %84, %88 : vector<32x128xi1>, vector<32x128xbf16>
    %90 = tpu.concatenate %82, %74, %89 in 1 : vector<32x128xbf16>, vector<32x128xbf16>, vector<32x128xbf16> -> vector<32x384xbf16>
    %c0_35 = arith.constant 0 : index
    %c0_36 = arith.constant 0 : index
    %91 = vector.load %arg7[%c0_35, %c0_36] : memref<384x128xbf16, #tpu.memory_space<vmem>>, vector<384x128xbf16>
    %cst_37 = arith.constant dense<0.000000e+00> : vector<32x128xf32>
    %92 = tpu.matmul %90, %91, %cst_37 {dimension_numbers = #tpu.dot_dimension_numbers<[1], [0], [0], [1], [0, 0, 1, 1], [], []>} : vector<32x384xbf16>, vector<384x128xbf16>, vector<32x128xf32> -> vector<32x128xf32>
    %c3 = arith.constant 3 : index
    %c0_38 = arith.constant 0 : index
    %93 = vector.load %arg3[%c3, %c0_38] : memref<5x128xf32, #tpu.memory_space<vmem>>, vector<1x128xf32>
    %94 = vector.broadcast %93 : vector<1x128xf32> to vector<32x128xf32>
    %95 = arith.addf %92, %94 : vector<32x128xf32>
    %cst_39 = arith.constant 0.000000e+00 : f32
    %96 = vector.broadcast %cst_39 : f32 to vector<32x128xf32>
    %97 = arith.maximumf %95, %96 : vector<32x128xf32>
    %98 = arith.truncf %97 : vector<32x128xf32> to vector<32x128xbf16>
    %cst_40 = arith.constant 0.000000e+00 : bf16
    %99 = vector.broadcast %cst_40 : bf16 to vector<1x128xbf16>
    %100 = vector.extract_strided_slice %98 {offsets = [0, 0], sizes = [31, 128], strides = [1, 1]} : vector<32x128xbf16> to vector<31x128xbf16>
    %101 = tpu.concatenate %99, %100 in 0 : vector<1x128xbf16>, vector<31x128xbf16> -> vector<32x128xbf16>
    %c0_i32_41 = arith.constant 0 : i32
    %102 = arith.sitofp %c0_i32_41 : i32 to bf16
    %103 = vector.shape_cast %9 : vector<32x1xi1> to vector<32x1xi1>
    %104 = vector.broadcast %103 : vector<32x1xi1> to vector<32x128xi1>
    %105 = vector.broadcast %102 : bf16 to vector<32x128xbf16>
    %106 = arith.select %104, %101, %105 : vector<32x128xi1>, vector<32x128xbf16>
    %107 = vector.extract_strided_slice %98 {offsets = [1, 0], sizes = [31, 128], strides = [1, 1]} : vector<32x128xbf16> to vector<31x128xbf16>
    %108 = tpu.concatenate %107, %99 in 0 : vector<31x128xbf16>, vector<1x128xbf16> -> vector<32x128xbf16>
    %c0_i32_42 = arith.constant 0 : i32
    %109 = arith.sitofp %c0_i32_42 : i32 to bf16
    %110 = vector.shape_cast %11 : vector<32x1xi1> to vector<32x1xi1>
    %111 = vector.broadcast %110 : vector<32x1xi1> to vector<32x128xi1>
    %112 = vector.broadcast %109 : bf16 to vector<32x128xbf16>
    %113 = arith.select %111, %108, %112 : vector<32x128xi1>, vector<32x128xbf16>
    %114 = tpu.concatenate %106, %98, %113 in 1 : vector<32x128xbf16>, vector<32x128xbf16>, vector<32x128xbf16> -> vector<32x384xbf16>
    %c0_43 = arith.constant 0 : index
    %c0_44 = arith.constant 0 : index
    %115 = vector.load %arg8[%c0_43, %c0_44] : memref<384x128xbf16, #tpu.memory_space<vmem>>, vector<384x128xbf16>
    %cst_45 = arith.constant dense<0.000000e+00> : vector<32x128xf32>
    %116 = tpu.matmul %114, %115, %cst_45 {dimension_numbers = #tpu.dot_dimension_numbers<[1], [0], [0], [1], [0, 0, 1, 1], [], []>} : vector<32x384xbf16>, vector<384x128xbf16>, vector<32x128xf32> -> vector<32x128xf32>
    %c4 = arith.constant 4 : index
    %c0_46 = arith.constant 0 : index
    %117 = vector.load %arg3[%c4, %c0_46] : memref<5x128xf32, #tpu.memory_space<vmem>>, vector<1x128xf32>
    %118 = vector.broadcast %117 : vector<1x128xf32> to vector<32x128xf32>
    %119 = arith.addf %116, %118 : vector<32x128xf32>
    %120 = arith.addf %119, %73 : vector<32x128xf32>
    %cst_47 = arith.constant 0.000000e+00 : f32
    %121 = vector.broadcast %cst_47 : f32 to vector<32x128xf32>
    %122 = arith.maximumf %120, %121 : vector<32x128xf32>
    %123 = vector.shape_cast %122 : vector<32x128xf32> to vector<2x16x128xf32>
    %124 = vector.extract_strided_slice %123 {offsets = [0, 0, 0], sizes = [2, 16, 32], strides = [1, 1, 1]} : vector<2x16x128xf32> to vector<2x16x32xf32>
    %c0_48 = arith.constant 0 : index
    %c0_49 = arith.constant 0 : index
    %c0_50 = arith.constant 0 : index
    %125 = vector.load %arg9[%c0_48, %c0_49, %c0_50] : memref<2x16x32xf32, #tpu.memory_space<vmem>>, vector<2x16x32xf32>
    tpu.vector_store %arg9[%c0_48, %c0_49, %c0_50], %124 {strides = array<i32>} : memref<2x16x32xf32, #tpu.memory_space<vmem>>, vector<2x16x32xf32>,
    return
  }
  func.func @transform_0(%arg0: i32, %arg1: i32) -> (i32, i32, i32) {
    %c0_i32 = arith.constant 0 : i32
    %c0_i32_0 = arith.constant 0 : i32
    %c0_i32_1 = arith.constant 0 : i32
    return %arg0, %c0_i32, %c0_i32_0 : i32, i32, i32
  }
  func.func @transform_1(%arg0: i32, %arg1: i32) -> (i32, i32) {
    %c0_i32 = arith.constant 0 : i32
    %c0_i32_0 = arith.constant 0 : i32
    %c0_i32_1 = arith.constant 0 : i32
    return %c0_i32, %c0_i32_0 : i32, i32
  }
  func.func @transform_2(%arg0: i32, %arg1: i32) -> (i32, i32, i32) {
    %c0_i32 = arith.constant 0 : i32
    %c0_i32_0 = arith.constant 0 : i32
    %c0_i32_1 = arith.constant 0 : i32
    %c0_i32_2 = arith.constant 0 : i32
    return %c0_i32, %c0_i32_0, %c0_i32_1 : i32, i32, i32
  }
  func.func @transform_3(%arg0: i32, %arg1: i32) -> (i32, i32) {
    %c0_i32 = arith.constant 0 : i32
    %c0_i32_0 = arith.constant 0 : i32
    %c0_i32_1 = arith.constant 0 : i32
    return %c0_i32, %c0_i32_0 : i32, i32
  }
  func.func @transform_4(%arg0: i32, %arg1: i32) -> (i32, i32) {
    %c0_i32 = arith.constant 0 : i32
    %c0_i32_0 = arith.constant 0 : i32
    %c0_i32_1 = arith.constant 0 : i32
    return %c0_i32, %c0_i32_0 : i32, i32
  }
  func.func @transform_5(%arg0: i32, %arg1: i32) -> (i32, i32) {
    %c0_i32 = arith.constant 0 : i32
    %c0_i32_0 = arith.constant 0 : i32
    %c0_i32_1 = arith.constant 0 : i32
    return %c0_i32, %c0_i32_0 : i32, i32
  }
  func.func @transform_6(%arg0: i32, %arg1: i32) -> (i32, i32) {
    %c0_i32 = arith.constant 0 : i32
    %c0_i32_0 = arith.constant 0 : i32
    %c0_i32_1 = arith.constant 0 : i32
    return %c0_i32, %c0_i32_0 : i32, i32
  }
  func.func @transform_7(%arg0: i32, %arg1: i32) -> (i32, i32, i32) {
    %c0_i32 = arith.constant 0 : i32
    %c0_i32_0 = arith.constant 0 : i32
    return %arg0, %arg1, %c0_i32 : i32, i32, i32
  }
}

module attributes {stable_mosaic.version = 11 : i64} {
  func.func @kernel(%arg0: i32, %arg1: i32, %arg2: memref<2x16x8xf32, #tpu.memory_space<vmem>>, %arg3: memref<5x128xf32, #tpu.memory_space<vmem>>, %arg4: memref<3x8x128xbf16, #tpu.memory_space<vmem>>, %arg5: memref<384x128xbf16, #tpu.memory_space<vmem>>, %arg6: memref<8x128xbf16, #tpu.memory_space<vmem>>, %arg7: memref<384x128xbf16, #tpu.memory_space<vmem>>, %arg8: memref<384x128xbf16, #tpu.memory_space<vmem>>, %arg9: memref<2x16x32xf32, #tpu.memory_space<vmem>>) attributes {dimension_semantics = [#tpu.dimension_semantics<parallel>, #tpu.dimension_semantics<parallel>], iteration_bounds = array<i64: 1, 1>, scalar_prefetch = 0 : i64, scratch_operands = 0 : i64, tpu.core_type = #tpu.core_type<tc>, window_params = [{transform_indices = @transform_0, window_bounds = array<i64: 2, 16, 8>}, {pipeline_mode = #tpu.pipeline_mode<synchronous>, transform_indices = @transform_1, window_bounds = array<i64: 5, 128>}, {pipeline_mode = #tpu.pipeline_mode<synchronous>, transform_indices = @transform_2, window_bounds = array<i64: 3, 8, 128>}, {pipeline_mode = #tpu.pipeline_mode<synchronous>, transform_indices = @transform_3, window_bounds = array<i64: 384, 128>}, {pipeline_mode = #tpu.pipeline_mode<synchronous>, transform_indices = @transform_4, window_bounds = array<i64: 8, 128>}, {pipeline_mode = #tpu.pipeline_mode<synchronous>, transform_indices = @transform_5, window_bounds = array<i64: 384, 128>}, {pipeline_mode = #tpu.pipeline_mode<synchronous>, transform_indices = @transform_6, window_bounds = array<i64: 384, 128>}, {transform_indices = @transform_7, window_bounds = array<i64: 2, 16, 32>}]} {
    %c0 = arith.constant 0 : index
    %c0_0 = arith.constant 0 : index
    %c0_1 = arith.constant 0 : index
    %0 = vector.load %arg2[%c0, %c0_0, %c0_1] : memref<2x16x8xf32, #tpu.memory_space<vmem>>, vector<2x16x8xf32>
    %1 = vector.shape_cast %0 : vector<2x16x8xf32> to vector<32x8xf32>
    %2 = tpu.iota {dimensions = array<i32: 1>} : vector<2x16x1xi32>
    %3 = vector.shape_cast %2 : vector<2x16x1xi32> to vector<32x1xi32>
    %c16_i32 = arith.constant 16 : i32
    %4 = arith.muli %arg1, %c16_i32 : i32
    %c0_i32 = arith.constant 0 : i32
    %5 = arith.subi %4, %c0_i32 : i32
    %6 = vector.broadcast %5 : i32 to vector<32x1xi32>
    %7 = arith.addi %3, %6 : vector<32x1xi32>
    %c0_i32_2 = arith.constant 0 : i32
    %8 = vector.broadcast %c0_i32_2 : i32 to vector<32x1xi32>
    %9 = arith.cmpi ne, %7, %8 : vector<32x1xi32>
    %c15_i32 = arith.constant 15 : i32
    %10 = vector.broadcast %c15_i32 : i32 to vector<32x1xi32>
    %11 = arith.cmpi ne, %7, %10 : vector<32x1xi32>
    %12 = arith.truncf %1 : vector<32x8xf32> to vector<32x8xbf16>
    %cst = arith.constant 0.000000e+00 : bf16
    %13 = vector.broadcast %cst : bf16 to vector<1x8xbf16>
    %14 = vector.extract_strided_slice %12 {offsets = [0, 0], sizes = [31, 8], strides = [1, 1]} : vector<32x8xbf16> to vector<31x8xbf16>
    %15 = tpu.concatenate %13, %14 in 0 : vector<1x8xbf16>, vector<31x8xbf16> -> vector<32x8xbf16>
    %c0_i32_3 = arith.constant 0 : i32
    %16 = arith.sitofp %c0_i32_3 : i32 to bf16
    %17 = vector.shape_cast %9 : vector<32x1xi1> to vector<32x1xi1>
    %18 = vector.broadcast %17 : vector<32x1xi1> to vector<32x8xi1>
    %19 = vector.broadcast %16 : bf16 to vector<32x8xbf16>
    %20 = arith.select %18, %15, %19 : vector<32x8xi1>, vector<32x8xbf16>
    %21 = vector.extract_strided_slice %12 {offsets = [1, 0], sizes = [31, 8], strides = [1, 1]} : vector<32x8xbf16> to vector<31x8xbf16>
    %22 = tpu.concatenate %21, %13 in 0 : vector<31x8xbf16>, vector<1x8xbf16> -> vector<32x8xbf16>
    %c0_i32_4 = arith.constant 0 : i32
    %23 = arith.sitofp %c0_i32_4 : i32 to bf16
    %24 = vector.shape_cast %11 : vector<32x1xi1> to vector<32x1xi1>
    %25 = vector.broadcast %24 : vector<32x1xi1> to vector<32x8xi1>
    %26 = vector.broadcast %23 : bf16 to vector<32x8xbf16>
    %27 = arith.select %25, %22, %26 : vector<32x8xi1>, vector<32x8xbf16>
    %c0_5 = arith.constant 0 : index
    %c0_6 = arith.constant 0 : index
    %c0_7 = arith.constant 0 : index
    %28 = vector.load %arg4[%c0_5, %c0_6, %c0_7] : memref<3x8x128xbf16, #tpu.memory_space<vmem>>, vector<1x8x128xbf16>
    %29 = vector.shape_cast %28 : vector<1x8x128xbf16> to vector<8x128xbf16>
    %cst_8 = arith.constant dense<0.000000e+00> : vector<32x128xf32>
    %30 = tpu.matmul %20, %29, %cst_8 {dimension_numbers = #tpu.dot_dimension_numbers<[1], [0], [0], [1], [0, 0, 1, 1], [], []>} : vector<32x8xbf16>, vector<8x128xbf16>, vector<32x128xf32> -> vector<32x128xf32>
    %c1 = arith.constant 1 : index
    %c0_9 = arith.constant 0 : index
    %c0_10 = arith.constant 0 : index
    %31 = vector.load %arg4[%c1, %c0_9, %c0_10] : memref<3x8x128xbf16, #tpu.memory_space<vmem>>, vector<1x8x128xbf16>
    %32 = vector.shape_cast %31 : vector<1x8x128xbf16> to vector<8x128xbf16>
    %cst_11 = arith.constant dense<0.000000e+00> : vector<32x128xf32>
    %33 = tpu.matmul %12, %32, %cst_11 {dimension_numbers = #tpu.dot_dimension_numbers<[1], [0], [0], [1], [0, 0, 1, 1], [], []>} : vector<32x8xbf16>, vector<8x128xbf16>, vector<32x128xf32> -> vector<32x128xf32>
    %34 = arith.addf %30, %33 : vector<32x128xf32>
    %c2 = arith.constant 2 : index
    %c0_12 = arith.constant 0 : index
    %c0_13 = arith.constant 0 : index
    %35 = vector.load %arg4[%c2, %c0_12, %c0_13] : memref<3x8x128xbf16, #tpu.memory_space<vmem>>, vector<1x8x128xbf16>
    %36 = vector.shape_cast %35 : vector<1x8x128xbf16> to vector<8x128xbf16>
    %cst_14 = arith.constant dense<0.000000e+00> : vector<32x128xf32>
    %37 = tpu.matmul %27, %36, %cst_14 {dimension_numbers = #tpu.dot_dimension_numbers<[1], [0], [0], [1], [0, 0, 1, 1], [], []>} : vector<32x8xbf16>, vector<8x128xbf16>, vector<32x128xf32> -> vector<32x128xf32>
    %38 = arith.addf %34, %37 : vector<32x128xf32>
    %c0_15 = arith.constant 0 : index
    %c0_16 = arith.constant 0 : index
    %39 = vector.load %arg3[%c0_15, %c0_16] : memref<5x128xf32, #tpu.memory_space<vmem>>, vector<1x128xf32>
    %40 = vector.broadcast %39 : vector<1x128xf32> to vector<32x128xf32>
    %41 = arith.addf %38, %40 : vector<32x128xf32>
    %cst_17 = arith.constant 0.000000e+00 : f32
    %42 = vector.broadcast %cst_17 : f32 to vector<32x128xf32>
    %43 = arith.maximumf %41, %42 : vector<32x128xf32>
    %44 = arith.truncf %43 : vector<32x128xf32> to vector<32x128xbf16>
    %cst_18 = arith.constant 0.000000e+00 : bf16
    %45 = vector.broadcast %cst_18 : bf16 to vector<1x128xbf16>
    %46 = vector.extract_strided_slice %44 {offsets = [0, 0], sizes = [31, 128], strides = [1, 1]} : vector<32x128xbf16> to vector<31x128xbf16>
    %47 = tpu.concatenate %45, %46 in 0 : vector<1x128xbf16>, vector<31x128xbf16> -> vector<32x128xbf16>
    %c0_i32_19 = arith.constant 0 : i32
    %48 = arith.sitofp %c0_i32_19 : i32 to bf16
    %49 = vector.shape_cast %9 : vector<32x1xi1> to vector<32x1xi1>
    %50 = vector.broadcast %49 : vector<32x1xi1> to vector<32x128xi1>
    %51 = vector.broadcast %48 : bf16 to vector<32x128xbf16>
    %52 = arith.select %50, %47, %51 : vector<32x128xi1>, vector<32x128xbf16>
    %53 = vector.extract_strided_slice %44 {offsets = [1, 0], sizes = [31, 128], strides = [1, 1]} : vector<32x128xbf16> to vector<31x128xbf16>
    %54 = tpu.concatenate %53, %45 in 0 : vector<31x128xbf16>, vector<1x128xbf16> -> vector<32x128xbf16>
    %c0_i32_20 = arith.constant 0 : i32
    %55 = arith.sitofp %c0_i32_20 : i32 to bf16
    %56 = vector.shape_cast %11 : vector<32x1xi1> to vector<32x1xi1>
    %57 = vector.broadcast %56 : vector<32x1xi1> to vector<32x128xi1>
    %58 = vector.broadcast %55 : bf16 to vector<32x128xbf16>
    %59 = arith.select %57, %54, %58 : vector<32x128xi1>, vector<32x128xbf16>
    %60 = tpu.concatenate %52, %44, %59 in 1 : vector<32x128xbf16>, vector<32x128xbf16>, vector<32x128xbf16> -> vector<32x384xbf16>
    %c0_21 = arith.constant 0 : index
    %c0_22 = arith.constant 0 : index
    %61 = vector.load %arg5[%c0_21, %c0_22] : memref<384x128xbf16, #tpu.memory_space<vmem>>, vector<384x128xbf16>
    %cst_23 = arith.constant dense<0.000000e+00> : vector<32x128xf32>
    %62 = tpu.matmul %60, %61, %cst_23 {dimension_numbers = #tpu.dot_dimension_numbers<[1], [0], [0], [1], [0, 0, 1, 1], [], []>} : vector<32x384xbf16>, vector<384x128xbf16>, vector<32x128xf32> -> vector<32x128xf32>
    %c1_24 = arith.constant 1 : index
    %c0_25 = arith.constant 0 : index
    %63 = vector.load %arg3[%c1_24, %c0_25] : memref<5x128xf32, #tpu.memory_space<vmem>>, vector<1x128xf32>
    %64 = vector.broadcast %63 : vector<1x128xf32> to vector<32x128xf32>
    %65 = arith.addf %62, %64 : vector<32x128xf32>
    %c0_26 = arith.constant 0 : index
    %c0_27 = arith.constant 0 : index
    %66 = vector.load %arg6[%c0_26, %c0_27] : memref<8x128xbf16, #tpu.memory_space<vmem>>, vector<8x128xbf16>
    %cst_28 = arith.constant dense<0.000000e+00> : vector<32x128xf32>
    %67 = tpu.matmul %12, %66, %cst_28 {dimension_numbers = #tpu.dot_dimension_numbers<[1], [0], [0], [1], [0, 0, 1, 1], [], []>} : vector<32x8xbf16>, vector<8x128xbf16>, vector<32x128xf32> -> vector<32x128xf32>
    %c2_29 = arith.constant 2 : index
    %c0_30 = arith.constant 0 : index
    %68 = vector.load %arg3[%c2_29, %c0_30] : memref<5x128xf32, #tpu.memory_space<vmem>>, vector<1x128xf32>
    %69 = vector.broadcast %68 : vector<1x128xf32> to vector<32x128xf32>
    %70 = arith.addf %67, %69 : vector<32x128xf32>
    %71 = arith.addf %65, %70 : vector<32x128xf32>
    %cst_31 = arith.constant 0.000000e+00 : f32
    %72 = vector.broadcast %cst_31 : f32 to vector<32x128xf32>
    %73 = arith.maximumf %71, %72 : vector<32x128xf32>
    %74 = arith.truncf %73 : vector<32x128xf32> to vector<32x128xbf16>
    %cst_32 = arith.constant 0.000000e+00 : bf16
    %75 = vector.broadcast %cst_32 : bf16 to vector<1x128xbf16>
    %76 = vector.extract_strided_slice %74 {offsets = [0, 0], sizes = [31, 128], strides = [1, 1]} : vector<32x128xbf16> to vector<31x128xbf16>
    %77 = tpu.concatenate %75, %76 in 0 : vector<1x128xbf16>, vector<31x128xbf16> -> vector<32x128xbf16>
    %c0_i32_33 = arith.constant 0 : i32
    %78 = arith.sitofp %c0_i32_33 : i32 to bf16
    %79 = vector.shape_cast %9 : vector<32x1xi1> to vector<32x1xi1>
    %80 = vector.broadcast %79 : vector<32x1xi1> to vector<32x128xi1>
    %81 = vector.broadcast %78 : bf16 to vector<32x128xbf16>
    %82 = arith.select %80, %77, %81 : vector<32x128xi1>, vector<32x128xbf16>
    %83 = vector.extract_strided_slice %74 {offsets = [1, 0], sizes = [31, 128], strides = [1, 1]} : vector<32x128xbf16> to vector<31x128xbf16>
    %84 = tpu.concatenate %83, %75 in 0 : vector<31x128xbf16>, vector<1x128xbf16> -> vector<32x128xbf16>
    %c0_i32_34 = arith.constant 0 : i32
    %85 = arith.sitofp %c0_i32_34 : i32 to bf16
    %86 = vector.shape_cast %11 : vector<32x1xi1> to vector<32x1xi1>
    %87 = vector.broadcast %86 : vector<32x1xi1> to vector<32x128xi1>
    %88 = vector.broadcast %85 : bf16 to vector<32x128xbf16>
    %89 = arith.select %87, %84, %88 : vector<32x128xi1>, vector<32x128xbf16>
    %90 = tpu.concatenate %82, %74, %89 in 1 : vector<32x128xbf16>, vector<32x128xbf16>, vector<32x128xbf16> -> vector<32x384xbf16>
    %c0_35 = arith.constant 0 : index
    %c0_36 = arith.constant 0 : index
    %91 = vector.load %arg7[%c0_35, %c0_36] : memref<384x128xbf16, #tpu.memory_space<vmem>>, vector<384x128xbf16>
    %cst_37 = arith.constant dense<0.000000e+00> : vector<32x128xf32>
    %92 = tpu.matmul %90, %91, %cst_37 {dimension_numbers = #tpu.dot_dimension_numbers<[1], [0], [0], [1], [0, 0, 1, 1], [], []>} : vector<32x384xbf16>, vector<384x128xbf16>, vector<32x128xf32> -> vector<32x128xf32>
    %c3 = arith.constant 3 : index
    %c0_38 = arith.constant 0 : index
    %93 = vector.load %arg3[%c3, %c0_38] : memref<5x128xf32, #tpu.memory_space<vmem>>, vector<1x128xf32>
    %94 = vector.broadcast %93 : vector<1x128xf32> to vector<32x128xf32>
    %95 = arith.addf %92, %94 : vector<32x128xf32>
    %cst_39 = arith.constant 0.000000e+00 : f32
    %96 = vector.broadcast %cst_39 : f32 to vector<32x128xf32>
    %97 = arith.maximumf %95, %96 : vector<32x128xf32>
    %98 = arith.truncf %97 : vector<32x128xf32> to vector<32x128xbf16>
    %cst_40 = arith.constant 0.000000e+00 : bf16
    %99 = vector.broadcast %cst_40 : bf16 to vector<1x128xbf16>
    %100 = vector.extract_strided_slice %98 {offsets = [0, 0], sizes = [31, 128], strides = [1, 1]} : vector<32x128xbf16> to vector<31x128xbf16>
    %101 = tpu.concatenate %99, %100 in 0 : vector<1x128xbf16>, vector<31x128xbf16> -> vector<32x128xbf16>
    %c0_i32_41 = arith.constant 0 : i32
    %102 = arith.sitofp %c0_i32_41 : i32 to bf16
    %103 = vector.shape_cast %9 : vector<32x1xi1> to vector<32x1xi1>
    %104 = vector.broadcast %103 : vector<32x1xi1> to vector<32x128xi1>
    %105 = vector.broadcast %102 : bf16 to vector<32x128xbf16>
    %106 = arith.select %104, %101, %105 : vector<32x128xi1>, vector<32x128xbf16>
    %107 = vector.extract_strided_slice %98 {offsets = [1, 0], sizes = [31, 128], strides = [1, 1]} : vector<32x128xbf16> to vector<31x128xbf16>
    %108 = tpu.concatenate %107, %99 in 0 : vector<31x128xbf16>, vector<1x128xbf16> -> vector<32x128xbf16>
    %c0_i32_42 = arith.constant 0 : i32
    %109 = arith.sitofp %c0_i32_42 : i32 to bf16
    %110 = vector.shape_cast %11 : vector<32x1xi1> to vector<32x1xi1>
    %111 = vector.broadcast %110 : vector<32x1xi1> to vector<32x128xi1>
    %112 = vector.broadcast %109 : bf16 to vector<32x128xbf16>
    %113 = arith.select %111, %108, %112 : vector<32x128xi1>, vector<32x128xbf16>
    %114 = tpu.concatenate %106, %98, %113 in 1 : vector<32x128xbf16>, vector<32x128xbf16>, vector<32x128xbf16> -> vector<32x384xbf16>
    %c0_43 = arith.constant 0 : index
    %c0_44 = arith.constant 0 : index
    %115 = vector.load %arg8[%c0_43, %c0_44] : memref<384x128xbf16, #tpu.memory_space<vmem>>, vector<384x128xbf16>
    %cst_45 = arith.constant dense<0.000000e+00> : vector<32x128xf32>
    %116 = tpu.matmul %114, %115, %cst_45 {dimension_numbers = #tpu.dot_dimension_numbers<[1], [0], [0], [1], [0, 0, 1, 1], [], []>} : vector<32x384xbf16>, vector<384x128xbf16>, vector<32x128xf32> -> vector<32x128xf32>
    %c4 = arith.constant 4 : index
    %c0_46 = arith.constant 0 : index
    %117 = vector.load %arg3[%c4, %c0_46] : memref<5x128xf32, #tpu.memory_space<vmem>>, vector<1x128xf32>
    %118 = vector.broadcast %117 : vector<1x128xf32> to vector<32x128xf32>
    %119 = arith.addf %116, %118 : vector<32x128xf32>
    %120 = arith.addf %119, %73 : vector<32x128xf32>
    %cst_47 = arith.constant 0.000000e+00 : f32
    %121 = vector.broadcast %cst_47 : f32 to vector<32x128xf32>
    %122 = arith.maximumf %120, %121 : vector<32x128xf32>
    %123 = vector.shape_cast %122 : vector<32x128xf32> to vector<2x16x128xf32>
    %124 = vector.extract_strided_slice %123 {offsets = [0, 0, 0], sizes = [2, 16, 32], strides = [1, 1, 1]} : vector<2x16x128xf32> to vector<2x16x32xf32>
    %c0_48 = arith.constant 0 : index
    %c0_49 = arith.constant 0 : index
    %c0_50 = arith.constant 0 : index
    %125 = vector.load %arg9[%c0_48, %c0_49, %c0_50] : memref<2x16x32xf32, #tpu.memory_space<vmem>>, vector<2x16x32xf32>
    tpu.vector_store %arg9[%c0_48, %c0_49, %c0_50], %124 {strides = array<i32>} : memref<2x16x32xf32, #tpu.memory_space<vmem>>, vector<2x16x32xf32>,
    return
  }
  func.func @transform_0(%arg0: i32, %arg1: i32) -> (i32, i32, i32) {
    %c0_i32 = arith.constant 0 : i32
    %c0_i32_0 = arith.constant 0 : i32
    %c0_i32_1 = arith.constant 0 : i32
    return %arg0, %c0_i32, %c0_i32_0 : i32, i32, i32
  }
  func.func @transform_1(%arg0: i32, %arg1: i32) -> (i32, i32) {
    %c0_i32 = arith.constant 0 : i32
    %c0_i32_0 = arith.constant 0 : i32
    %c0_i32_1 = arith.constant 0 : i32
    return %c0_i32, %c0_i32_0 : i32, i32
  }
  func.func @transform_2(%arg0: i32, %arg1: i32) -> (i32, i32, i32) {
    %c0_i32 = arith.constant 0 : i32
    %c0_i32_0 = arith.constant 0 : i32
    %c0_i32_1 = arith.constant 0 : i32
    %c0_i32_2 = arith.constant 0 : i32
    return %c0_i32, %c0_i32_0, %c0_i32_1 : i32, i32, i32
  }
  func.func @transform_3(%arg0: i32, %arg1: i32) -> (i32, i32) {
    %c0_i32 = arith.constant 0 : i32
    %c0_i32_0 = arith.constant 0 : i32
    %c0_i32_1 = arith.constant 0 : i32
    return %c0_i32, %c0_i32_0 : i32, i32
  }
  func.func @transform_4(%arg0: i32, %arg1: i32) -> (i32, i32) {
    %c0_i32 = arith.constant 0 : i32
    %c0_i32_0 = arith.constant 0 : i32
    %c0_i32_1 = arith.constant 0 : i32
    return %c0_i32, %c0_i32_0 : i32, i32
  }
  func.func @transform_5(%arg0: i32, %arg1: i32) -> (i32, i32) {
    %c0_i32 = arith.constant 0 : i32
    %c0_i32_0 = arith.constant 0 : i32
    %c0_i32_1 = arith.constant 0 : i32
    return %c0_i32, %c0_i32_0 : i32, i32
  }
  func.func @transform_6(%arg0: i32, %arg1: i32) -> (i32, i32) {
    %c0_i32 = arith.constant 0 : i32
    %c0_i32_0 = arith.constant 0 : i32
    %c0_i32_1 = arith.constant 0 : i32
    return %c0_i32, %c0_i32_0 : i32, i32
  }
  func.func @transform_7(%arg0: i32, %arg1: i32) -> (i32, i32, i32) {
    %c0_i32 = arith.constant 0 : i32
    %c0_i32_0 = arith.constant 0 : i32
    return %arg0, %arg1, %c0_i32 : i32, i32, i32
  }
}

</mosaic_0001>

<llo_original>
// kernel: tpu_custom_call.1
$region0: #{tpu_custom_call.1}
  #allocation0 [shape = 'u32[]', space=smem, size = 0x4, offset = 0x4, fixed_abs, tag = 'smem constant byte address 0x4 - core index']
  #allocation1 [shape = 'u32[144,128]{1,0:T(1,128)}', space=vmem, size = 0x12000, scoped, tag = 'internal scratch']
  %s0 = inlined_call_operand.vmem [shape: f32[2,16,8], index: 0, kind: input, shape index: {}]
  %s1 = inlined_call_operand.vmem [shape: f32[5,128], index: 1, kind: input, shape index: {}]
  %s2 = inlined_call_operand.vmem [shape: bf16[3,8,128], index: 2, kind: input, shape index: {}]
  %s3 = inlined_call_operand.hbm [shape: bf16[384,128], index: 3, kind: input, shape index: {}]
  %s4 = inlined_call_operand.vmem [shape: bf16[8,128], index: 4, kind: input, shape index: {}]
  %s5 = inlined_call_operand.hbm [shape: bf16[384,128], index: 5, kind: input, shape index: {}]
  %s6 = inlined_call_operand.hbm [shape: bf16[384,128], index: 6, kind: input, shape index: {}]
  %s7 = inlined_call_operand.hbm [shape: f32[2,16,32], index: 7, kind: output, shape index: {}]
  %s8 = sld [smem:[#allocation0]]
  $region50: #{tpu_custom_call.1} parent=0
    _
  %s10 = ssub.s32 1, %s8
  %s11 = scalar_select 0, %s10, %s8
  $region1: #{tpu_custom_call.1} parent=0
    #allocation2 [shape = 'u8[98304]{0}', space=vmem, size = 0x18000, scoped, tag = 'input window, operand 3, single buffered']
    #allocation3 [shape = 's32[1]{0}', space=sflag, size = 0x4, scoped, tag = 'scoped memory for tpu_custom_call.1']
    #allocation4 [shape = 's32[1]{0}', space=sflag, size = 0x4, scoped, tag = 'scoped memory for tpu_custom_call.1']
    #allocation5 [shape = 'u8[98304]{0}', space=vmem, size = 0x18000, scoped, tag = 'input window, operand 5, single buffered']
    #allocation6 [shape = 's32[1]{0}', space=sflag, size = 0x4, scoped, tag = 'scoped memory for tpu_custom_call.1']
    #allocation7 [shape = 'u8[98304]{0}', space=vmem, size = 0x18000, scoped, tag = 'input window, operand 6, single buffered']
    #allocation8 [shape = 'u8[16384]{0}', space=vmem, size = 0x4000, scoped, tag = 'output window, operand 0, single buffered']
    %12 = vsyncpa [#allocation3], 0
    %13 = vsyncpa [#allocation6], 0
    %14 = vsyncpa [#allocation4], 0
    // Predicated region
    $region2: #{tpu_custom_call.1} parent=1 // pred_check
      _
    $region3: #{tpu_custom_call.1} parent=1 // pred_check_branch
      %16 = sbr.rel (0) target = $region5
    $region4: #{tpu_custom_call.1} parent=1 // pred_region
      _
    $region5: #{tpu_custom_call.1} parent=1 // pred_fallthru
      _
    // Predicated region
    $region6: #{tpu_custom_call.1} parent=1 // pred_check
      _
    $region7: #{tpu_custom_call.1} parent=1 // pred_check_branch
      %18 = sbr.rel (0) target = $region9
    $region8: #{tpu_custom_call.1} parent=1 // pred_region
      _
    $region9: #{tpu_custom_call.1} parent=1 // pred_fallthru
      _
    // Predicated region
    $region10: #{tpu_custom_call.1} parent=1 // pred_check
      _
    $region11: #{tpu_custom_call.1} parent=1 // pred_check_branch
      %20 = sbr.rel (0) target = $region13
    $region12: #{tpu_custom_call.1} parent=1 // pred_region
      _
    $region13: #{tpu_custom_call.1} parent=1 // pred_fallthru
      _
    // Predicated region
    $region14: #{tpu_custom_call.1} parent=1 // pred_check
      _
    $region15: #{tpu_custom_call.1} parent=1 // pred_check_branch
      %22 = sbr.rel (0) target = $region17
    $region16: #{tpu_custom_call.1} parent=1 // pred_region
      %s24 = ssub.s32 3072, 3072
      %25 = vsyncadd [#allocation3], %s24
      %s26 = sshll.u32 [#allocation2], 4
      %s27 = int_to_ptr.vmem [resolvable:$true] %s26
      %32 = dma.hbm_to_vmem [thread:$0]  %s3, 3072, %s27, [#allocation3], 64, 64, 4
    $region17: #{tpu_custom_call.1} parent=1 // pred_fallthru
      _
    // Predicated region
    $region18: #{tpu_custom_call.1} parent=1 // pred_check
      _
    $region19: #{tpu_custom_call.1} parent=1 // pred_check_branch
      %34 = sbr.rel (0) target = $region21
    $region20: #{tpu_custom_call.1} parent=1 // pred_region
      _
    $region21: #{tpu_custom_call.1} parent=1 // pred_fallthru
      _
    // Predicated region
    $region22: #{tpu_custom_call.1} parent=1 // pred_check
      _
    $region23: #{tpu_custom_call.1} parent=1 // pred_check_branch
      %36 = sbr.rel (0) target = $region25
    $region24: #{tpu_custom_call.1} parent=1 // pred_region
      %s38 = ssub.s32 3072, 3072
      %39 = vsyncadd [#allocation6], %s38
      %s40 = sshll.u32 [#allocation5], 4
      %s41 = int_to_ptr.vmem [resolvable:$true] %s40
      %46 = dma.hbm_to_vmem [thread:$0]  %s5, 3072, %s41, [#allocation6], 64, 64, 4
    $region25: #{tpu_custom_call.1} parent=1 // pred_fallthru
      _
    // Predicated region
    $region26: #{tpu_custom_call.1} parent=1 // pred_check
      _
    $region27: #{tpu_custom_call.1} parent=1 // pred_check_branch
      %48 = sbr.rel (0) target = $region29
    $region28: #{tpu_custom_call.1} parent=1 // pred_region
      %s50 = ssub.s32 3072, 3072
      %51 = vsyncadd [#allocation6], %s50
      %s52 = sshll.u32 [#allocation7], 4
      %s53 = int_to_ptr.vmem [resolvable:$true] %s52
      %58 = dma.hbm_to_vmem [thread:$0]  %s6, 3072, %s53, [#allocation6], 64, 64, 4
    $region29: #{tpu_custom_call.1} parent=1 // pred_fallthru
      _
    // Predicated region
    $region30: #{tpu_custom_call.1} parent=1 // pred_check
      _
    $region31: #{tpu_custom_call.1} parent=1 // pred_check_branch
      %60 = sbr.rel (0) target = $region33
    $region32: #{tpu_custom_call.1} parent=1 // pred_region
      %61 = dma.done [#allocation3], 3072
    $region33: #{tpu_custom_call.1} parent=1 // pred_fallthru
      _
    // Predicated region
    $region34: #{tpu_custom_call.1} parent=1 // pred_check
      _
    $region35: #{tpu_custom_call.1} parent=1 // pred_check_branch
      %63 = sbr.rel (0) target = $region37
    $region36: #{tpu_custom_call.1} parent=1 // pred_region
      %64 = dma.done [#allocation6], 3072
    $region37: #{tpu_custom_call.1} parent=1 // pred_fallthru
      _
    // Predicated region
    $region38: #{tpu_custom_call.1} parent=1 // pred_check
      _
    $region39: #{tpu_custom_call.1} parent=1 // pred_check_branch
      %66 = sbr.rel (0) target = $region41
    $region40: #{tpu_custom_call.1} parent=1 // pred_region
      %67 = dma.done [#allocation6], 3072
    $region41: #{tpu_custom_call.1} parent=1 // pred_fallthru
      _
    %v71 = vld [vmem:[%s0] sm:$0xff]
    %v72 = vld [vmem:[%s0 + $0x8] sm:$0xff]
    %v73 = vld [vmem:[%s0 + $0x10] sm:$0xff]
    %v74 = vld [vmem:[%s0 + $0x18] sm:$0xff]
    %v75 = vlaneseq
    %v76 = vshrl.u32 %v75, 7
    %v77 = vadd.s32 %v76, 8
    %s78 = smul.u32 0, 16
    %v79 = vstv %s78
    %v80 = vadd.s32 %v76, %v79
    %v81 = vadd.s32 %v77, %v79
    %vm82 = vcmp.ne.s32.totalorder %v80, 0
    %vm83 = vcmp.ne.s32.totalorder %v81, 0
    %vm84 = vcmp.ne.s32.totalorder %v80, 15
    %vm85 = vcmp.ne.s32.totalorder %v81, 15
    %v86 = vpack.c.bf16 %v72, %v71
    %v87 = vpack.c.bf16 %v74, %v73
    %vm88 = vsmask.f32 256
    %v90 = vshrl.u32 %v86, 16
    %v92 = vrot.slane %v90, 7
    %v93 = vshll.u32 %v86, 16
    %v95 = vor.u32 %v92, %v93
    %v97 = vshrl.u32 %v87, 16
    %v99 = vrot.slane %v97, 7
    %v100 = vshll.u32 %v87, 16
    %v102 = vor.u32 %v99, %v100
    %v103 = vsel %vm88, %v92, %v102
    %vm106 = vcmask 1040384
    %vm107 = vmand %vm106, %vm88
    %v108 = vsel %vm107, 0, %v95
    %v109 = vsel %vm82, 1, 0
    %v110 = vsel %vm83, 1, 0
    %vm111 = vcmp.eq.s32.totalorder %v109, 1
    %vm112 = vcmp.eq.s32.totalorder %v110, 1
    %vm113 = vmpackc.low %vm111, %vm111
    %vm114 = vmpackc.low %vm112, %vm112
    %v115 = vsel %vm113, 65537, 0
    %v116 = vsel %vm114, 65537, 0
    %v117 = vunpack.c.l.b16 %v115
    %v118 = vunpack.c.l.b16 %v116
    %v119 = vpack.c.b16 %v118, %v117
    %vm120 = vcmp.ne.s16.totalorder %v119, 0
    %v121 = vsel %vm120, %v108, 0
    %v122 = vsel %vm120, %v103, 0
    %vm123 = vsmask.f32 7424
    %v124 = vrot.slane %v93, 1
    %v125 = vor.u32 %v90, %v124
    %v126 = vrot.slane %v100, 1
    %v127 = vsel %vm123, %v125, %v126
    %v128 = vor.u32 %v97, %v126
    %vm131 = vcmask 1047552
    %vm132 = vmand %vm131, %vm123
    %v133 = vsel %vm132, %v128, 0
    %v134 = vsel %vm84, 1, 0
    %v135 = vsel %vm85, 1, 0
    %vm136 = vcmp.eq.s32.totalorder %v134, 1
    %vm137 = vcmp.eq.s32.totalorder %v135, 1
    %vm138 = vmpackc.low %vm136, %vm136
    %vm139 = vmpackc.low %vm137, %vm137
    %v140 = vsel %vm138, 65537, 0
    %v141 = vsel %vm139, 65537, 0
    %v142 = vunpack.c.l.b16 %v140
    %v143 = vunpack.c.l.b16 %v141
    %v144 = vpack.c.b16 %v143, %v142
    %vm145 = vcmp.ne.s16.totalorder %v144, 0
    %v146 = vsel %vm145, %v127, 0
    %v147 = vsel %vm145, %v133, 0
    %v148 = vld [vmem:[%s2] sm:$0xf]
    %s149 = scalar_lea.vmem %s2, 4
    %v150 = vld [vmem:[%s149] sm:$0xf]
    %vm151 = vcmask 64512
    %v152 = vsel %vm151, %v86, 0
    %v154 = vsel %vm151, %v87, 0
    %vm156 = vcmask 1043456
    %v158 = vsel %vm156, %v150, 0
    %160 = vmatprep.subr.bf16.mxu0 0
    %161 = vmatpush1.bf16.msra.mxu0 0
    %162 = vmatprep.subr.bf16.mxu0 0
    %163 = vmatpush1.bf16.msra.mxu0 0
    %164 = vmatprep.subr.bf16.mxu0 0
    %165 = vmatpush1.bf16.msra.mxu0 0
    %166 = vmatprep.subr.bf16.mxu0 0
    %167 = vmatpush1.bf16.msra.mxu0 0
    %168 = vmatprep.subr.bf16.mxu0 0
    %169 = vmatpush1.bf16.msra.mxu0 0
    %170 = vmatprep.subr.bf16.mxu0 0
    %171 = vmatpush1.bf16.msra.mxu0 0
    %172 = vmatprep.subr.bf16.mxu0 0
    %173 = vmatpush1.bf16.msra.mxu0 0
    %174 = vmatprep.subr.bf16.mxu0 0
    %175 = vmatpush1.bf16.msra.mxu0 %v158
    %176 = vmatprep.subr.bf16.mxu0 0
    %177 = vmatpush2.bf16.msra.mxu0 0
    %178 = vmatprep.subr.bf16.mxu0 0
    %179 = vmatpush2.bf16.msra.mxu0 0
    %180 = vmatprep.subr.bf16.mxu0 0
    %181 = vmatpush2.bf16.msra.mxu0 0
    %182 = vmatprep.subr.bf16.mxu0 0
    %183 = vmatpush2.bf16.msra.mxu0 0
    %184 = vmatprep.subr.bf16.mxu0 0
    %185 = vmatpush2.bf16.msra.mxu0 0
    %186 = vmatprep.subr.bf16.mxu0 0
    %187 = vmatpush2.bf16.msra.mxu0 0
    %188 = vmatprep.subr.bf16.mxu0 0
    %189 = vmatpush2.bf16.msra.mxu0 0
    %190 = vmatprep.subr.bf16.mxu0 0
    %191 = vmatpush2.bf16.msra.mxu0 0
    %192 = vmatprep.mubr.bf16.mxu0 0
    %193 = vmatmul.mubr.bf16.gmra.mxu0 %v152
    %v194 = vpop.f32.mrf.mxu0
    %v195 = vadd.f32 0.0, %v194
    %v196 = vpop.f32.mrf.mxu0
    %v197 = vpop.f32.mrf.mxu0
    %v198 = vadd.f32 0.0, %v197
    %v199 = vpop.f32.mrf.mxu0
    %200 = vmatprep.mubr.bf16.mxu0 0
    %201 = vmatmul.mubr.bf16.gmra.mxu0 %v154
    %v202 = vpop.f32.mrf.mxu0
    %v203 = vadd.f32 0.0, %v202
    %v204 = vpop.f32.mrf.mxu0
    %v205 = vpop.f32.mrf.mxu0
    %v206 = vadd.f32 0.0, %v205
    %v207 = vpop.f32.mrf.mxu0
    %208 = vdwg.mxu0
    %v210 = vsel %vm151, %v121, 0
    %v213 = vsel %vm151, %v122, 0
    %v216 = vsel %vm156, %v148, 0
    %218 = vmatprep.subr.bf16.mxu0 0
    %219 = vmatpush1.bf16.msra.mxu0 0
    %220 = vmatprep.subr.bf16.mxu0 0
    %221 = vmatpush1.bf16.msra.mxu0 0
    %222 = vmatprep.subr.bf16.mxu0 0
    %223 = vmatpush1.bf16.msra.mxu0 0
    %224 = vmatprep.subr.bf16.mxu0 0
    %225 = vmatpush1.bf16.msra.mxu0 0
    %226 = vmatprep.subr.bf16.mxu0 0
    %227 = vmatpush1.bf16.msra.mxu0 0
    %228 = vmatprep.subr.bf16.mxu0 0
    %229 = vmatpush1.bf16.msra.mxu0 0
    %230 = vmatprep.subr.bf16.mxu0 0
    %231 = vmatpush1.bf16.msra.mxu0 0
    %232 = vmatprep.subr.bf16.mxu0 0
    %233 = vmatpush1.bf16.msra.mxu0 %v216
    %234 = vmatprep.subr.bf16.mxu0 0
    %235 = vmatpush2.bf16.msra.mxu0 0
    %236 = vmatprep.subr.bf16.mxu0 0
    %237 = vmatpush2.bf16.msra.mxu0 0
    %238 = vmatprep.subr.bf16.mxu0 0
    %239 = vmatpush2.bf16.msra.mxu0 0
    %240 = vmatprep.subr.bf16.mxu0 0
    %241 = vmatpush2.bf16.msra.mxu0 0
    %242 = vmatprep.subr.bf16.mxu0 0
    %243 = vmatpush2.bf16.msra.mxu0 0
    %244 = vmatprep.subr.bf16.mxu0 0
    %245 = vmatpush2.bf16.msra.mxu0 0
    %246 = vmatprep.subr.bf16.mxu0 0
    %247 = vmatpush2.bf16.msra.mxu0 0
    %248 = vmatprep.subr.bf16.mxu0 0
    %249 = vmatpush2.bf16.msra.mxu0 0
    %250 = vmatprep.mubr.bf16.mxu0 0
    %251 = vmatmul.mubr.bf16.gmra.mxu0 %v210
    %v252 = vpop.f32.mrf.mxu0
    %v253 = vadd.f32 %v195, %v252
    %v254 = vpop.f32.mrf.mxu0
    %v255 = vpop.f32.mrf.mxu0
    %v256 = vadd.f32 %v198, %v255
    %v257 = vpop.f32.mrf.mxu0
    %258 = vmatprep.mubr.bf16.mxu0 0
    %259 = vmatmul.mubr.bf16.gmra.mxu0 %v213
    %v260 = vpop.f32.mrf.mxu0
    %v261 = vadd.f32 %v203, %v260
    %v262 = vpop.f32.mrf.mxu0
    %v263 = vpop.f32.mrf.mxu0
    %v264 = vadd.f32 %v206, %v263
    %v265 = vpop.f32.mrf.mxu0
    %266 = vdwg.mxu0
    %s267 = scalar_lea.vmem %s2, 8
    %v268 = vld [vmem:[%s267] sm:$0xf]
    %v270 = vsel %vm151, %v146, 0
    %v273 = vsel %vm151, %v147, 0
    %v276 = vsel %vm156, %v268, 0
    %278 = vmatprep.subr.bf16.mxu0 0
    %279 = vmatpush1.bf16.msra.mxu0 0
    %280 = vmatprep.subr.bf16.mxu0 0
    %281 = vmatpush1.bf16.msra.mxu0 0
    %282 = vmatprep.subr.bf16.mxu0 0
    %283 = vmatpush1.bf16.msra.mxu0 0
    %284 = vmatprep.subr.bf16.mxu0 0
    %285 = vmatpush1.bf16.msra.mxu0 0
    %286 = vmatprep.subr.bf16.mxu0 0
    %287 = vmatpush1.bf16.msra.mxu0 0
    %288 = vmatprep.subr.bf16.mxu0 0
    %289 = vmatpush1.bf16.msra.mxu0 0
    %290 = vmatprep.subr.bf16.mxu0 0
    %291 = vmatpush1.bf16.msra.mxu0 0
    %292 = vmatprep.subr.bf16.mxu0 0
    %293 = vmatpush1.bf16.msra.mxu0 %v276
    %294 = vmatprep.subr.bf16.mxu0 0
    %295 = vmatpush2.bf16.msra.mxu0 0
    %296 = vmatprep.subr.bf16.mxu0 0
    %297 = vmatpush2.bf16.msra.mxu0 0
    %298 = vmatprep.subr.bf16.mxu0 0
    %299 = vmatpush2.bf16.msra.mxu0 0
    %300 = vmatprep.subr.bf16.mxu0 0
    %301 = vmatpush2.bf16.msra.mxu0 0
    %302 = vmatprep.subr.bf16.mxu0 0
    %303 = vmatpush2.bf16.msra.mxu0 0
    %304 = vmatprep.subr.bf16.mxu0 0
    %305 = vmatpush2.bf16.msra.mxu0 0
    %306 = vmatprep.subr.bf16.mxu0 0
    %307 = vmatpush2.bf16.msra.mxu0 0
    %308 = vmatprep.subr.bf16.mxu0 0
    %309 = vmatpush2.bf16.msra.mxu0 0
    %310 = vmatprep.mubr.bf16.mxu0 0
    %311 = vmatmul.mubr.bf16.gmra.mxu0 %v270
    %v312 = vpop.f32.mrf.mxu0
    %v313 = vadd.f32 0.0, %v312
    %v314 = vpop.f32.mrf.mxu0
    %v315 = vpop.f32.mrf.mxu0
    %v316 = vadd.f32 0.0, %v315
    %v317 = vpop.f32.mrf.mxu0
    %318 = vmatprep.mubr.bf16.mxu0 0
    %319 = vmatmul.mubr.bf16.gmra.mxu0 %v273
    %v320 = vpop.f32.mrf.mxu0
    %v321 = vadd.f32 0.0, %v320
    %v322 = vpop.f32.mrf.mxu0
    %v323 = vpop.f32.mrf.mxu0
    %v324 = vadd.f32 0.0, %v323
    %v325 = vpop.f32.mrf.mxu0
    %326 = vdwg.mxu0
    %v327 = vadd.f32 %v253, %v313
    %v328 = vadd.f32 %v256, %v316
    %v329 = vadd.f32 %v261, %v321
    %v330 = vadd.f32 %v264, %v324
    %v331 = vld [vmem:[%s1] sm:$0x1]
    %v332 = vlaneseq
    %v333 = vshrl.u32 %v332, 7
    %v334 = vsub.s32 0, %v333
    %v335 = vrot.slane %v331, %v334
    %v336 = vadd.f32 %v327, %v335
    %v337 = vadd.f32 %v328, %v335
    %v338 = vadd.f32 %v329, %v335
    %v339 = vadd.f32 %v330, %v335
    %v340 = vmax.f32 %v336, 0.0
    %v341 = vmax.f32 %v337, 0.0
    %v342 = vmax.f32 %v338, 0.0
    %v343 = vmax.f32 %v339, 0.0
    %v344 = vpack.c.bf16 %v341, %v340
    %v345 = vpack.c.bf16 %v343, %v342
    %v347 = vshrl.u32 %v344, 16
    %v349 = vrot.slane %v347, 7
    %v350 = vshll.u32 %v344, 16
    %v352 = vor.u32 %v349, %v350
    %v354 = vshrl.u32 %v345, 16
    %v356 = vrot.slane %v354, 7
    %v357 = vshll.u32 %v345, 16
    %v359 = vor.u32 %v356, %v357
    %v360 = vsel %vm88, %v349, %v359
    %v363 = vsel %vm107, 0, %v352
    %v364 = vsel %vm120, %v363, 0
    %v365 = vsel %vm120, %v360, 0
    %v366 = vrot.slane %v350, 1
    %v367 = vor.u32 %v347, %v366
    %v368 = vrot.slane %v357, 1
    %v369 = vsel %vm123, %v367, %v368
    %v370 = vor.u32 %v354, %v368
    %v373 = vsel %vm132, %v370, 0
    %v374 = vsel %vm145, %v369, 0
    %v375 = vsel %vm145, %v373, 0
    %v376 = vld [vmem:[#allocation2] sm:$0xf]
    %v377 = vld [vmem:[#allocation2 + $0x4] sm:$0xf]
    %v378 = vld [vmem:[#allocation2 + $0x8] sm:$0xf]
    %v379 = vld [vmem:[#allocation2 + $0xc] sm:$0xf]
    %v380 = vld [vmem:[#allocation2 + $0x10] sm:$0xf]
    %v381 = vld [vmem:[#allocation2 + $0x14] sm:$0xf]
    %v382 = vld [vmem:[#allocation2 + $0x18] sm:$0xf]
    %v383 = vld [vmem:[#allocation2 + $0x1c] sm:$0xf]
    %v384 = vld [vmem:[#allocation2 + $0x20] sm:$0xf]
    %v385 = vld [vmem:[#allocation2 + $0x24] sm:$0xf]
    %v386 = vld [vmem:[#allocation2 + $0x28] sm:$0xf]
    %v387 = vld [vmem:[#allocation2 + $0x2c] sm:$0xf]
    %v388 = vld [vmem:[#allocation2 + $0x30] sm:$0xf]
    %v389 = vld [vmem:[#allocation2 + $0x34] sm:$0xf]
    %v390 = vld [vmem:[#allocation2 + $0x38] sm:$0xf]
    %v391 = vld [vmem:[#allocation2 + $0x3c] sm:$0xf]
    %v392 = vld [vmem:[#allocation2 + $0x40] sm:$0xf]
    %v393 = vld [vmem:[#allocation2 + $0x44] sm:$0xf]
    %v394 = vld [vmem:[#allocation2 + $0x48] sm:$0xf]
    %v395 = vld [vmem:[#allocation2 + $0x4c] sm:$0xf]
    %v396 = vld [vmem:[#allocation2 + $0x50] sm:$0xf]
    %v397 = vld [vmem:[#allocation2 + $0x54] sm:$0xf]
    %v398 = vld [vmem:[#allocation2 + $0x58] sm:$0xf]
    %v399 = vld [vmem:[#allocation2 + $0x5c] sm:$0xf]
    %v400 = vld [vmem:[#allocation2 + $0x60] sm:$0xf]
    %v401 = vld [vmem:[#allocation2 + $0x64] sm:$0xf]
    %v402 = vld [vmem:[#allocation2 + $0x68] sm:$0xf]
    %v403 = vld [vmem:[#allocation2 + $0x6c] sm:$0xf]
    %v404 = vld [vmem:[#allocation2 + $0x70] sm:$0xf]
    %v405 = vld [vmem:[#allocation2 + $0x74] sm:$0xf]
    %v406 = vld [vmem:[#allocation2 + $0x78] sm:$0xf]
    %v407 = vld [vmem:[#allocation2 + $0x7c] sm:$0xf]
    %v408 = vld [vmem:[#allocation2 + $0x80] sm:$0xf]
    %v409 = vld [vmem:[#allocation2 + $0x84] sm:$0xf]
    %v410 = vld [vmem:[#allocation2 + $0x88] sm:$0xf]
    %v411 = vld [vmem:[#allocation2 + $0x8c] sm:$0xf]
    %v412 = vld [vmem:[#allocation2 + $0x90] sm:$0xf]
    %v413 = vld [vmem:[#allocation2 + $0x94] sm:$0xf]
    %v414 = vld [vmem:[#allocation2 + $0x98] sm:$0xf]
    %v415 = vld [vmem:[#allocation2 + $0x9c] sm:$0xf]
    %v416 = vld [vmem:[#allocation2 + $0xa0] sm:$0xf]
    %v417 = vld [vmem:[#allocation2 + $0xa4] sm:$0xf]
    %v418 = vld [vmem:[#allocation2 + $0xa8] sm:$0xf]
    %v419 = vld [vmem:[#allocation2 + $0xac] sm:$0xf]
    %v420 = vld [vmem:[#allocation2 + $0xb0] sm:$0xf]
    %v421 = vld [vmem:[#allocation2 + $0xb4] sm:$0xf]
    %v422 = vld [vmem:[#allocation2 + $0xb8] sm:$0xf]
    %v423 = vld [vmem:[#allocation2 + $0xbc] sm:$0xf]
    %v424 = vld [vmem:[%s1 + $0x1] sm:$0x1]
    %v425 = vlaneseq
    %v426 = vshrl.u32 %v425, 7
    %v427 = vsub.s32 0, %v426
    %v428 = vrot.slane %v424, %v427
    %v477 = vunpack.c.l.b16 %v376
    %v478 = vunpack.c.l.b16 %v377
    %v479 = vunpack.c.l.b16 %v378
    %v480 = vunpack.c.l.b16 %v379
    %v481 = vunpack.c.l.b16 %v380
    %v482 = vunpack.c.l.b16 %v381
    %v483 = vunpack.c.l.b16 %v382
    %v484 = vunpack.c.l.b16 %v383
    %v485 = vunpack.c.l.b16 %v384
    %v486 = vunpack.c.l.b16 %v385
    %v487 = vunpack.c.l.b16 %v386
    %v488 = vunpack.c.l.b16 %v387
    %v489 = vunpack.c.l.b16 %v388
    %v490 = vunpack.c.l.b16 %v389
    %v491 = vunpack.c.l.b16 %v390
    %v492 = vunpack.c.l.b16 %v391
    %v493 = vunpack.c.l.b16 %v392
    %v494 = vunpack.c.l.b16 %v393
    %v495 = vunpack.c.l.b16 %v394
    %v496 = vunpack.c.l.b16 %v395
    %v497 = vunpack.c.l.b16 %v396
    %v498 = vunpack.c.l.b16 %v397
    %v499 = vunpack.c.l.b16 %v398
    %v500 = vunpack.c.l.b16 %v399
    %v501 = vunpack.c.l.b16 %v400
    %v502 = vunpack.c.l.b16 %v401
    %v503 = vunpack.c.l.b16 %v402
    %v504 = vunpack.c.l.b16 %v403
    %v505 = vunpack.c.l.b16 %v404
    %v506 = vunpack.c.l.b16 %v405
    %v507 = vunpack.c.l.b16 %v406
    %v508 = vunpack.c.l.b16 %v407
    %v509 = vunpack.c.l.b16 %v408
    %v510 = vunpack.c.l.b16 %v409
    %v511 = vunpack.c.l.b16 %v410
    %v512 = vunpack.c.l.b16 %v411
    %v513 = vunpack.c.l.b16 %v412
    %v514 = vunpack.c.l.b16 %v413
    %v515 = vunpack.c.l.b16 %v414
    %v516 = vunpack.c.l.b16 %v415
    %v517 = vunpack.c.l.b16 %v416
    %v518 = vunpack.c.l.b16 %v417
    %v519 = vunpack.c.l.b16 %v418
    %v520 = vunpack.c.l.b16 %v419
    %v521 = vunpack.c.l.b16 %v420
    %v522 = vunpack.c.l.b16 %v421
    %v523 = vunpack.c.l.b16 %v422
    %v524 = vunpack.c.l.b16 %v423
    %v525 = vpack.c.b16 %v478, %v477
    %v526 = vpack.c.b16 %v480, %v479
    %v527 = vpack.c.b16 %v482, %v481
    %v528 = vpack.c.b16 %v484, %v483
    %v529 = vpack.c.b16 %v486, %v485
    %v530 = vpack.c.b16 %v488, %v487
    %v531 = vpack.c.b16 %v490, %v489
    %v532 = vpack.c.b16 %v492, %v491
    %v533 = vpack.c.b16 %v494, %v493
    %v534 = vpack.c.b16 %v496, %v495
    %v535 = vpack.c.b16 %v498, %v497
    %v536 = vpack.c.b16 %v500, %v499
    %v537 = vpack.c.b16 %v502, %v501
    %v538 = vpack.c.b16 %v504, %v503
    %v539 = vpack.c.b16 %v506, %v505
    %v540 = vpack.c.b16 %v508, %v507
    %v541 = vpack.c.b16 %v510, %v509
    %v542 = vpack.c.b16 %v512, %v511
    %v543 = vpack.c.b16 %v514, %v513
    %v544 = vpack.c.b16 %v516, %v515
    %v545 = vpack.c.b16 %v518, %v517
    %v546 = vpack.c.b16 %v520, %v519
    %v547 = vpack.c.b16 %v522, %v521
    %v548 = vpack.c.b16 %v524, %v523
    %573 = vmatprep.subr.bf16.mxu0 0
    %574 = vmatpush1.bf16.msra.mxu0 %v532
    %575 = vmatprep.subr.bf16.mxu0 0
    %576 = vmatpush1.bf16.msra.mxu0 %v531
    %577 = vmatprep.subr.bf16.mxu0 0
    %578 = vmatpush1.bf16.msra.mxu0 %v530
    %579 = vmatprep.subr.bf16.mxu0 0
    %580 = vmatpush1.bf16.msra.mxu0 %v529
    %581 = vmatprep.subr.bf16.mxu0 0
    %582 = vmatpush1.bf16.msra.mxu0 %v528
    %583 = vmatprep.subr.bf16.mxu0 0
    %584 = vmatpush1.bf16.msra.mxu0 %v527
    %585 = vmatprep.subr.bf16.mxu0 0
    %586 = vmatpush1.bf16.msra.mxu0 %v526
    %587 = vmatprep.subr.bf16.mxu0 0
    %588 = vmatpush1.bf16.msra.mxu0 %v525
    %589 = vmatprep.subr.bf16.mxu0 0
    %590 = vmatpush2.bf16.msra.mxu0 %v540
    %591 = vmatprep.subr.bf16.mxu0 0
    %592 = vmatpush2.bf16.msra.mxu0 %v539
    %593 = vmatprep.subr.bf16.mxu0 0
    %594 = vmatpush2.bf16.msra.mxu0 %v538
    %595 = vmatprep.subr.bf16.mxu0 0
    %596 = vmatpush2.bf16.msra.mxu0 %v537
    %597 = vmatprep.subr.bf16.mxu0 0
    %598 = vmatpush2.bf16.msra.mxu0 %v536
    %599 = vmatprep.subr.bf16.mxu0 0
    %600 = vmatpush2.bf16.msra.mxu0 %v535
    %601 = vmatprep.subr.bf16.mxu0 0
    %602 = vmatpush2.bf16.msra.mxu0 %v534
    %603 = vmatprep.subr.bf16.mxu0 0
    %604 = vmatpush2.bf16.msra.mxu0 %v533
    %605 = vmatprep.mubr.bf16.mxu0 %v344
    %606 = vmatmul.mubr.bf16.gmra.mxu0 %v364
    %v607 = vpop.f32.mrf.mxu0
    %v608 = vadd.f32 %v428, %v607
    %v609 = vpop.f32.mrf.mxu0
    %v610 = vpop.f32.mrf.mxu0
    %v611 = vadd.f32 %v428, %v610
    %v612 = vpop.f32.mrf.mxu0
    %613 = vmatprep.mubr.bf16.mxu0 %v345
    %614 = vmatmul.mubr.bf16.gmra.mxu0 %v365
    %v615 = vpop.f32.mrf.mxu0
    %v616 = vadd.f32 %v428, %v615
    %v617 = vpop.f32.mrf.mxu0
    %v618 = vpop.f32.mrf.mxu0
    %v619 = vadd.f32 %v428, %v618
    %v620 = vpop.f32.mrf.mxu0
    %621 = vdwg.mxu0
    %622 = vmatprep.subr.bf16.mxu0 0
    %623 = vmatpush1.bf16.msra.mxu0 %v548
    %624 = vmatprep.subr.bf16.mxu0 0
    %625 = vmatpush1.bf16.msra.mxu0 %v547
    %626 = vmatprep.subr.bf16.mxu0 0
    %627 = vmatpush1.bf16.msra.mxu0 %v546
    %628 = vmatprep.subr.bf16.mxu0 0
    %629 = vmatpush1.bf16.msra.mxu0 %v545
    %630 = vmatprep.subr.bf16.mxu0 0
    %631 = vmatpush1.bf16.msra.mxu0 %v544
    %632 = vmatprep.subr.bf16.mxu0 0
    %633 = vmatpush1.bf16.msra.mxu0 %v543
    %634 = vmatprep.subr.bf16.mxu0 0
    %635 = vmatpush1.bf16.msra.mxu0 %v542
    %636 = vmatprep.subr.bf16.mxu0 0
    %637 = vmatpush1.bf16.msra.mxu0 %v541
    %638 = vmatprep.subr.bf16.mxu0 0
    %639 = vmatpush2.bf16.msra.mxu0 0
    %640 = vmatprep.subr.bf16.mxu0 0
    %641 = vmatpush2.bf16.msra.mxu0 0
    %642 = vmatprep.subr.bf16.mxu0 0
    %643 = vmatpush2.bf16.msra.mxu0 0
    %644 = vmatprep.subr.bf16.mxu0 0
    %645 = vmatpush2.bf16.msra.mxu0 0
    %646 = vmatprep.subr.bf16.mxu0 0
    %647 = vmatpush2.bf16.msra.mxu0 0
    %648 = vmatprep.subr.bf16.mxu0 0
    %649 = vmatpush2.bf16.msra.mxu0 0
    %650 = vmatprep.subr.bf16.mxu0 0
    %651 = vmatpush2.bf16.msra.mxu0 0
    %652 = vmatprep.subr.bf16.mxu0 0
    %653 = vmatpush2.bf16.msra.mxu0 0
    %654 = vmatprep.mubr.bf16.mxu0 0
    %655 = vmatmul.mubr.bf16.gmra.mxu0 %v374
    %v656 = vpop.f32.mrf.mxu0
    %v657 = vadd.f32 %v608, %v656
    %v658 = vpop.f32.mrf.mxu0
    %v659 = vpop.f32.mrf.mxu0
    %v660 = vadd.f32 %v611, %v659
    %v661 = vpop.f32.mrf.mxu0
    %662 = vmatprep.mubr.bf16.mxu0 0
    %663 = vmatmul.mubr.bf16.gmra.mxu0 %v375
    %v664 = vpop.f32.mrf.mxu0
    %v665 = vadd.f32 %v616, %v664
    %v666 = vpop.f32.mrf.mxu0
    %v667 = vpop.f32.mrf.mxu0
    %v668 = vadd.f32 %v619, %v667
    %v669 = vpop.f32.mrf.mxu0
    %670 = vdwg.mxu0
    %v671 = vld [vmem:[%s4] sm:$0xf]
    %v672 = vld [vmem:[%s1 + $0x2] sm:$0x1]
    %v673 = vlaneseq
    %v674 = vshrl.u32 %v673, 7
    %v675 = vsub.s32 0, %v674
    %v676 = vrot.slane %v672, %v675
    %v678 = vsel %vm156, %v671, 0
    %680 = vmatprep.subr.bf16.mxu0 0
    %681 = vmatpush1.bf16.msra.mxu0 0
    %682 = vmatprep.subr.bf16.mxu0 0
    %683 = vmatpush1.bf16.msra.mxu0 0
    %684 = vmatprep.subr.bf16.mxu0 0
    %685 = vmatpush1.bf16.msra.mxu0 0
    %686 = vmatprep.subr.bf16.mxu0 0
    %687 = vmatpush1.bf16.msra.mxu0 0
    %688 = vmatprep.subr.bf16.mxu0 0
    %689 = vmatpush1.bf16.msra.mxu0 0
    %690 = vmatprep.subr.bf16.mxu0 0
    %691 = vmatpush1.bf16.msra.mxu0 0
    %692 = vmatprep.subr.bf16.mxu0 0
    %693 = vmatpush1.bf16.msra.mxu0 0
    %694 = vmatprep.subr.bf16.mxu0 0
    %695 = vmatpush1.bf16.msra.mxu0 %v678
    %696 = vmatprep.subr.bf16.mxu0 0
    %697 = vmatpush2.bf16.msra.mxu0 0
    %698 = vmatprep.subr.bf16.mxu0 0
    %699 = vmatpush2.bf16.msra.mxu0 0
    %700 = vmatprep.subr.bf16.mxu0 0
    %701 = vmatpush2.bf16.msra.mxu0 0
    %702 = vmatprep.subr.bf16.mxu0 0
    %703 = vmatpush2.bf16.msra.mxu0 0
    %704 = vmatprep.subr.bf16.mxu0 0
    %705 = vmatpush2.bf16.msra.mxu0 0
    %706 = vmatprep.subr.bf16.mxu0 0
    %707 = vmatpush2.bf16.msra.mxu0 0
    %708 = vmatprep.subr.bf16.mxu0 0
    %709 = vmatpush2.bf16.msra.mxu0 0
    %710 = vmatprep.subr.bf16.mxu0 0
    %711 = vmatpush2.bf16.msra.mxu0 0
    %712 = vmatprep.mubr.bf16.mxu0 0
    %713 = vmatmul.mubr.bf16.gmra.mxu0 %v152
    %v714 = vpop.f32.mrf.mxu0
    %v715 = vadd.f32 %v676, %v714
    %v716 = vpop.f32.mrf.mxu0
    %v717 = vpop.f32.mrf.mxu0
    %v718 = vadd.f32 %v676, %v717
    %v719 = vpop.f32.mrf.mxu0
    %720 = vmatprep.mubr.bf16.mxu0 0
    %721 = vmatmul.mubr.bf16.gmra.mxu0 %v154
    %v722 = vpop.f32.mrf.mxu0
    %v723 = vadd.f32 %v676, %v722
    %v724 = vpop.f32.mrf.mxu0
    %v725 = vpop.f32.mrf.mxu0
    %v726 = vadd.f32 %v676, %v725
    %v727 = vpop.f32.mrf.mxu0
    %728 = vdwg.mxu0
    %v729 = vadd.f32 %v657, %v715
    %v730 = vadd.f32 %v660, %v718
    %v731 = vadd.f32 %v665, %v723
    %v732 = vadd.f32 %v668, %v726
    %v733 = vmax.f32 %v729, 0.0
    %v734 = vmax.f32 %v730, 0.0
    %v735 = vmax.f32 %v731, 0.0
    %v736 = vmax.f32 %v732, 0.0
    %v737 = vpack.c.bf16 %v734, %v733
    %v738 = vpack.c.bf16 %v736, %v735
    %v740 = vshrl.u32 %v737, 16
    %v742 = vrot.slane %v740, 7
    %v743 = vshll.u32 %v737, 16
    %v745 = vor.u32 %v742, %v743
    %v747 = vshrl.u32 %v738, 16
    %v749 = vrot.slane %v747, 7
    %v750 = vshll.u32 %v738, 16
    %v752 = vor.u32 %v749, %v750
    %v753 = vsel %vm88, %v742, %v752
    %v756 = vsel %vm107, 0, %v745
    %v757 = vsel %vm120, %v756, 0
    %v758 = vsel %vm120, %v753, 0
    %v759 = vrot.slane %v743, 1
    %v760 = vor.u32 %v740, %v759
    %v761 = vrot.slane %v750, 1
    %v762 = vsel %vm123, %v760, %v761
    %v763 = vor.u32 %v747, %v761
    %v766 = vsel %vm132, %v763, 0
    %v767 = vsel %vm145, %v762, 0
    %v768 = vsel %vm145, %v766, 0
    %v769 = vld [vmem:[#allocation5] sm:$0xf]
    %v770 = vld [vmem:[#allocation5 + $0x4] sm:$0xf]
    %v771 = vld [vmem:[#allocation5 + $0x8] sm:$0xf]
    %v772 = vld [vmem:[#allocation5 + $0xc] sm:$0xf]
    %v773 = vld [vmem:[#allocation5 + $0x10] sm:$0xf]
    %v774 = vld [vmem:[#allocation5 + $0x14] sm:$0xf]
    %v775 = vld [vmem:[#allocation5 + $0x18] sm:$0xf]
    %v776 = vld [vmem:[#allocation5 + $0x1c] sm:$0xf]
    %v777 = vld [vmem:[#allocation5 + $0x20] sm:$0xf]
    %v778 = vld [vmem:[#allocation5 + $0x24] sm:$0xf]
    %v779 = vld [vmem:[#allocation5 + $0x28] sm:$0xf]
    %v780 = vld [vmem:[#allocation5 + $0x2c] sm:$0xf]
    %v781 = vld [vmem:[#allocation5 + $0x30] sm:$0xf]
    %v782 = vld [vmem:[#allocation5 + $0x34] sm:$0xf]
    %v783 = vld [vmem:[#allocation5 + $0x38] sm:$0xf]
    %v784 = vld [vmem:[#allocation5 + $0x3c] sm:$0xf]
    %v785 = vld [vmem:[#allocation5 + $0x40] sm:$0xf]
    %v786 = vld [vmem:[#allocation5 + $0x44] sm:$0xf]
    %v787 = vld [vmem:[#allocation5 + $0x48] sm:$0xf]
    %v788 = vld [vmem:[#allocation5 + $0x4c] sm:$0xf]
    %v789 = vld [vmem:[#allocation5 + $0x50] sm:$0xf]
    %v790 = vld [vmem:[#allocation5 + $0x54] sm:$0xf]
    %v791 = vld [vmem:[#allocation5 + $0x58] sm:$0xf]
    %v792 = vld [vmem:[#allocation5 + $0x5c] sm:$0xf]
    %v793 = vld [vmem:[#allocation5 + $0x60] sm:$0xf]
    %v794 = vld [vmem:[#allocation5 + $0x64] sm:$0xf]
    %v795 = vld [vmem:[#allocation5 + $0x68] sm:$0xf]
    %v796 = vld [vmem:[#allocation5 + $0x6c] sm:$0xf]
    %v797 = vld [vmem:[#allocation5 + $0x70] sm:$0xf]
    %v798 = vld [vmem:[#allocation5 + $0x74] sm:$0xf]
    %v799 = vld [vmem:[#allocation5 + $0x78] sm:$0xf]
    %v800 = vld [vmem:[#allocation5 + $0x7c] sm:$0xf]
    %v801 = vld [vmem:[#allocation5 + $0x80] sm:$0xf]
    %v802 = vld [vmem:[#allocation5 + $0x84] sm:$0xf]
    %v803 = vld [vmem:[#allocation5 + $0x88] sm:$0xf]
    %v804 = vld [vmem:[#allocation5 + $0x8c] sm:$0xf]
    %v805 = vld [vmem:[#allocation5 + $0x90] sm:$0xf]
    %v806 = vld [vmem:[#allocation5 + $0x94] sm:$0xf]
    %v807 = vld [vmem:[#allocation5 + $0x98] sm:$0xf]
    %v808 = vld [vmem:[#allocation5 + $0x9c] sm:$0xf]
    %v809 = vld [vmem:[#allocation5 + $0xa0] sm:$0xf]
    %v810 = vld [vmem:[#allocation5 + $0xa4] sm:$0xf]
    %v811 = vld [vmem:[#allocation5 + $0xa8] sm:$0xf]
    %v812 = vld [vmem:[#allocation5 + $0xac] sm:$0xf]
    %v813 = vld [vmem:[#allocation5 + $0xb0] sm:$0xf]
    %v814 = vld [vmem:[#allocation5 + $0xb4] sm:$0xf]
    %v815 = vld [vmem:[#allocation5 + $0xb8] sm:$0xf]
    %v816 = vld [vmem:[#allocation5 + $0xbc] sm:$0xf]
    %v817 = vld [vmem:[%s1 + $0x3] sm:$0x1]
    %v818 = vlaneseq
    %v819 = vshrl.u32 %v818, 7
    %v820 = vsub.s32 0, %v819
    %v821 = vrot.slane %v817, %v820
    %v870 = vunpack.c.l.b16 %v769
    %v871 = vunpack.c.l.b16 %v770
    %v872 = vunpack.c.l.b16 %v771
    %v873 = vunpack.c.l.b16 %v772
    %v874 = vunpack.c.l.b16 %v773
    %v875 = vunpack.c.l.b16 %v774
    %v876 = vunpack.c.l.b16 %v775
    %v877 = vunpack.c.l.b16 %v776
    %v878 = vunpack.c.l.b16 %v777
    %v879 = vunpack.c.l.b16 %v778
    %v880 = vunpack.c.l.b16 %v779
    %v881 = vunpack.c.l.b16 %v780
    %v882 = vunpack.c.l.b16 %v781
    %v883 = vunpack.c.l.b16 %v782
    %v884 = vunpack.c.l.b16 %v783
    %v885 = vunpack.c.l.b16 %v784
    %v886 = vunpack.c.l.b16 %v785
    %v887 = vunpack.c.l.b16 %v786
    %v888 = vunpack.c.l.b16 %v787
    %v889 = vunpack.c.l.b16 %v788
    %v890 = vunpack.c.l.b16 %v789
    %v891 = vunpack.c.l.b16 %v790
    %v892 = vunpack.c.l.b16 %v791
    %v893 = vunpack.c.l.b16 %v792
    %v894 = vunpack.c.l.b16 %v793
    %v895 = vunpack.c.l.b16 %v794
    %v896 = vunpack.c.l.b16 %v795
    %v897 = vunpack.c.l.b16 %v796
    %v898 = vunpack.c.l.b16 %v797
    %v899 = vunpack.c.l.b16 %v798
    %v900 = vunpack.c.l.b16 %v799
    %v901 = vunpack.c.l.b16 %v800
    %v902 = vunpack.c.l.b16 %v801
    %v903 = vunpack.c.l.b16 %v802
    %v904 = vunpack.c.l.b16 %v803
    %v905 = vunpack.c.l.b16 %v804
    %v906 = vunpack.c.l.b16 %v805
    %v907 = vunpack.c.l.b16 %v806
    %v908 = vunpack.c.l.b16 %v807
    %v909 = vunpack.c.l.b16 %v808
    %v910 = vunpack.c.l.b16 %v809
    %v911 = vunpack.c.l.b16 %v810
    %v912 = vunpack.c.l.b16 %v811
    %v913 = vunpack.c.l.b16 %v812
    %v914 = vunpack.c.l.b16 %v813
    %v915 = vunpack.c.l.b16 %v814
    %v916 = vunpack.c.l.b16 %v815
    %v917 = vunpack.c.l.b16 %v816
    %v918 = vpack.c.b16 %v871, %v870
    %v919 = vpack.c.b16 %v873, %v872
    %v920 = vpack.c.b16 %v875, %v874
    %v921 = vpack.c.b16 %v877, %v876
    %v922 = vpack.c.b16 %v879, %v878
    %v923 = vpack.c.b16 %v881, %v880
    %v924 = vpack.c.b16 %v883, %v882
    %v925 = vpack.c.b16 %v885, %v884
    %v926 = vpack.c.b16 %v887, %v886
    %v927 = vpack.c.b16 %v889, %v888
    %v928 = vpack.c.b16 %v891, %v890
    %v929 = vpack.c.b16 %v893, %v892
    %v930 = vpack.c.b16 %v895, %v894
    %v931 = vpack.c.b16 %v897, %v896
    %v932 = vpack.c.b16 %v899, %v898
    %v933 = vpack.c.b16 %v901, %v900
    %v934 = vpack.c.b16 %v903, %v902
    %v935 = vpack.c.b16 %v905, %v904
    %v936 = vpack.c.b16 %v907, %v906
    %v937 = vpack.c.b16 %v909, %v908
    %v938 = vpack.c.b16 %v911, %v910
    %v939 = vpack.c.b16 %v913, %v912
    %v940 = vpack.c.b16 %v915, %v914
    %v941 = vpack.c.b16 %v917, %v916
    %966 = vmatprep.subr.bf16.mxu0 0
    %967 = vmatpush1.bf16.msra.mxu0 %v925
    %968 = vmatprep.subr.bf16.mxu0 0
    %969 = vmatpush1.bf16.msra.mxu0 %v924
    %970 = vmatprep.subr.bf16.mxu0 0
    %971 = vmatpush1.bf16.msra.mxu0 %v923
    %972 = vmatprep.subr.bf16.mxu0 0
    %973 = vmatpush1.bf16.msra.mxu0 %v922
    %974 = vmatprep.subr.bf16.mxu0 0
    %975 = vmatpush1.bf16.msra.mxu0 %v921
    %976 = vmatprep.subr.bf16.mxu0 0
    %977 = vmatpush1.bf16.msra.mxu0 %v920
    %978 = vmatprep.subr.bf16.mxu0 0
    %979 = vmatpush1.bf16.msra.mxu0 %v919
    %980 = vmatprep.subr.bf16.mxu0 0
    %981 = vmatpush1.bf16.msra.mxu0 %v918
    %982 = vmatprep.subr.bf16.mxu0 0
    %983 = vmatpush2.bf16.msra.mxu0 %v933
    %984 = vmatprep.subr.bf16.mxu0 0
    %985 = vmatpush2.bf16.msra.mxu0 %v932
    %986 = vmatprep.subr.bf16.mxu0 0
    %987 = vmatpush2.bf16.msra.mxu0 %v931
    %988 = vmatprep.subr.bf16.mxu0 0
    %989 = vmatpush2.bf16.msra.mxu0 %v930
    %990 = vmatprep.subr.bf16.mxu0 0
    %991 = vmatpush2.bf16.msra.mxu0 %v929
    %992 = vmatprep.subr.bf16.mxu0 0
    %993 = vmatpush2.bf16.msra.mxu0 %v928
    %994 = vmatprep.subr.bf16.mxu0 0
    %995 = vmatpush2.bf16.msra.mxu0 %v927
    %996 = vmatprep.subr.bf16.mxu0 0
    %997 = vmatpush2.bf16.msra.mxu0 %v926
    %998 = vmatprep.mubr.bf16.mxu0 %v737
    %999 = vmatmul.mubr.bf16.gmra.mxu0 %v757
    %v1000 = vpop.f32.mrf.mxu0
    %v1001 = vadd.f32 %v821, %v1000
    %v1002 = vpop.f32.mrf.mxu0
    %v1003 = vpop.f32.mrf.mxu0
    %v1004 = vadd.f32 %v821, %v1003
    %v1005 = vpop.f32.mrf.mxu0
    %1006 = vmatprep.mubr.bf16.mxu0 %v738
    %1007 = vmatmul.mubr.bf16.gmra.mxu0 %v758
    %v1008 = vpop.f32.mrf.mxu0
    %v1009 = vadd.f32 %v821, %v1008
    %v1010 = vpop.f32.mrf.mxu0
    %v1011 = vpop.f32.mrf.mxu0
    %v1012 = vadd.f32 %v821, %v1011
    %v1013 = vpop.f32.mrf.mxu0
    %1014 = vdwg.mxu0
    %1015 = vmatprep.subr.bf16.mxu0 0
    %1016 = vmatpush1.bf16.msra.mxu0 %v941
    %1017 = vmatprep.subr.bf16.mxu0 0
    %1018 = vmatpush1.bf16.msra.mxu0 %v940
    %1019 = vmatprep.subr.bf16.mxu0 0
    %1020 = vmatpush1.bf16.msra.mxu0 %v939
    %1021 = vmatprep.subr.bf16.mxu0 0
    %1022 = vmatpush1.bf16.msra.mxu0 %v938
    %1023 = vmatprep.subr.bf16.mxu0 0
    %1024 = vmatpush1.bf16.msra.mxu0 %v937
    %1025 = vmatprep.subr.bf16.mxu0 0
    %1026 = vmatpush1.bf16.msra.mxu0 %v936
    %1027 = vmatprep.subr.bf16.mxu0 0
    %1028 = vmatpush1.bf16.msra.mxu0 %v935
    %1029 = vmatprep.subr.bf16.mxu0 0
    %1030 = vmatpush1.bf16.msra.mxu0 %v934
    %1031 = vmatprep.subr.bf16.mxu0 0
    %1032 = vmatpush2.bf16.msra.mxu0 0
    %1033 = vmatprep.subr.bf16.mxu0 0
    %1034 = vmatpush2.bf16.msra.mxu0 0
    %1035 = vmatprep.subr.bf16.mxu0 0
    %1036 = vmatpush2.bf16.msra.mxu0 0
    %1037 = vmatprep.subr.bf16.mxu0 0
    %1038 = vmatpush2.bf16.msra.mxu0 0
    %1039 = vmatprep.subr.bf16.mxu0 0
    %1040 = vmatpush2.bf16.msra.mxu0 0
    %1041 = vmatprep.subr.bf16.mxu0 0
    %1042 = vmatpush2.bf16.msra.mxu0 0
    %1043 = vmatprep.subr.bf16.mxu0 0
    %1044 = vmatpush2.bf16.msra.mxu0 0
    %1045 = vmatprep.subr.bf16.mxu0 0
    %1046 = vmatpush2.bf16.msra.mxu0 0
    %1047 = vmatprep.mubr.bf16.mxu0 0
    %1048 = vmatmul.mubr.bf16.gmra.mxu0 %v767
    %v1049 = vpop.f32.mrf.mxu0
    %v1050 = vadd.f32 %v1001, %v1049
    %v1051 = vpop.f32.mrf.mxu0
    %v1052 = vpop.f32.mrf.mxu0
    %v1053 = vadd.f32 %v1004, %v1052
    %v1054 = vpop.f32.mrf.mxu0
    %1055 = vmatprep.mubr.bf16.mxu0 0
    %1056 = vmatmul.mubr.bf16.gmra.mxu0 %v768
    %v1057 = vpop.f32.mrf.mxu0
    %v1058 = vadd.f32 %v1009, %v1057
    %v1059 = vpop.f32.mrf.mxu0
    %v1060 = vpop.f32.mrf.mxu0
    %v1061 = vadd.f32 %v1012, %v1060
    %v1062 = vpop.f32.mrf.mxu0
    %1063 = vdwg.mxu0
    %v1064 = vmax.f32 %v1050, 0.0
    %v1065 = vmax.f32 %v1053, 0.0
    %v1066 = vmax.f32 %v1058, 0.0
    %v1067 = vmax.f32 %v1061, 0.0
    %v1068 = vpack.c.bf16 %v1065, %v1064
    %v1069 = vpack.c.bf16 %v1067, %v1066
    %v1071 = vshrl.u32 %v1068, 16
    %v1073 = vrot.slane %v1071, 7
    %v1074 = vshll.u32 %v1068, 16
    %v1076 = vor.u32 %v1073, %v1074
    %v1078 = vshrl.u32 %v1069, 16
    %v1080 = vrot.slane %v1078, 7
    %v1081 = vshll.u32 %v1069, 16
    %v1083 = vor.u32 %v1080, %v1081
    %v1084 = vsel %vm88, %v1073, %v1083
    %v1087 = vsel %vm107, 0, %v1076
    %v1088 = vsel %vm120, %v1087, 0
    %v1089 = vsel %vm120, %v1084, 0
    %v1090 = vrot.slane %v1074, 1
    %v1091 = vor.u32 %v1071, %v1090
    %v1092 = vrot.slane %v1081, 1
    %v1093 = vsel %vm123, %v1091, %v1092
    %v1094 = vor.u32 %v1078, %v1092
    %v1097 = vsel %vm132, %v1094, 0
    %v1098 = vsel %vm145, %v1093, 0
    %v1099 = vsel %vm145, %v1097, 0
    %v1100 = vld [vmem:[#allocation7] sm:$0xf]
    %v1101 = vld [vmem:[#allocation7 + $0x4] sm:$0xf]
    %v1102 = vld [vmem:[#allocation7 + $0x8] sm:$0xf]
    %v1103 = vld [vmem:[#allocation7 + $0xc] sm:$0xf]
    %v1104 = vld [vmem:[#allocation7 + $0x10] sm:$0xf]
    %v1105 = vld [vmem:[#allocation7 + $0x14] sm:$0xf]
    %v1106 = vld [vmem:[#allocation7 + $0x18] sm:$0xf]
    %v1107 = vld [vmem:[#allocation7 + $0x1c] sm:$0xf]
    %v1108 = vld [vmem:[#allocation7 + $0x20] sm:$0xf]
    %v1109 = vld [vmem:[#allocation7 + $0x24] sm:$0xf]
    %v1110 = vld [vmem:[#allocation7 + $0x28] sm:$0xf]
    %v1111 = vld [vmem:[#allocation7 + $0x2c] sm:$0xf]
    %v1112 = vld [vmem:[#allocation7 + $0x30] sm:$0xf]
    %v1113 = vld [vmem:[#allocation7 + $0x34] sm:$0xf]
    %v1114 = vld [vmem:[#allocation7 + $0x38] sm:$0xf]
    %v1115 = vld [vmem:[#allocation7 + $0x3c] sm:$0xf]
    %v1116 = vld [vmem:[#allocation7 + $0x40] sm:$0xf]
    %v1117 = vld [vmem:[#allocation7 + $0x44] sm:$0xf]
    %v1118 = vld [vmem:[#allocation7 + $0x48] sm:$0xf]
    %v1119 = vld [vmem:[#allocation7 + $0x4c] sm:$0xf]
    %v1120 = vld [vmem:[#allocation7 + $0x50] sm:$0xf]
    %v1121 = vld [vmem:[#allocation7 + $0x54] sm:$0xf]
    %v1122 = vld [vmem:[#allocation7 + $0x58] sm:$0xf]
    %v1123 = vld [vmem:[#allocation7 + $0x5c] sm:$0xf]
    %v1124 = vld [vmem:[#allocation7 + $0x60] sm:$0xf]
    %v1125 = vld [vmem:[#allocation7 + $0x64] sm:$0xf]
    %v1126 = vld [vmem:[#allocation7 + $0x68] sm:$0xf]
    %v1127 = vld [vmem:[#allocation7 + $0x6c] sm:$0xf]
    %v1128 = vld [vmem:[#allocation7 + $0x70] sm:$0xf]
    %v1129 = vld [vmem:[#allocation7 + $0x74] sm:$0xf]
    %v1130 = vld [vmem:[#allocation7 + $0x78] sm:$0xf]
    %v1131 = vld [vmem:[#allocation7 + $0x7c] sm:$0xf]
    %v1132 = vld [vmem:[#allocation7 + $0x80] sm:$0xf]
    %v1133 = vld [vmem:[#allocation7 + $0x84] sm:$0xf]
    %v1134 = vld [vmem:[#allocation7 + $0x88] sm:$0xf]
    %v1135 = vld [vmem:[#allocation7 + $0x8c] sm:$0xf]
    %v1136 = vld [vmem:[#allocation7 + $0x90] sm:$0xf]
    %v1137 = vld [vmem:[#allocation7 + $0x94] sm:$0xf]
    %v1138 = vld [vmem:[#allocation7 + $0x98] sm:$0xf]
    %v1139 = vld [vmem:[#allocation7 + $0x9c] sm:$0xf]
    %v1140 = vld [vmem:[#allocation7 + $0xa0] sm:$0xf]
    %v1141 = vld [vmem:[#allocation7 + $0xa4] sm:$0xf]
    %v1142 = vld [vmem:[#allocation7 + $0xa8] sm:$0xf]
    %v1143 = vld [vmem:[#allocation7 + $0xac] sm:$0xf]
    %v1144 = vld [vmem:[#allocation7 + $0xb0] sm:$0xf]
    %v1145 = vld [vmem:[#allocation7 + $0xb4] sm:$0xf]
    %v1146 = vld [vmem:[#allocation7 + $0xb8] sm:$0xf]
    %v1147 = vld [vmem:[#allocation7 + $0xbc] sm:$0xf]
    %v1148 = vld [vmem:[%s1 + $0x4] sm:$0x1]
    %v1149 = vlaneseq
    %v1150 = vshrl.u32 %v1149, 7
    %v1151 = vsub.s32 0, %v1150
    %v1152 = vrot.slane %v1148, %v1151
    %v1201 = vunpack.c.l.b16 %v1100
    %v1202 = vunpack.c.l.b16 %v1101
    %v1203 = vunpack.c.l.b16 %v1102
    %v1204 = vunpack.c.l.b16 %v1103
    %v1205 = vunpack.c.l.b16 %v1104
    %v1206 = vunpack.c.l.b16 %v1105
    %v1207 = vunpack.c.l.b16 %v1106
    %v1208 = vunpack.c.l.b16 %v1107
    %v1209 = vunpack.c.l.b16 %v1108
    %v1210 = vunpack.c.l.b16 %v1109
    %v1211 = vunpack.c.l.b16 %v1110
    %v1212 = vunpack.c.l.b16 %v1111
    %v1213 = vunpack.c.l.b16 %v1112
    %v1214 = vunpack.c.l.b16 %v1113
    %v1215 = vunpack.c.l.b16 %v1114
    %v1216 = vunpack.c.l.b16 %v1115
    %v1217 = vunpack.c.l.b16 %v1116
    %v1218 = vunpack.c.l.b16 %v1117
    %v1219 = vunpack.c.l.b16 %v1118
    %v1220 = vunpack.c.l.b16 %v1119
    %v1221 = vunpack.c.l.b16 %v1120
    %v1222 = vunpack.c.l.b16 %v1121
    %v1223 = vunpack.c.l.b16 %v1122
    %v1224 = vunpack.c.l.b16 %v1123
    %v1225 = vunpack.c.l.b16 %v1124
    %v1226 = vunpack.c.l.b16 %v1125
    %v1227 = vunpack.c.l.b16 %v1126
    %v1228 = vunpack.c.l.b16 %v1127
    %v1229 = vunpack.c.l.b16 %v1128
    %v1230 = vunpack.c.l.b16 %v1129
    %v1231 = vunpack.c.l.b16 %v1130
    %v1232 = vunpack.c.l.b16 %v1131
    %v1233 = vunpack.c.l.b16 %v1132
    %v1234 = vunpack.c.l.b16 %v1133
    %v1235 = vunpack.c.l.b16 %v1134
    %v1236 = vunpack.c.l.b16 %v1135
    %v1237 = vunpack.c.l.b16 %v1136
    %v1238 = vunpack.c.l.b16 %v1137
    %v1239 = vunpack.c.l.b16 %v1138
    %v1240 = vunpack.c.l.b16 %v1139
    %v1241 = vunpack.c.l.b16 %v1140
    %v1242 = vunpack.c.l.b16 %v1141
    %v1243 = vunpack.c.l.b16 %v1142
    %v1244 = vunpack.c.l.b16 %v1143
    %v1245 = vunpack.c.l.b16 %v1144
    %v1246 = vunpack.c.l.b16 %v1145
    %v1247 = vunpack.c.l.b16 %v1146
    %v1248 = vunpack.c.l.b16 %v1147
    %v1249 = vpack.c.b16 %v1202, %v1201
    %v1250 = vpack.c.b16 %v1204, %v1203
    %v1251 = vpack.c.b16 %v1206, %v1205
    %v1252 = vpack.c.b16 %v1208, %v1207
    %v1253 = vpack.c.b16 %v1210, %v1209
    %v1254 = vpack.c.b16 %v1212, %v1211
    %v1255 = vpack.c.b16 %v1214, %v1213
    %v1256 = vpack.c.b16 %v1216, %v1215
    %v1257 = vpack.c.b16 %v1218, %v1217
    %v1258 = vpack.c.b16 %v1220, %v1219
    %v1259 = vpack.c.b16 %v1222, %v1221
    %v1260 = vpack.c.b16 %v1224, %v1223
    %v1261 = vpack.c.b16 %v1226, %v1225
    %v1262 = vpack.c.b16 %v1228, %v1227
    %v1263 = vpack.c.b16 %v1230, %v1229
    %v1264 = vpack.c.b16 %v1232, %v1231
    %v1265 = vpack.c.b16 %v1234, %v1233
    %v1266 = vpack.c.b16 %v1236, %v1235
    %v1267 = vpack.c.b16 %v1238, %v1237
    %v1268 = vpack.c.b16 %v1240, %v1239
    %v1269 = vpack.c.b16 %v1242, %v1241
    %v1270 = vpack.c.b16 %v1244, %v1243
    %v1271 = vpack.c.b16 %v1246, %v1245
    %v1272 = vpack.c.b16 %v1248, %v1247
    %1297 = vmatprep.subr.bf16.mxu0 0
    %1298 = vmatpush1.bf16.msra.mxu0 %v1256
    %1299 = vmatprep.subr.bf16.mxu0 0
    %1300 = vmatpush1.bf16.msra.mxu0 %v1255
    %1301 = vmatprep.subr.bf16.mxu0 0
    %1302 = vmatpush1.bf16.msra.mxu0 %v1254
    %1303 = vmatprep.subr.bf16.mxu0 0
    %1304 = vmatpush1.bf16.msra.mxu0 %v1253
    %1305 = vmatprep.subr.bf16.mxu0 0
    %1306 = vmatpush1.bf16.msra.mxu0 %v1252
    %1307 = vmatprep.subr.bf16.mxu0 0
    %1308 = vmatpush1.bf16.msra.mxu0 %v1251
    %1309 = vmatprep.subr.bf16.mxu0 0
    %1310 = vmatpush1.bf16.msra.mxu0 %v1250
    %1311 = vmatprep.subr.bf16.mxu0 0
    %1312 = vmatpush1.bf16.msra.mxu0 %v1249
    %1313 = vmatprep.subr.bf16.mxu0 0
    %1314 = vmatpush2.bf16.msra.mxu0 %v1264
    %1315 = vmatprep.subr.bf16.mxu0 0
    %1316 = vmatpush2.bf16.msra.mxu0 %v1263
    %1317 = vmatprep.subr.bf16.mxu0 0
    %1318 = vmatpush2.bf16.msra.mxu0 %v1262
    %1319 = vmatprep.subr.bf16.mxu0 0
    %1320 = vmatpush2.bf16.msra.mxu0 %v1261
    %1321 = vmatprep.subr.bf16.mxu0 0
    %1322 = vmatpush2.bf16.msra.mxu0 %v1260
    %1323 = vmatprep.subr.bf16.mxu0 0
    %1324 = vmatpush2.bf16.msra.mxu0 %v1259
    %1325 = vmatprep.subr.bf16.mxu0 0
    %1326 = vmatpush2.bf16.msra.mxu0 %v1258
    %1327 = vmatprep.subr.bf16.mxu0 0
    %1328 = vmatpush2.bf16.msra.mxu0 %v1257
    %1329 = vmatprep.mubr.bf16.mxu0 %v1068
    %1330 = vmatmul.mubr.bf16.gmra.mxu0 %v1088
    %v1331 = vpop.f32.mrf.mxu0
    %v1332 = vadd.f32 %v1152, %v1331
    %v1333 = vpop.f32.mrf.mxu0
    %v1334 = vpop.f32.mrf.mxu0
    %v1335 = vadd.f32 %v1152, %v1334
    %v1336 = vpop.f32.mrf.mxu0
    %1337 = vmatprep.mubr.bf16.mxu0 %v1069
    %1338 = vmatmul.mubr.bf16.gmra.mxu0 %v1089
    %v1339 = vpop.f32.mrf.mxu0
    %v1340 = vadd.f32 %v1152, %v1339
    %v1341 = vpop.f32.mrf.mxu0
    %v1342 = vpop.f32.mrf.mxu0
    %v1343 = vadd.f32 %v1152, %v1342
    %v1344 = vpop.f32.mrf.mxu0
    %1345 = vdwg.mxu0
    %1346 = vmatprep.subr.bf16.mxu0 0
    %1347 = vmatpush1.bf16.msra.mxu0 %v1272
    %1348 = vmatprep.subr.bf16.mxu0 0
    %1349 = vmatpush1.bf16.msra.mxu0 %v1271
    %1350 = vmatprep.subr.bf16.mxu0 0
    %1351 = vmatpush1.bf16.msra.mxu0 %v1270
    %1352 = vmatprep.subr.bf16.mxu0 0
    %1353 = vmatpush1.bf16.msra.mxu0 %v1269
    %1354 = vmatprep.subr.bf16.mxu0 0
    %1355 = vmatpush1.bf16.msra.mxu0 %v1268
    %1356 = vmatprep.subr.bf16.mxu0 0
    %1357 = vmatpush1.bf16.msra.mxu0 %v1267
    %1358 = vmatprep.subr.bf16.mxu0 0
    %1359 = vmatpush1.bf16.msra.mxu0 %v1266
    %1360 = vmatprep.subr.bf16.mxu0 0
    %1361 = vmatpush1.bf16.msra.mxu0 %v1265
    %1362 = vmatprep.subr.bf16.mxu0 0
    %1363 = vmatpush2.bf16.msra.mxu0 0
    %1364 = vmatprep.subr.bf16.mxu0 0
    %1365 = vmatpush2.bf16.msra.mxu0 0
    %1366 = vmatprep.subr.bf16.mxu0 0
    %1367 = vmatpush2.bf16.msra.mxu0 0
    %1368 = vmatprep.subr.bf16.mxu0 0
    %1369 = vmatpush2.bf16.msra.mxu0 0
    %1370 = vmatprep.subr.bf16.mxu0 0
    %1371 = vmatpush2.bf16.msra.mxu0 0
    %1372 = vmatprep.subr.bf16.mxu0 0
    %1373 = vmatpush2.bf16.msra.mxu0 0
    %1374 = vmatprep.subr.bf16.mxu0 0
    %1375 = vmatpush2.bf16.msra.mxu0 0
    %1376 = vmatprep.subr.bf16.mxu0 0
    %1377 = vmatpush2.bf16.msra.mxu0 0
    %1378 = vmatprep.mubr.bf16.mxu0 0
    %1379 = vmatmul.mubr.bf16.gmra.mxu0 %v1098
    %v1380 = vpop.f32.mrf.mxu0
    %v1381 = vadd.f32 %v1332, %v1380
    %v1382 = vpop.f32.mrf.mxu0
    %v1383 = vpop.f32.mrf.mxu0
    %v1384 = vadd.f32 %v1335, %v1383
    %v1385 = vpop.f32.mrf.mxu0
    %1386 = vmatprep.mubr.bf16.mxu0 0
    %1387 = vmatmul.mubr.bf16.gmra.mxu0 %v1099
    %v1388 = vpop.f32.mrf.mxu0
    %v1389 = vadd.f32 %v1340, %v1388
    %v1390 = vpop.f32.mrf.mxu0
    %v1391 = vpop.f32.mrf.mxu0
    %v1392 = vadd.f32 %v1343, %v1391
    %v1393 = vpop.f32.mrf.mxu0
    %1394 = vdwg.mxu0
    %v1395 = vadd.f32 %v1381, %v733
    %v1396 = vadd.f32 %v1384, %v734
    %v1397 = vadd.f32 %v1389, %v735
    %v1398 = vadd.f32 %v1392, %v736
    %v1399 = vmax.f32 %v1395, 0.0
    %v1400 = vmax.f32 %v1396, 0.0
    %v1401 = vmax.f32 %v1397, 0.0
    %v1402 = vmax.f32 %v1398, 0.0
    %vm1403 = vcmask 261120
    %1404 = vst.msk [vmem:[#allocation8] sm:$0xff] %vm1403, %v1399
    %1405 = vst.msk [vmem:[#allocation8 + $0x8] sm:$0xff] %vm1403, %v1400
    %1406 = vst.msk [vmem:[#allocation8 + $0x10] sm:$0xff] %vm1403, %v1401
    %1407 = vst.msk [vmem:[#allocation8 + $0x18] sm:$0xff] %vm1403, %v1402
    // Predicated region
    $region42: #{tpu_custom_call.1} parent=1 // pred_check
      _
    $region43: #{tpu_custom_call.1} parent=1 // pred_check_branch
      %1409 = sbr.rel (0) target = $region45
    $region44: #{tpu_custom_call.1} parent=1 // pred_region
      %s1411 = ssub.s32 512, 512
      %1412 = vsyncadd [#allocation4], %s1411
      %s1413 = sshll.u32 [#allocation8], 4
      %s1414 = int_to_ptr.vmem [resolvable:$true] %s1413
      %1419 = dma.vmem_to_hbm [thread:$0]  %s1414, 512, %s7, [#allocation4], 128, 128, 8
    $region45: #{tpu_custom_call.1} parent=1 // pred_fallthru
      _
    // Predicated region
    $region46: #{tpu_custom_call.1} parent=1 // pred_check
      _
    $region47: #{tpu_custom_call.1} parent=1 // pred_check_branch
      %1421 = sbr.rel (0) target = $region49
    $region48: #{tpu_custom_call.1} parent=1 // pred_region
      %1422 = dma.done [#allocation4], 512
    $region49: #{tpu_custom_call.1} parent=1 // pred_fallthru
      _
    %1423 = vsyncpa [#allocation3], 1
    %1424 = vsyncpa [#allocation6], 1
    %1425 = vsyncpa [#allocation4], 1

// kernel: tpu_custom_call.1
$region0: #{tpu_custom_call.1}
  #allocation0 [shape = 'u32[]', space=smem, size = 0x4, offset = 0x4, fixed_abs, tag = 'smem constant byte address 0x4 - core index']
  #allocation1 [shape = 'u32[144,128]{1,0:T(1,128)}', space=vmem, size = 0x12000, scoped, tag = 'internal scratch']
  %s0 = inlined_call_operand.vmem [shape: f32[2,16,8], index: 0, kind: input, shape index: {}]
  %s1 = inlined_call_operand.vmem [shape: f32[5,128], index: 1, kind: input, shape index: {}]
  %s2 = inlined_call_operand.vmem [shape: bf16[3,8,128], index: 2, kind: input, shape index: {}]
  %s3 = inlined_call_operand.hbm [shape: bf16[384,128], index: 3, kind: input, shape index: {}]
  %s4 = inlined_call_operand.vmem [shape: bf16[8,128], index: 4, kind: input, shape index: {}]
  %s5 = inlined_call_operand.hbm [shape: bf16[384,128], index: 5, kind: input, shape index: {}]
  %s6 = inlined_call_operand.hbm [shape: bf16[384,128], index: 6, kind: input, shape index: {}]
  %s7 = inlined_call_operand.hbm [shape: f32[2,16,32], index: 7, kind: output, shape index: {}]
  %s8 = sld [smem:[#allocation0]]
  $region50: #{tpu_custom_call.1} parent=0
    _
  %s10 = ssub.s32 1, %s8
  %s11 = scalar_select 0, %s10, %s8
  $region1: #{tpu_custom_call.1} parent=0
    #allocation2 [shape = 'u8[98304]{0}', space=vmem, size = 0x18000, scoped, tag = 'input window, operand 3, single buffered']
    #allocation3 [shape = 's32[1]{0}', space=sflag, size = 0x4, scoped, tag = 'scoped memory for tpu_custom_call.1']
    #allocation4 [shape = 's32[1]{0}', space=sflag, size = 0x4, scoped, tag = 'scoped memory for tpu_custom_call.1']
    #allocation5 [shape = 'u8[98304]{0}', space=vmem, size = 0x18000, scoped, tag = 'input window, operand 5, single buffered']
    #allocation6 [shape = 's32[1]{0}', space=sflag, size = 0x4, scoped, tag = 'scoped memory for tpu_custom_call.1']
    #allocation7 [shape = 'u8[98304]{0}', space=vmem, size = 0x18000, scoped, tag = 'input window, operand 6, single buffered']
    #allocation8 [shape = 'u8[16384]{0}', space=vmem, size = 0x4000, scoped, tag = 'output window, operand 0, single buffered']
    %12 = vsyncpa [#allocation3], 0
    %13 = vsyncpa [#allocation6], 0
    %14 = vsyncpa [#allocation4], 0
    // Predicated region
    $region2: #{tpu_custom_call.1} parent=1 // pred_check
      _
    $region3: #{tpu_custom_call.1} parent=1 // pred_check_branch
      %16 = sbr.rel (0) target = $region5
    $region4: #{tpu_custom_call.1} parent=1 // pred_region
      _
    $region5: #{tpu_custom_call.1} parent=1 // pred_fallthru
      _
    // Predicated region
    $region6: #{tpu_custom_call.1} parent=1 // pred_check
      _
    $region7: #{tpu_custom_call.1} parent=1 // pred_check_branch
      %18 = sbr.rel (0) target = $region9
    $region8: #{tpu_custom_call.1} parent=1 // pred_region
      _
    $region9: #{tpu_custom_call.1} parent=1 // pred_fallthru
      _
    // Predicated region
    $region10: #{tpu_custom_call.1} parent=1 // pred_check
      _
    $region11: #{tpu_custom_call.1} parent=1 // pred_check_branch
      %20 = sbr.rel (0) target = $region13
    $region12: #{tpu_custom_call.1} parent=1 // pred_region
      _
    $region13: #{tpu_custom_call.1} parent=1 // pred_fallthru
      _
    // Predicated region
    $region14: #{tpu_custom_call.1} parent=1 // pred_check
      _
    $region15: #{tpu_custom_call.1} parent=1 // pred_check_branch
      %22 = sbr.rel (0) target = $region17
    $region16: #{tpu_custom_call.1} parent=1 // pred_region
      %s24 = ssub.s32 3072, 3072
      %25 = vsyncadd [#allocation3], %s24
      %s26 = sshll.u32 [#allocation2], 4
      %s27 = int_to_ptr.vmem [resolvable:$true] %s26
      %32 = dma.hbm_to_vmem [thread:$0]  %s3, 3072, %s27, [#allocation3], 64, 64, 4
    $region17: #{tpu_custom_call.1} parent=1 // pred_fallthru
      _
    // Predicated region
    $region18: #{tpu_custom_call.1} parent=1 // pred_check
      _
    $region19: #{tpu_custom_call.1} parent=1 // pred_check_branch
      %34 = sbr.rel (0) target = $region21
    $region20: #{tpu_custom_call.1} parent=1 // pred_region
      _
    $region21: #{tpu_custom_call.1} parent=1 // pred_fallthru
      _
    // Predicated region
    $region22: #{tpu_custom_call.1} parent=1 // pred_check
      _
    $region23: #{tpu_custom_call.1} parent=1 // pred_check_branch
      %36 = sbr.rel (0) target = $region25
    $region24: #{tpu_custom_call.1} parent=1 // pred_region
      %s38 = ssub.s32 3072, 3072
      %39 = vsyncadd [#allocation6], %s38
      %s40 = sshll.u32 [#allocation5], 4
      %s41 = int_to_ptr.vmem [resolvable:$true] %s40
      %46 = dma.hbm_to_vmem [thread:$0]  %s5, 3072, %s41, [#allocation6], 64, 64, 4
    $region25: #{tpu_custom_call.1} parent=1 // pred_fallthru
      _
    // Predicated region
    $region26: #{tpu_custom_call.1} parent=1 // pred_check
      _
    $region27: #{tpu_custom_call.1} parent=1 // pred_check_branch
      %48 = sbr.rel (0) target = $region29
    $region28: #{tpu_custom_call.1} parent=1 // pred_region
      %s50 = ssub.s32 3072, 3072
      %51 = vsyncadd [#allocation6], %s50
      %s52 = sshll.u32 [#allocation7], 4
      %s53 = int_to_ptr.vmem [resolvable:$true] %s52
      %58 = dma.hbm_to_vmem [thread:$0]  %s6, 3072, %s53, [#allocation6], 64, 64, 4
    $region29: #{tpu_custom_call.1} parent=1 // pred_fallthru
      _
    // Predicated region
    $region30: #{tpu_custom_call.1} parent=1 // pred_check
      _
    $region31: #{tpu_custom_call.1} parent=1 // pred_check_branch
      %60 = sbr.rel (0) target = $region33
    $region32: #{tpu_custom_call.1} parent=1 // pred_region
      %61 = dma.done [#allocation3], 3072
    $region33: #{tpu_custom_call.1} parent=1 // pred_fallthru
      _
    // Predicated region
    $region34: #{tpu_custom_call.1} parent=1 // pred_check
      _
    $region35: #{tpu_custom_call.1} parent=1 // pred_check_branch
      %63 = sbr.rel (0) target = $region37
    $region36: #{tpu_custom_call.1} parent=1 // pred_region
      %64 = dma.done [#allocation6], 3072
    $region37: #{tpu_custom_call.1} parent=1 // pred_fallthru
      _
    // Predicated region
    $region38: #{tpu_custom_call.1} parent=1 // pred_check
      _
    $region39: #{tpu_custom_call.1} parent=1 // pred_check_branch
      %66 = sbr.rel (0) target = $region41
    $region40: #{tpu_custom_call.1} parent=1 // pred_region
      %67 = dma.done [#allocation6], 3072
    $region41: #{tpu_custom_call.1} parent=1 // pred_fallthru
      _
    %v71 = vld [vmem:[%s0] sm:$0xff]
    %v72 = vld [vmem:[%s0 + $0x8] sm:$0xff]
    %v73 = vld [vmem:[%s0 + $0x10] sm:$0xff]
    %v74 = vld [vmem:[%s0 + $0x18] sm:$0xff]
    %v75 = vlaneseq
    %v76 = vshrl.u32 %v75, 7
    %v77 = vadd.s32 %v76, 8
    %s78 = smul.u32 0, 16
    %v79 = vstv %s78
    %v80 = vadd.s32 %v76, %v79
    %v81 = vadd.s32 %v77, %v79
    %vm82 = vcmp.ne.s32.totalorder %v80, 0
    %vm83 = vcmp.ne.s32.totalorder %v81, 0
    %vm84 = vcmp.ne.s32.totalorder %v80, 15
    %vm85 = vcmp.ne.s32.totalorder %v81, 15
    %v86 = vpack.c.bf16 %v72, %v71
    %v87 = vpack.c.bf16 %v74, %v73
    %vm88 = vsmask.f32 256
    %v90 = vshrl.u32 %v86, 16
    %v92 = vrot.slane %v90, 7
    %v93 = vshll.u32 %v86, 16
    %v95 = vor.u32 %v92, %v93
    %v97 = vshrl.u32 %v87, 16
    %v99 = vrot.slane %v97, 7
    %v100 = vshll.u32 %v87, 16
    %v102 = vor.u32 %v99, %v100
    %v103 = vsel %vm88, %v92, %v102
    %vm106 = vcmask 1040384
    %vm107 = vmand %vm106, %vm88
    %v108 = vsel %vm107, 0, %v95
    %v109 = vsel %vm82, 1, 0
    %v110 = vsel %vm83, 1, 0
    %vm111 = vcmp.eq.s32.totalorder %v109, 1
    %vm112 = vcmp.eq.s32.totalorder %v110, 1
    %vm113 = vmpackc.low %vm111, %vm111
    %vm114 = vmpackc.low %vm112, %vm112
    %v115 = vsel %vm113, 65537, 0
    %v116 = vsel %vm114, 65537, 0
    %v117 = vunpack.c.l.b16 %v115
    %v118 = vunpack.c.l.b16 %v116
    %v119 = vpack.c.b16 %v118, %v117
    %vm120 = vcmp.ne.s16.totalorder %v119, 0
    %v121 = vsel %vm120, %v108, 0
    %v122 = vsel %vm120, %v103, 0
    %vm123 = vsmask.f32 7424
    %v124 = vrot.slane %v93, 1
    %v125 = vor.u32 %v90, %v124
    %v126 = vrot.slane %v100, 1
    %v127 = vsel %vm123, %v125, %v126
    %v128 = vor.u32 %v97, %v126
    %vm131 = vcmask 1047552
    %vm132 = vmand %vm131, %vm123
    %v133 = vsel %vm132, %v128, 0
    %v134 = vsel %vm84, 1, 0
    %v135 = vsel %vm85, 1, 0
    %vm136 = vcmp.eq.s32.totalorder %v134, 1
    %vm137 = vcmp.eq.s32.totalorder %v135, 1
    %vm138 = vmpackc.low %vm136, %vm136
    %vm139 = vmpackc.low %vm137, %vm137
    %v140 = vsel %vm138, 65537, 0
    %v141 = vsel %vm139, 65537, 0
    %v142 = vunpack.c.l.b16 %v140
    %v143 = vunpack.c.l.b16 %v141
    %v144 = vpack.c.b16 %v143, %v142
    %vm145 = vcmp.ne.s16.totalorder %v144, 0
    %v146 = vsel %vm145, %v127, 0
    %v147 = vsel %vm145, %v133, 0
    %v148 = vld [vmem:[%s2] sm:$0xf]
    %s149 = scalar_lea.vmem %s2, 4
    %v150 = vld [vmem:[%s149] sm:$0xf]
    %vm151 = vcmask 64512
    %v152 = vsel %vm151, %v86, 0
    %v154 = vsel %vm151, %v87, 0
    %vm156 = vcmask 1043456
    %v158 = vsel %vm156, %v150, 0
    %160 = vmatprep.subr.bf16.mxu0 0
    %161 = vmatpush1.bf16.msra.mxu0 0
    %162 = vmatprep.subr.bf16.mxu0 0
    %163 = vmatpush1.bf16.msra.mxu0 0
    %164 = vmatprep.subr.bf16.mxu0 0
    %165 = vmatpush1.bf16.msra.mxu0 0
    %166 = vmatprep.subr.bf16.mxu0 0
    %167 = vmatpush1.bf16.msra.mxu0 0
    %168 = vmatprep.subr.bf16.mxu0 0
    %169 = vmatpush1.bf16.msra.mxu0 0
    %170 = vmatprep.subr.bf16.mxu0 0
    %171 = vmatpush1.bf16.msra.mxu0 0
    %172 = vmatprep.subr.bf16.mxu0 0
    %173 = vmatpush1.bf16.msra.mxu0 0
    %174 = vmatprep.subr.bf16.mxu0 0
    %175 = vmatpush1.bf16.msra.mxu0 %v158
    %176 = vmatprep.subr.bf16.mxu0 0
    %177 = vmatpush2.bf16.msra.mxu0 0
    %178 = vmatprep.subr.bf16.mxu0 0
    %179 = vmatpush2.bf16.msra.mxu0 0
    %180 = vmatprep.subr.bf16.mxu0 0
    %181 = vmatpush2.bf16.msra.mxu0 0
    %182 = vmatprep.subr.bf16.mxu0 0
    %183 = vmatpush2.bf16.msra.mxu0 0
    %184 = vmatprep.subr.bf16.mxu0 0
    %185 = vmatpush2.bf16.msra.mxu0 0
    %186 = vmatprep.subr.bf16.mxu0 0
    %187 = vmatpush2.bf16.msra.mxu0 0
    %188 = vmatprep.subr.bf16.mxu0 0
    %189 = vmatpush2.bf16.msra.mxu0 0
    %190 = vmatprep.subr.bf16.mxu0 0
    %191 = vmatpush2.bf16.msra.mxu0 0
    %192 = vmatprep.mubr.bf16.mxu0 0
    %193 = vmatmul.mubr.bf16.gmra.mxu0 %v152
    %v194 = vpop.f32.mrf.mxu0
    %v195 = vadd.f32 0.0, %v194
    %v196 = vpop.f32.mrf.mxu0
    %v197 = vpop.f32.mrf.mxu0
    %v198 = vadd.f32 0.0, %v197
    %v199 = vpop.f32.mrf.mxu0
    %200 = vmatprep.mubr.bf16.mxu0 0
    %201 = vmatmul.mubr.bf16.gmra.mxu0 %v154
    %v202 = vpop.f32.mrf.mxu0
    %v203 = vadd.f32 0.0, %v202
    %v204 = vpop.f32.mrf.mxu0
    %v205 = vpop.f32.mrf.mxu0
    %v206 = vadd.f32 0.0, %v205
    %v207 = vpop.f32.mrf.mxu0
    %208 = vdwg.mxu0
    %v210 = vsel %vm151, %v121, 0
    %v213 = vsel %vm151, %v122, 0
    %v216 = vsel %vm156, %v148, 0
    %218 = vmatprep.subr.bf16.mxu0 0
    %219 = vmatpush1.bf16.msra.mxu0 0
    %220 = vmatprep.subr.bf16.mxu0 0
    %221 = vmatpush1.bf16.msra.mxu0 0
    %222 = vmatprep.subr.bf16.mxu0 0
    %223 = vmatpush1.bf16.msra.mxu0 0
    %224 = vmatprep.subr.bf16.mxu0 0
    %225 = vmatpush1.bf16.msra.mxu0 0
    %226 = vmatprep.subr.bf16.mxu0 0
    %227 = vmatpush1.bf16.msra.mxu0 0
    %228 = vmatprep.subr.bf16.mxu0 0
    %229 = vmatpush1.bf16.msra.mxu0 0
    %230 = vmatprep.subr.bf16.mxu0 0
    %231 = vmatpush1.bf16.msra.mxu0 0
    %232 = vmatprep.subr.bf16.mxu0 0
    %233 = vmatpush1.bf16.msra.mxu0 %v216
    %234 = vmatprep.subr.bf16.mxu0 0
    %235 = vmatpush2.bf16.msra.mxu0 0
    %236 = vmatprep.subr.bf16.mxu0 0
    %237 = vmatpush2.bf16.msra.mxu0 0
    %238 = vmatprep.subr.bf16.mxu0 0
    %239 = vmatpush2.bf16.msra.mxu0 0
    %240 = vmatprep.subr.bf16.mxu0 0
    %241 = vmatpush2.bf16.msra.mxu0 0
    %242 = vmatprep.subr.bf16.mxu0 0
    %243 = vmatpush2.bf16.msra.mxu0 0
    %244 = vmatprep.subr.bf16.mxu0 0
    %245 = vmatpush2.bf16.msra.mxu0 0
    %246 = vmatprep.subr.bf16.mxu0 0
    %247 = vmatpush2.bf16.msra.mxu0 0
    %248 = vmatprep.subr.bf16.mxu0 0
    %249 = vmatpush2.bf16.msra.mxu0 0
    %250 = vmatprep.mubr.bf16.mxu0 0
    %251 = vmatmul.mubr.bf16.gmra.mxu0 %v210
    %v252 = vpop.f32.mrf.mxu0
    %v253 = vadd.f32 %v195, %v252
    %v254 = vpop.f32.mrf.mxu0
    %v255 = vpop.f32.mrf.mxu0
    %v256 = vadd.f32 %v198, %v255
    %v257 = vpop.f32.mrf.mxu0
    %258 = vmatprep.mubr.bf16.mxu0 0
    %259 = vmatmul.mubr.bf16.gmra.mxu0 %v213
    %v260 = vpop.f32.mrf.mxu0
    %v261 = vadd.f32 %v203, %v260
    %v262 = vpop.f32.mrf.mxu0
    %v263 = vpop.f32.mrf.mxu0
    %v264 = vadd.f32 %v206, %v263
    %v265 = vpop.f32.mrf.mxu0
    %266 = vdwg.mxu0
    %s267 = scalar_lea.vmem %s2, 8
    %v268 = vld [vmem:[%s267] sm:$0xf]
    %v270 = vsel %vm151, %v146, 0
    %v273 = vsel %vm151, %v147, 0
    %v276 = vsel %vm156, %v268, 0
    %278 = vmatprep.subr.bf16.mxu0 0
    %279 = vmatpush1.bf16.msra.mxu0 0
    %280 = vmatprep.subr.bf16.mxu0 0
    %281 = vmatpush1.bf16.msra.mxu0 0
    %282 = vmatprep.subr.bf16.mxu0 0
    %283 = vmatpush1.bf16.msra.mxu0 0
    %284 = vmatprep.subr.bf16.mxu0 0
    %285 = vmatpush1.bf16.msra.mxu0 0
    %286 = vmatprep.subr.bf16.mxu0 0
    %287 = vmatpush1.bf16.msra.mxu0 0
    %288 = vmatprep.subr.bf16.mxu0 0
    %289 = vmatpush1.bf16.msra.mxu0 0
    %290 = vmatprep.subr.bf16.mxu0 0
    %291 = vmatpush1.bf16.msra.mxu0 0
    %292 = vmatprep.subr.bf16.mxu0 0
    %293 = vmatpush1.bf16.msra.mxu0 %v276
    %294 = vmatprep.subr.bf16.mxu0 0
    %295 = vmatpush2.bf16.msra.mxu0 0
    %296 = vmatprep.subr.bf16.mxu0 0
    %297 = vmatpush2.bf16.msra.mxu0 0
    %298 = vmatprep.subr.bf16.mxu0 0
    %299 = vmatpush2.bf16.msra.mxu0 0
    %300 = vmatprep.subr.bf16.mxu0 0
    %301 = vmatpush2.bf16.msra.mxu0 0
    %302 = vmatprep.subr.bf16.mxu0 0
    %303 = vmatpush2.bf16.msra.mxu0 0
    %304 = vmatprep.subr.bf16.mxu0 0
    %305 = vmatpush2.bf16.msra.mxu0 0
    %306 = vmatprep.subr.bf16.mxu0 0
    %307 = vmatpush2.bf16.msra.mxu0 0
    %308 = vmatprep.subr.bf16.mxu0 0
    %309 = vmatpush2.bf16.msra.mxu0 0
    %310 = vmatprep.mubr.bf16.mxu0 0
    %311 = vmatmul.mubr.bf16.gmra.mxu0 %v270
    %v312 = vpop.f32.mrf.mxu0
    %v313 = vadd.f32 0.0, %v312
    %v314 = vpop.f32.mrf.mxu0
    %v315 = vpop.f32.mrf.mxu0
    %v316 = vadd.f32 0.0, %v315
    %v317 = vpop.f32.mrf.mxu0
    %318 = vmatprep.mubr.bf16.mxu0 0
    %319 = vmatmul.mubr.bf16.gmra.mxu0 %v273
    %v320 = vpop.f32.mrf.mxu0
    %v321 = vadd.f32 0.0, %v320
    %v322 = vpop.f32.mrf.mxu0
    %v323 = vpop.f32.mrf.mxu0
    %v324 = vadd.f32 0.0, %v323
    %v325 = vpop.f32.mrf.mxu0
    %326 = vdwg.mxu0
    %v327 = vadd.f32 %v253, %v313
    %v328 = vadd.f32 %v256, %v316
    %v329 = vadd.f32 %v261, %v321
    %v330 = vadd.f32 %v264, %v324
    %v331 = vld [vmem:[%s1] sm:$0x1]
    %v332 = vlaneseq
    %v333 = vshrl.u32 %v332, 7
    %v334 = vsub.s32 0, %v333
    %v335 = vrot.slane %v331, %v334
    %v336 = vadd.f32 %v327, %v335
    %v337 = vadd.f32 %v328, %v335
    %v338 = vadd.f32 %v329, %v335
    %v339 = vadd.f32 %v330, %v335
    %v340 = vmax.f32 %v336, 0.0
    %v341 = vmax.f32 %v337, 0.0
    %v342 = vmax.f32 %v338, 0.0
    %v343 = vmax.f32 %v339, 0.0
    %v344 = vpack.c.bf16 %v341, %v340
    %v345 = vpack.c.bf16 %v343, %v342
    %v347 = vshrl.u32 %v344, 16
    %v349 = vrot.slane %v347, 7
    %v350 = vshll.u32 %v344, 16
    %v352 = vor.u32 %v349, %v350
    %v354 = vshrl.u32 %v345, 16
    %v356 = vrot.slane %v354, 7
    %v357 = vshll.u32 %v345, 16
    %v359 = vor.u32 %v356, %v357
    %v360 = vsel %vm88, %v349, %v359
    %v363 = vsel %vm107, 0, %v352
    %v364 = vsel %vm120, %v363, 0
    %v365 = vsel %vm120, %v360, 0
    %v366 = vrot.slane %v350, 1
    %v367 = vor.u32 %v347, %v366
    %v368 = vrot.slane %v357, 1
    %v369 = vsel %vm123, %v367, %v368
    %v370 = vor.u32 %v354, %v368
    %v373 = vsel %vm132, %v370, 0
    %v374 = vsel %vm145, %v369, 0
    %v375 = vsel %vm145, %v373, 0
    %v376 = vld [vmem:[#allocation2] sm:$0xf]
    %v377 = vld [vmem:[#allocation2 + $0x4] sm:$0xf]
    %v378 = vld [vmem:[#allocation2 + $0x8] sm:$0xf]
    %v379 = vld [vmem:[#allocation2 + $0xc] sm:$0xf]
    %v380 = vld [vmem:[#allocation2 + $0x10] sm:$0xf]
    %v381 = vld [vmem:[#allocation2 + $0x14] sm:$0xf]
    %v382 = vld [vmem:[#allocation2 + $0x18] sm:$0xf]
    %v383 = vld [vmem:[#allocation2 + $0x1c] sm:$0xf]
    %v384 = vld [vmem:[#allocation2 + $0x20] sm:$0xf]
    %v385 = vld [vmem:[#allocation2 + $0x24] sm:$0xf]
    %v386 = vld [vmem:[#allocation2 + $0x28] sm:$0xf]
    %v387 = vld [vmem:[#allocation2 + $0x2c] sm:$0xf]
    %v388 = vld [vmem:[#allocation2 + $0x30] sm:$0xf]
    %v389 = vld [vmem:[#allocation2 + $0x34] sm:$0xf]
    %v390 = vld [vmem:[#allocation2 + $0x38] sm:$0xf]
    %v391 = vld [vmem:[#allocation2 + $0x3c] sm:$0xf]
    %v392 = vld [vmem:[#allocation2 + $0x40] sm:$0xf]
    %v393 = vld [vmem:[#allocation2 + $0x44] sm:$0xf]
    %v394 = vld [vmem:[#allocation2 + $0x48] sm:$0xf]
    %v395 = vld [vmem:[#allocation2 + $0x4c] sm:$0xf]
    %v396 = vld [vmem:[#allocation2 + $0x50] sm:$0xf]
    %v397 = vld [vmem:[#allocation2 + $0x54] sm:$0xf]
    %v398 = vld [vmem:[#allocation2 + $0x58] sm:$0xf]
    %v399 = vld [vmem:[#allocation2 + $0x5c] sm:$0xf]
    %v400 = vld [vmem:[#allocation2 + $0x60] sm:$0xf]
    %v401 = vld [vmem:[#allocation2 + $0x64] sm:$0xf]
    %v402 = vld [vmem:[#allocation2 + $0x68] sm:$0xf]
    %v403 = vld [vmem:[#allocation2 + $0x6c] sm:$0xf]
    %v404 = vld [vmem:[#allocation2 + $0x70] sm:$0xf]
    %v405 = vld [vmem:[#allocation2 + $0x74] sm:$0xf]
    %v406 = vld [vmem:[#allocation2 + $0x78] sm:$0xf]
    %v407 = vld [vmem:[#allocation2 + $0x7c] sm:$0xf]
    %v408 = vld [vmem:[#allocation2 + $0x80] sm:$0xf]
    %v409 = vld [vmem:[#allocation2 + $0x84] sm:$0xf]
    %v410 = vld [vmem:[#allocation2 + $0x88] sm:$0xf]
    %v411 = vld [vmem:[#allocation2 + $0x8c] sm:$0xf]
    %v412 = vld [vmem:[#allocation2 + $0x90] sm:$0xf]
    %v413 = vld [vmem:[#allocation2 + $0x94] sm:$0xf]
    %v414 = vld [vmem:[#allocation2 + $0x98] sm:$0xf]
    %v415 = vld [vmem:[#allocation2 + $0x9c] sm:$0xf]
    %v416 = vld [vmem:[#allocation2 + $0xa0] sm:$0xf]
    %v417 = vld [vmem:[#allocation2 + $0xa4] sm:$0xf]
    %v418 = vld [vmem:[#allocation2 + $0xa8] sm:$0xf]
    %v419 = vld [vmem:[#allocation2 + $0xac] sm:$0xf]
    %v420 = vld [vmem:[#allocation2 + $0xb0] sm:$0xf]
    %v421 = vld [vmem:[#allocation2 + $0xb4] sm:$0xf]
    %v422 = vld [vmem:[#allocation2 + $0xb8] sm:$0xf]
    %v423 = vld [vmem:[#allocation2 + $0xbc] sm:$0xf]
    %v424 = vld [vmem:[%s1 + $0x1] sm:$0x1]
    %v425 = vlaneseq
    %v426 = vshrl.u32 %v425, 7
    %v427 = vsub.s32 0, %v426
    %v428 = vrot.slane %v424, %v427
    %v477 = vunpack.c.l.b16 %v376
    %v478 = vunpack.c.l.b16 %v377
    %v479 = vunpack.c.l.b16 %v378
    %v480 = vunpack.c.l.b16 %v379
    %v481 = vunpack.c.l.b16 %v380
    %v482 = vunpack.c.l.b16 %v381
    %v483 = vunpack.c.l.b16 %v382
    %v484 = vunpack.c.l.b16 %v383
    %v485 = vunpack.c.l.b16 %v384
    %v486 = vunpack.c.l.b16 %v385
    %v487 = vunpack.c.l.b16 %v386
    %v488 = vunpack.c.l.b16 %v387
    %v489 = vunpack.c.l.b16 %v388
    %v490 = vunpack.c.l.b16 %v389
    %v491 = vunpack.c.l.b16 %v390
    %v492 = vunpack.c.l.b16 %v391
    %v493 = vunpack.c.l.b16 %v392
    %v494 = vunpack.c.l.b16 %v393
    %v495 = vunpack.c.l.b16 %v394
    %v496 = vunpack.c.l.b16 %v395
    %v497 = vunpack.c.l.b16 %v396
    %v498 = vunpack.c.l.b16 %v397
    %v499 = vunpack.c.l.b16 %v398
    %v500 = vunpack.c.l.b16 %v399
    %v501 = vunpack.c.l.b16 %v400
    %v502 = vunpack.c.l.b16 %v401
    %v503 = vunpack.c.l.b16 %v402
    %v504 = vunpack.c.l.b16 %v403
    %v505 = vunpack.c.l.b16 %v404
    %v506 = vunpack.c.l.b16 %v405
    %v507 = vunpack.c.l.b16 %v406
    %v508 = vunpack.c.l.b16 %v407
    %v509 = vunpack.c.l.b16 %v408
    %v510 = vunpack.c.l.b16 %v409
    %v511 = vunpack.c.l.b16 %v410
    %v512 = vunpack.c.l.b16 %v411
    %v513 = vunpack.c.l.b16 %v412
    %v514 = vunpack.c.l.b16 %v413
    %v515 = vunpack.c.l.b16 %v414
    %v516 = vunpack.c.l.b16 %v415
    %v517 = vunpack.c.l.b16 %v416
    %v518 = vunpack.c.l.b16 %v417
    %v519 = vunpack.c.l.b16 %v418
    %v520 = vunpack.c.l.b16 %v419
    %v521 = vunpack.c.l.b16 %v420
    %v522 = vunpack.c.l.b16 %v421
    %v523 = vunpack.c.l.b16 %v422
    %v524 = vunpack.c.l.b16 %v423
    %v525 = vpack.c.b16 %v478, %v477
    %v526 = vpack.c.b16 %v480, %v479
    %v527 = vpack.c.b16 %v482, %v481
    %v528 = vpack.c.b16 %v484, %v483
    %v529 = vpack.c.b16 %v486, %v485
    %v530 = vpack.c.b16 %v488, %v487
    %v531 = vpack.c.b16 %v490, %v489
    %v532 = vpack.c.b16 %v492, %v491
    %v533 = vpack.c.b16 %v494, %v493
    %v534 = vpack.c.b16 %v496, %v495
    %v535 = vpack.c.b16 %v498, %v497
    %v536 = vpack.c.b16 %v500, %v499
    %v537 = vpack.c.b16 %v502, %v501
    %v538 = vpack.c.b16 %v504, %v503
    %v539 = vpack.c.b16 %v506, %v505
    %v540 = vpack.c.b16 %v508, %v507
    %v541 = vpack.c.b16 %v510, %v509
    %v542 = vpack.c.b16 %v512, %v511
    %v543 = vpack.c.b16 %v514, %v513
    %v544 = vpack.c.b16 %v516, %v515
    %v545 = vpack.c.b16 %v518, %v517
    %v546 = vpack.c.b16 %v520, %v519
    %v547 = vpack.c.b16 %v522, %v521
    %v548 = vpack.c.b16 %v524, %v523
    %573 = vmatprep.subr.bf16.mxu0 0
    %574 = vmatpush1.bf16.msra.mxu0 %v532
    %575 = vmatprep.subr.bf16.mxu0 0
    %576 = vmatpush1.bf16.msra.mxu0 %v531
    %577 = vmatprep.subr.bf16.mxu0 0
    %578 = vmatpush1.bf16.msra.mxu0 %v530
    %579 = vmatprep.subr.bf16.mxu0 0
    %580 = vmatpush1.bf16.msra.mxu0 %v529
    %581 = vmatprep.subr.bf16.mxu0 0
    %582 = vmatpush1.bf16.msra.mxu0 %v528
    %583 = vmatprep.subr.bf16.mxu0 0
    %584 = vmatpush1.bf16.msra.mxu0 %v527
    %585 = vmatprep.subr.bf16.mxu0 0
    %586 = vmatpush1.bf16.msra.mxu0 %v526
    %587 = vmatprep.subr.bf16.mxu0 0
    %588 = vmatpush1.bf16.msra.mxu0 %v525
    %589 = vmatprep.subr.bf16.mxu0 0
    %590 = vmatpush2.bf16.msra.mxu0 %v540
    %591 = vmatprep.subr.bf16.mxu0 0
    %592 = vmatpush2.bf16.msra.mxu0 %v539
    %593 = vmatprep.subr.bf16.mxu0 0
    %594 = vmatpush2.bf16.msra.mxu0 %v538
    %595 = vmatprep.subr.bf16.mxu0 0
    %596 = vmatpush2.bf16.msra.mxu0 %v537
    %597 = vmatprep.subr.bf16.mxu0 0
    %598 = vmatpush2.bf16.msra.mxu0 %v536
    %599 = vmatprep.subr.bf16.mxu0 0
    %600 = vmatpush2.bf16.msra.mxu0 %v535
    %601 = vmatprep.subr.bf16.mxu0 0
    %602 = vmatpush2.bf16.msra.mxu0 %v534
    %603 = vmatprep.subr.bf16.mxu0 0
    %604 = vmatpush2.bf16.msra.mxu0 %v533
    %605 = vmatprep.mubr.bf16.mxu0 %v344
    %606 = vmatmul.mubr.bf16.gmra.mxu0 %v364
    %v607 = vpop.f32.mrf.mxu0
    %v608 = vadd.f32 %v428, %v607
    %v609 = vpop.f32.mrf.mxu0
    %v610 = vpop.f32.mrf.mxu0
    %v611 = vadd.f32 %v428, %v610
    %v612 = vpop.f32.mrf.mxu0
    %613 = vmatprep.mubr.bf16.mxu0 %v345
    %614 = vmatmul.mubr.bf16.gmra.mxu0 %v365
    %v615 = vpop.f32.mrf.mxu0
    %v616 = vadd.f32 %v428, %v615
    %v617 = vpop.f32.mrf.mxu0
    %v618 = vpop.f32.mrf.mxu0
    %v619 = vadd.f32 %v428, %v618
    %v620 = vpop.f32.mrf.mxu0
    %621 = vdwg.mxu0
    %622 = vmatprep.subr.bf16.mxu0 0
    %623 = vmatpush1.bf16.msra.mxu0 %v548
    %624 = vmatprep.subr.bf16.mxu0 0
    %625 = vmatpush1.bf16.msra.mxu0 %v547
    %626 = vmatprep.subr.bf16.mxu0 0
    %627 = vmatpush1.bf16.msra.mxu0 %v546
    %628 = vmatprep.subr.bf16.mxu0 0
    %629 = vmatpush1.bf16.msra.mxu0 %v545
    %630 = vmatprep.subr.bf16.mxu0 0
    %631 = vmatpush1.bf16.msra.mxu0 %v544
    %632 = vmatprep.subr.bf16.mxu0 0
    %633 = vmatpush1.bf16.msra.mxu0 %v543
    %634 = vmatprep.subr.bf16.mxu0 0
    %635 = vmatpush1.bf16.msra.mxu0 %v542
    %636 = vmatprep.subr.bf16.mxu0 0
    %637 = vmatpush1.bf16.msra.mxu0 %v541
    %638 = vmatprep.subr.bf16.mxu0 0
    %639 = vmatpush2.bf16.msra.mxu0 0
    %640 = vmatprep.subr.bf16.mxu0 0
    %641 = vmatpush2.bf16.msra.mxu0 0
    %642 = vmatprep.subr.bf16.mxu0 0
    %643 = vmatpush2.bf16.msra.mxu0 0
    %644 = vmatprep.subr.bf16.mxu0 0
    %645 = vmatpush2.bf16.msra.mxu0 0
    %646 = vmatprep.subr.bf16.mxu0 0
    %647 = vmatpush2.bf16.msra.mxu0 0
    %648 = vmatprep.subr.bf16.mxu0 0
    %649 = vmatpush2.bf16.msra.mxu0 0
    %650 = vmatprep.subr.bf16.mxu0 0
    %651 = vmatpush2.bf16.msra.mxu0 0
    %652 = vmatprep.subr.bf16.mxu0 0
    %653 = vmatpush2.bf16.msra.mxu0 0
    %654 = vmatprep.mubr.bf16.mxu0 0
    %655 = vmatmul.mubr.bf16.gmra.mxu0 %v374
    %v656 = vpop.f32.mrf.mxu0
    %v657 = vadd.f32 %v608, %v656
    %v658 = vpop.f32.mrf.mxu0
    %v659 = vpop.f32.mrf.mxu0
    %v660 = vadd.f32 %v611, %v659
    %v661 = vpop.f32.mrf.mxu0
    %662 = vmatprep.mubr.bf16.mxu0 0
    %663 = vmatmul.mubr.bf16.gmra.mxu0 %v375
    %v664 = vpop.f32.mrf.mxu0
    %v665 = vadd.f32 %v616, %v664
    %v666 = vpop.f32.mrf.mxu0
    %v667 = vpop.f32.mrf.mxu0
    %v668 = vadd.f32 %v619, %v667
    %v669 = vpop.f32.mrf.mxu0
    %670 = vdwg.mxu0
    %v671 = vld [vmem:[%s4] sm:$0xf]
    %v672 = vld [vmem:[%s1 + $0x2] sm:$0x1]
    %v673 = vlaneseq
    %v674 = vshrl.u32 %v673, 7
    %v675 = vsub.s32 0, %v674
    %v676 = vrot.slane %v672, %v675
    %v678 = vsel %vm156, %v671, 0
    %680 = vmatprep.subr.bf16.mxu0 0
    %681 = vmatpush1.bf16.msra.mxu0 0
    %682 = vmatprep.subr.bf16.mxu0 0
    %683 = vmatpush1.bf16.msra.mxu0 0
    %684 = vmatprep.subr.bf16.mxu0 0
    %685 = vmatpush1.bf16.msra.mxu0 0
    %686 = vmatprep.subr.bf16.mxu0 0
    %687 = vmatpush1.bf16.msra.mxu0 0
    %688 = vmatprep.subr.bf16.mxu0 0
    %689 = vmatpush1.bf16.msra.mxu0 0
    %690 = vmatprep.subr.bf16.mxu0 0
    %691 = vmatpush1.bf16.msra.mxu0 0
    %692 = vmatprep.subr.bf16.mxu0 0
    %693 = vmatpush1.bf16.msra.mxu0 0
    %694 = vmatprep.subr.bf16.mxu0 0
    %695 = vmatpush1.bf16.msra.mxu0 %v678
    %696 = vmatprep.subr.bf16.mxu0 0
    %697 = vmatpush2.bf16.msra.mxu0 0
    %698 = vmatprep.subr.bf16.mxu0 0
    %699 = vmatpush2.bf16.msra.mxu0 0
    %700 = vmatprep.subr.bf16.mxu0 0
    %701 = vmatpush2.bf16.msra.mxu0 0
    %702 = vmatprep.subr.bf16.mxu0 0
    %703 = vmatpush2.bf16.msra.mxu0 0
    %704 = vmatprep.subr.bf16.mxu0 0
    %705 = vmatpush2.bf16.msra.mxu0 0
    %706 = vmatprep.subr.bf16.mxu0 0
    %707 = vmatpush2.bf16.msra.mxu0 0
    %708 = vmatprep.subr.bf16.mxu0 0
    %709 = vmatpush2.bf16.msra.mxu0 0
    %710 = vmatprep.subr.bf16.mxu0 0
    %711 = vmatpush2.bf16.msra.mxu0 0
    %712 = vmatprep.mubr.bf16.mxu0 0
    %713 = vmatmul.mubr.bf16.gmra.mxu0 %v152
    %v714 = vpop.f32.mrf.mxu0
    %v715 = vadd.f32 %v676, %v714
    %v716 = vpop.f32.mrf.mxu0
    %v717 = vpop.f32.mrf.mxu0
    %v718 = vadd.f32 %v676, %v717
    %v719 = vpop.f32.mrf.mxu0
    %720 = vmatprep.mubr.bf16.mxu0 0
    %721 = vmatmul.mubr.bf16.gmra.mxu0 %v154
    %v722 = vpop.f32.mrf.mxu0
    %v723 = vadd.f32 %v676, %v722
    %v724 = vpop.f32.mrf.mxu0
    %v725 = vpop.f32.mrf.mxu0
    %v726 = vadd.f32 %v676, %v725
    %v727 = vpop.f32.mrf.mxu0
    %728 = vdwg.mxu0
    %v729 = vadd.f32 %v657, %v715
    %v730 = vadd.f32 %v660, %v718
    %v731 = vadd.f32 %v665, %v723
    %v732 = vadd.f32 %v668, %v726
    %v733 = vmax.f32 %v729, 0.0
    %v734 = vmax.f32 %v730, 0.0
    %v735 = vmax.f32 %v731, 0.0
    %v736 = vmax.f32 %v732, 0.0
    %v737 = vpack.c.bf16 %v734, %v733
    %v738 = vpack.c.bf16 %v736, %v735
    %v740 = vshrl.u32 %v737, 16
    %v742 = vrot.slane %v740, 7
    %v743 = vshll.u32 %v737, 16
    %v745 = vor.u32 %v742, %v743
    %v747 = vshrl.u32 %v738, 16
    %v749 = vrot.slane %v747, 7
    %v750 = vshll.u32 %v738, 16
    %v752 = vor.u32 %v749, %v750
    %v753 = vsel %vm88, %v742, %v752
    %v756 = vsel %vm107, 0, %v745
    %v757 = vsel %vm120, %v756, 0
    %v758 = vsel %vm120, %v753, 0
    %v759 = vrot.slane %v743, 1
    %v760 = vor.u32 %v740, %v759
    %v761 = vrot.slane %v750, 1
    %v762 = vsel %vm123, %v760, %v761
    %v763 = vor.u32 %v747, %v761
    %v766 = vsel %vm132, %v763, 0
    %v767 = vsel %vm145, %v762, 0
    %v768 = vsel %vm145, %v766, 0
    %v769 = vld [vmem:[#allocation5] sm:$0xf]
    %v770 = vld [vmem:[#allocation5 + $0x4] sm:$0xf]
    %v771 = vld [vmem:[#allocation5 + $0x8] sm:$0xf]
    %v772 = vld [vmem:[#allocation5 + $0xc] sm:$0xf]
    %v773 = vld [vmem:[#allocation5 + $0x10] sm:$0xf]
    %v774 = vld [vmem:[#allocation5 + $0x14] sm:$0xf]
    %v775 = vld [vmem:[#allocation5 + $0x18] sm:$0xf]
    %v776 = vld [vmem:[#allocation5 + $0x1c] sm:$0xf]
    %v777 = vld [vmem:[#allocation5 + $0x20] sm:$0xf]
    %v778 = vld [vmem:[#allocation5 + $0x24] sm:$0xf]
    %v779 = vld [vmem:[#allocation5 + $0x28] sm:$0xf]
    %v780 = vld [vmem:[#allocation5 + $0x2c] sm:$0xf]
    %v781 = vld [vmem:[#allocation5 + $0x30] sm:$0xf]
    %v782 = vld [vmem:[#allocation5 + $0x34] sm:$0xf]
    %v783 = vld [vmem:[#allocation5 + $0x38] sm:$0xf]
    %v784 = vld [vmem:[#allocation5 + $0x3c] sm:$0xf]
    %v785 = vld [vmem:[#allocation5 + $0x40] sm:$0xf]
    %v786 = vld [vmem:[#allocation5 + $0x44] sm:$0xf]
    %v787 = vld [vmem:[#allocation5 + $0x48] sm:$0xf]
    %v788 = vld [vmem:[#allocation5 + $0x4c] sm:$0xf]
    %v789 = vld [vmem:[#allocation5 + $0x50] sm:$0xf]
    %v790 = vld [vmem:[#allocation5 + $0x54] sm:$0xf]
    %v791 = vld [vmem:[#allocation5 + $0x58] sm:$0xf]
    %v792 = vld [vmem:[#allocation5 + $0x5c] sm:$0xf]
    %v793 = vld [vmem:[#allocation5 + $0x60] sm:$0xf]
    %v794 = vld [vmem:[#allocation5 + $0x64] sm:$0xf]
    %v795 = vld [vmem:[#allocation5 + $0x68] sm:$0xf]
    %v796 = vld [vmem:[#allocation5 + $0x6c] sm:$0xf]
    %v797 = vld [vmem:[#allocation5 + $0x70] sm:$0xf]
    %v798 = vld [vmem:[#allocation5 + $0x74] sm:$0xf]
    %v799 = vld [vmem:[#allocation5 + $0x78] sm:$0xf]
    %v800 = vld [vmem:[#allocation5 + $0x7c] sm:$0xf]
    %v801 = vld [vmem:[#allocation5 + $0x80] sm:$0xf]
    %v802 = vld [vmem:[#allocation5 + $0x84] sm:$0xf]
    %v803 = vld [vmem:[#allocation5 + $0x88] sm:$0xf]
    %v804 = vld [vmem:[#allocation5 + $0x8c] sm:$0xf]
    %v805 = vld [vmem:[#allocation5 + $0x90] sm:$0xf]
    %v806 = vld [vmem:[#allocation5 + $0x94] sm:$0xf]
    %v807 = vld [vmem:[#allocation5 + $0x98] sm:$0xf]
    %v808 = vld [vmem:[#allocation5 + $0x9c] sm:$0xf]
    %v809 = vld [vmem:[#allocation5 + $0xa0] sm:$0xf]
    %v810 = vld [vmem:[#allocation5 + $0xa4] sm:$0xf]
    %v811 = vld [vmem:[#allocation5 + $0xa8] sm:$0xf]
    %v812 = vld [vmem:[#allocation5 + $0xac] sm:$0xf]
    %v813 = vld [vmem:[#allocation5 + $0xb0] sm:$0xf]
    %v814 = vld [vmem:[#allocation5 + $0xb4] sm:$0xf]
    %v815 = vld [vmem:[#allocation5 + $0xb8] sm:$0xf]
    %v816 = vld [vmem:[#allocation5 + $0xbc] sm:$0xf]
    %v817 = vld [vmem:[%s1 + $0x3] sm:$0x1]
    %v818 = vlaneseq
    %v819 = vshrl.u32 %v818, 7
    %v820 = vsub.s32 0, %v819
    %v821 = vrot.slane %v817, %v820
    %v870 = vunpack.c.l.b16 %v769
    %v871 = vunpack.c.l.b16 %v770
    %v872 = vunpack.c.l.b16 %v771
    %v873 = vunpack.c.l.b16 %v772
    %v874 = vunpack.c.l.b16 %v773
    %v875 = vunpack.c.l.b16 %v774
    %v876 = vunpack.c.l.b16 %v775
    %v877 = vunpack.c.l.b16 %v776
    %v878 = vunpack.c.l.b16 %v777
    %v879 = vunpack.c.l.b16 %v778
    %v880 = vunpack.c.l.b16 %v779
    %v881 = vunpack.c.l.b16 %v780
    %v882 = vunpack.c.l.b16 %v781
    %v883 = vunpack.c.l.b16 %v782
    %v884 = vunpack.c.l.b16 %v783
    %v885 = vunpack.c.l.b16 %v784
    %v886 = vunpack.c.l.b16 %v785
    %v887 = vunpack.c.l.b16 %v786
    %v888 = vunpack.c.l.b16 %v787
    %v889 = vunpack.c.l.b16 %v788
    %v890 = vunpack.c.l.b16 %v789
    %v891 = vunpack.c.l.b16 %v790
    %v892 = vunpack.c.l.b16 %v791
    %v893 = vunpack.c.l.b16 %v792
    %v894 = vunpack.c.l.b16 %v793
    %v895 = vunpack.c.l.b16 %v794
    %v896 = vunpack.c.l.b16 %v795
    %v897 = vunpack.c.l.b16 %v796
    %v898 = vunpack.c.l.b16 %v797
    %v899 = vunpack.c.l.b16 %v798
    %v900 = vunpack.c.l.b16 %v799
    %v901 = vunpack.c.l.b16 %v800
    %v902 = vunpack.c.l.b16 %v801
    %v903 = vunpack.c.l.b16 %v802
    %v904 = vunpack.c.l.b16 %v803
    %v905 = vunpack.c.l.b16 %v804
    %v906 = vunpack.c.l.b16 %v805
    %v907 = vunpack.c.l.b16 %v806
    %v908 = vunpack.c.l.b16 %v807
    %v909 = vunpack.c.l.b16 %v808
    %v910 = vunpack.c.l.b16 %v809
    %v911 = vunpack.c.l.b16 %v810
    %v912 = vunpack.c.l.b16 %v811
    %v913 = vunpack.c.l.b16 %v812
    %v914 = vunpack.c.l.b16 %v813
    %v915 = vunpack.c.l.b16 %v814
    %v916 = vunpack.c.l.b16 %v815
    %v917 = vunpack.c.l.b16 %v816
    %v918 = vpack.c.b16 %v871, %v870
    %v919 = vpack.c.b16 %v873, %v872
    %v920 = vpack.c.b16 %v875, %v874
    %v921 = vpack.c.b16 %v877, %v876
    %v922 = vpack.c.b16 %v879, %v878
    %v923 = vpack.c.b16 %v881, %v880
    %v924 = vpack.c.b16 %v883, %v882
    %v925 = vpack.c.b16 %v885, %v884
    %v926 = vpack.c.b16 %v887, %v886
    %v927 = vpack.c.b16 %v889, %v888
    %v928 = vpack.c.b16 %v891, %v890
    %v929 = vpack.c.b16 %v893, %v892
    %v930 = vpack.c.b16 %v895, %v894
    %v931 = vpack.c.b16 %v897, %v896
    %v932 = vpack.c.b16 %v899, %v898
    %v933 = vpack.c.b16 %v901, %v900
    %v934 = vpack.c.b16 %v903, %v902
    %v935 = vpack.c.b16 %v905, %v904
    %v936 = vpack.c.b16 %v907, %v906
    %v937 = vpack.c.b16 %v909, %v908
    %v938 = vpack.c.b16 %v911, %v910
    %v939 = vpack.c.b16 %v913, %v912
    %v940 = vpack.c.b16 %v915, %v914
    %v941 = vpack.c.b16 %v917, %v916
    %966 = vmatprep.subr.bf16.mxu0 0
    %967 = vmatpush1.bf16.msra.mxu0 %v925
    %968 = vmatprep.subr.bf16.mxu0 0
    %969 = vmatpush1.bf16.msra.mxu0 %v924
    %970 = vmatprep.subr.bf16.mxu0 0
    %971 = vmatpush1.bf16.msra.mxu0 %v923
    %972 = vmatprep.subr.bf16.mxu0 0
    %973 = vmatpush1.bf16.msra.mxu0 %v922
    %974 = vmatprep.subr.bf16.mxu0 0
    %975 = vmatpush1.bf16.msra.mxu0 %v921
    %976 = vmatprep.subr.bf16.mxu0 0
    %977 = vmatpush1.bf16.msra.mxu0 %v920
    %978 = vmatprep.subr.bf16.mxu0 0
    %979 = vmatpush1.bf16.msra.mxu0 %v919
    %980 = vmatprep.subr.bf16.mxu0 0
    %981 = vmatpush1.bf16.msra.mxu0 %v918
    %982 = vmatprep.subr.bf16.mxu0 0
    %983 = vmatpush2.bf16.msra.mxu0 %v933
    %984 = vmatprep.subr.bf16.mxu0 0
    %985 = vmatpush2.bf16.msra.mxu0 %v932
    %986 = vmatprep.subr.bf16.mxu0 0
    %987 = vmatpush2.bf16.msra.mxu0 %v931
    %988 = vmatprep.subr.bf16.mxu0 0
    %989 = vmatpush2.bf16.msra.mxu0 %v930
    %990 = vmatprep.subr.bf16.mxu0 0
    %991 = vmatpush2.bf16.msra.mxu0 %v929
    %992 = vmatprep.subr.bf16.mxu0 0
    %993 = vmatpush2.bf16.msra.mxu0 %v928
    %994 = vmatprep.subr.bf16.mxu0 0
    %995 = vmatpush2.bf16.msra.mxu0 %v927
    %996 = vmatprep.subr.bf16.mxu0 0
    %997 = vmatpush2.bf16.msra.mxu0 %v926
    %998 = vmatprep.mubr.bf16.mxu0 %v737
    %999 = vmatmul.mubr.bf16.gmra.mxu0 %v757
    %v1000 = vpop.f32.mrf.mxu0
    %v1001 = vadd.f32 %v821, %v1000
    %v1002 = vpop.f32.mrf.mxu0
    %v1003 = vpop.f32.mrf.mxu0
    %v1004 = vadd.f32 %v821, %v1003
    %v1005 = vpop.f32.mrf.mxu0
    %1006 = vmatprep.mubr.bf16.mxu0 %v738
    %1007 = vmatmul.mubr.bf16.gmra.mxu0 %v758
    %v1008 = vpop.f32.mrf.mxu0
    %v1009 = vadd.f32 %v821, %v1008
    %v1010 = vpop.f32.mrf.mxu0
    %v1011 = vpop.f32.mrf.mxu0
    %v1012 = vadd.f32 %v821, %v1011
    %v1013 = vpop.f32.mrf.mxu0
    %1014 = vdwg.mxu0
    %1015 = vmatprep.subr.bf16.mxu0 0
    %1016 = vmatpush1.bf16.msra.mxu0 %v941
    %1017 = vmatprep.subr.bf16.mxu0 0
    %1018 = vmatpush1.bf16.msra.mxu0 %v940
    %1019 = vmatprep.subr.bf16.mxu0 0
    %1020 = vmatpush1.bf16.msra.mxu0 %v939
    %1021 = vmatprep.subr.bf16.mxu0 0
    %1022 = vmatpush1.bf16.msra.mxu0 %v938
    %1023 = vmatprep.subr.bf16.mxu0 0
    %1024 = vmatpush1.bf16.msra.mxu0 %v937
    %1025 = vmatprep.subr.bf16.mxu0 0
    %1026 = vmatpush1.bf16.msra.mxu0 %v936
    %1027 = vmatprep.subr.bf16.mxu0 0
    %1028 = vmatpush1.bf16.msra.mxu0 %v935
    %1029 = vmatprep.subr.bf16.mxu0 0
    %1030 = vmatpush1.bf16.msra.mxu0 %v934
    %1031 = vmatprep.subr.bf16.mxu0 0
    %1032 = vmatpush2.bf16.msra.mxu0 0
    %1033 = vmatprep.subr.bf16.mxu0 0
    %1034 = vmatpush2.bf16.msra.mxu0 0
    %1035 = vmatprep.subr.bf16.mxu0 0
    %1036 = vmatpush2.bf16.msra.mxu0 0
    %1037 = vmatprep.subr.bf16.mxu0 0
    %1038 = vmatpush2.bf16.msra.mxu0 0
    %1039 = vmatprep.subr.bf16.mxu0 0
    %1040 = vmatpush2.bf16.msra.mxu0 0
    %1041 = vmatprep.subr.bf16.mxu0 0
    %1042 = vmatpush2.bf16.msra.mxu0 0
    %1043 = vmatprep.subr.bf16.mxu0 0
    %1044 = vmatpush2.bf16.msra.mxu0 0
    %1045 = vmatprep.subr.bf16.mxu0 0
    %1046 = vmatpush2.bf16.msra.mxu0 0
    %1047 = vmatprep.mubr.bf16.mxu0 0
    %1048 = vmatmul.mubr.bf16.gmra.mxu0 %v767
    %v1049 = vpop.f32.mrf.mxu0
    %v1050 = vadd.f32 %v1001, %v1049
    %v1051 = vpop.f32.mrf.mxu0
    %v1052 = vpop.f32.mrf.mxu0
    %v1053 = vadd.f32 %v1004, %v1052
    %v1054 = vpop.f32.mrf.mxu0
    %1055 = vmatprep.mubr.bf16.mxu0 0
    %1056 = vmatmul.mubr.bf16.gmra.mxu0 %v768
    %v1057 = vpop.f32.mrf.mxu0
    %v1058 = vadd.f32 %v1009, %v1057
    %v1059 = vpop.f32.mrf.mxu0
    %v1060 = vpop.f32.mrf.mxu0
    %v1061 = vadd.f32 %v1012, %v1060
    %v1062 = vpop.f32.mrf.mxu0
    %1063 = vdwg.mxu0
    %v1064 = vmax.f32 %v1050, 0.0
    %v1065 = vmax.f32 %v1053, 0.0
    %v1066 = vmax.f32 %v1058, 0.0
    %v1067 = vmax.f32 %v1061, 0.0
    %v1068 = vpack.c.bf16 %v1065, %v1064
    %v1069 = vpack.c.bf16 %v1067, %v1066
    %v1071 = vshrl.u32 %v1068, 16
    %v1073 = vrot.slane %v1071, 7
    %v1074 = vshll.u32 %v1068, 16
    %v1076 = vor.u32 %v1073, %v1074
    %v1078 = vshrl.u32 %v1069, 16
    %v1080 = vrot.slane %v1078, 7
    %v1081 = vshll.u32 %v1069, 16
    %v1083 = vor.u32 %v1080, %v1081
    %v1084 = vsel %vm88, %v1073, %v1083
    %v1087 = vsel %vm107, 0, %v1076
    %v1088 = vsel %vm120, %v1087, 0
    %v1089 = vsel %vm120, %v1084, 0
    %v1090 = vrot.slane %v1074, 1
    %v1091 = vor.u32 %v1071, %v1090
    %v1092 = vrot.slane %v1081, 1
    %v1093 = vsel %vm123, %v1091, %v1092
    %v1094 = vor.u32 %v1078, %v1092
    %v1097 = vsel %vm132, %v1094, 0
    %v1098 = vsel %vm145, %v1093, 0
    %v1099 = vsel %vm145, %v1097, 0
    %v1100 = vld [vmem:[#allocation7] sm:$0xf]
    %v1101 = vld [vmem:[#allocation7 + $0x4] sm:$0xf]
    %v1102 = vld [vmem:[#allocation7 + $0x8] sm:$0xf]
    %v1103 = vld [vmem:[#allocation7 + $0xc] sm:$0xf]
    %v1104 = vld [vmem:[#allocation7 + $0x10] sm:$0xf]
    %v1105 = vld [vmem:[#allocation7 + $0x14] sm:$0xf]
    %v1106 = vld [vmem:[#allocation7 + $0x18] sm:$0xf]
    %v1107 = vld [vmem:[#allocation7 + $0x1c] sm:$0xf]
    %v1108 = vld [vmem:[#allocation7 + $0x20] sm:$0xf]
    %v1109 = vld [vmem:[#allocation7 + $0x24] sm:$0xf]
    %v1110 = vld [vmem:[#allocation7 + $0x28] sm:$0xf]
    %v1111 = vld [vmem:[#allocation7 + $0x2c] sm:$0xf]
    %v1112 = vld [vmem:[#allocation7 + $0x30] sm:$0xf]
    %v1113 = vld [vmem:[#allocation7 + $0x34] sm:$0xf]
    %v1114 = vld [vmem:[#allocation7 + $0x38] sm:$0xf]
    %v1115 = vld [vmem:[#allocation7 + $0x3c] sm:$0xf]
    %v1116 = vld [vmem:[#allocation7 + $0x40] sm:$0xf]
    %v1117 = vld [vmem:[#allocation7 + $0x44] sm:$0xf]
    %v1118 = vld [vmem:[#allocation7 + $0x48] sm:$0xf]
    %v1119 = vld [vmem:[#allocation7 + $0x4c] sm:$0xf]
    %v1120 = vld [vmem:[#allocation7 + $0x50] sm:$0xf]
    %v1121 = vld [vmem:[#allocation7 + $0x54] sm:$0xf]
    %v1122 = vld [vmem:[#allocation7 + $0x58] sm:$0xf]
    %v1123 = vld [vmem:[#allocation7 + $0x5c] sm:$0xf]
    %v1124 = vld [vmem:[#allocation7 + $0x60] sm:$0xf]
    %v1125 = vld [vmem:[#allocation7 + $0x64] sm:$0xf]
    %v1126 = vld [vmem:[#allocation7 + $0x68] sm:$0xf]
    %v1127 = vld [vmem:[#allocation7 + $0x6c] sm:$0xf]
    %v1128 = vld [vmem:[#allocation7 + $0x70] sm:$0xf]
    %v1129 = vld [vmem:[#allocation7 + $0x74] sm:$0xf]
    %v1130 = vld [vmem:[#allocation7 + $0x78] sm:$0xf]
    %v1131 = vld [vmem:[#allocation7 + $0x7c] sm:$0xf]
    %v1132 = vld [vmem:[#allocation7 + $0x80] sm:$0xf]
    %v1133 = vld [vmem:[#allocation7 + $0x84] sm:$0xf]
    %v1134 = vld [vmem:[#allocation7 + $0x88] sm:$0xf]
    %v1135 = vld [vmem:[#allocation7 + $0x8c] sm:$0xf]
    %v1136 = vld [vmem:[#allocation7 + $0x90] sm:$0xf]
    %v1137 = vld [vmem:[#allocation7 + $0x94] sm:$0xf]
    %v1138 = vld [vmem:[#allocation7 + $0x98] sm:$0xf]
    %v1139 = vld [vmem:[#allocation7 + $0x9c] sm:$0xf]
    %v1140 = vld [vmem:[#allocation7 + $0xa0] sm:$0xf]
    %v1141 = vld [vmem:[#allocation7 + $0xa4] sm:$0xf]
    %v1142 = vld [vmem:[#allocation7 + $0xa8] sm:$0xf]
    %v1143 = vld [vmem:[#allocation7 + $0xac] sm:$0xf]
    %v1144 = vld [vmem:[#allocation7 + $0xb0] sm:$0xf]
    %v1145 = vld [vmem:[#allocation7 + $0xb4] sm:$0xf]
    %v1146 = vld [vmem:[#allocation7 + $0xb8] sm:$0xf]
    %v1147 = vld [vmem:[#allocation7 + $0xbc] sm:$0xf]
    %v1148 = vld [vmem:[%s1 + $0x4] sm:$0x1]
    %v1149 = vlaneseq
    %v1150 = vshrl.u32 %v1149, 7
    %v1151 = vsub.s32 0, %v1150
    %v1152 = vrot.slane %v1148, %v1151
    %v1201 = vunpack.c.l.b16 %v1100
    %v1202 = vunpack.c.l.b16 %v1101
    %v1203 = vunpack.c.l.b16 %v1102
    %v1204 = vunpack.c.l.b16 %v1103
    %v1205 = vunpack.c.l.b16 %v1104
    %v1206 = vunpack.c.l.b16 %v1105
    %v1207 = vunpack.c.l.b16 %v1106
    %v1208 = vunpack.c.l.b16 %v1107
    %v1209 = vunpack.c.l.b16 %v1108
    %v1210 = vunpack.c.l.b16 %v1109
    %v1211 = vunpack.c.l.b16 %v1110
    %v1212 = vunpack.c.l.b16 %v1111
    %v1213 = vunpack.c.l.b16 %v1112
    %v1214 = vunpack.c.l.b16 %v1113
    %v1215 = vunpack.c.l.b16 %v1114
    %v1216 = vunpack.c.l.b16 %v1115
    %v1217 = vunpack.c.l.b16 %v1116
    %v1218 = vunpack.c.l.b16 %v1117
    %v1219 = vunpack.c.l.b16 %v1118
    %v1220 = vunpack.c.l.b16 %v1119
    %v1221 = vunpack.c.l.b16 %v1120
    %v1222 = vunpack.c.l.b16 %v1121
    %v1223 = vunpack.c.l.b16 %v1122
    %v1224 = vunpack.c.l.b16 %v1123
    %v1225 = vunpack.c.l.b16 %v1124
    %v1226 = vunpack.c.l.b16 %v1125
    %v1227 = vunpack.c.l.b16 %v1126
    %v1228 = vunpack.c.l.b16 %v1127
    %v1229 = vunpack.c.l.b16 %v1128
    %v1230 = vunpack.c.l.b16 %v1129
    %v1231 = vunpack.c.l.b16 %v1130
    %v1232 = vunpack.c.l.b16 %v1131
    %v1233 = vunpack.c.l.b16 %v1132
    %v1234 = vunpack.c.l.b16 %v1133
    %v1235 = vunpack.c.l.b16 %v1134
    %v1236 = vunpack.c.l.b16 %v1135
    %v1237 = vunpack.c.l.b16 %v1136
    %v1238 = vunpack.c.l.b16 %v1137
    %v1239 = vunpack.c.l.b16 %v1138
    %v1240 = vunpack.c.l.b16 %v1139
    %v1241 = vunpack.c.l.b16 %v1140
    %v1242 = vunpack.c.l.b16 %v1141
    %v1243 = vunpack.c.l.b16 %v1142
    %v1244 = vunpack.c.l.b16 %v1143
    %v1245 = vunpack.c.l.b16 %v1144
    %v1246 = vunpack.c.l.b16 %v1145
    %v1247 = vunpack.c.l.b16 %v1146
    %v1248 = vunpack.c.l.b16 %v1147
    %v1249 = vpack.c.b16 %v1202, %v1201
    %v1250 = vpack.c.b16 %v1204, %v1203
    %v1251 = vpack.c.b16 %v1206, %v1205
    %v1252 = vpack.c.b16 %v1208, %v1207
    %v1253 = vpack.c.b16 %v1210, %v1209
    %v1254 = vpack.c.b16 %v1212, %v1211
    %v1255 = vpack.c.b16 %v1214, %v1213
    %v1256 = vpack.c.b16 %v1216, %v1215
    %v1257 = vpack.c.b16 %v1218, %v1217
    %v1258 = vpack.c.b16 %v1220, %v1219
    %v1259 = vpack.c.b16 %v1222, %v1221
    %v1260 = vpack.c.b16 %v1224, %v1223
    %v1261 = vpack.c.b16 %v1226, %v1225
    %v1262 = vpack.c.b16 %v1228, %v1227
    %v1263 = vpack.c.b16 %v1230, %v1229
    %v1264 = vpack.c.b16 %v1232, %v1231
    %v1265 = vpack.c.b16 %v1234, %v1233
    %v1266 = vpack.c.b16 %v1236, %v1235
    %v1267 = vpack.c.b16 %v1238, %v1237
    %v1268 = vpack.c.b16 %v1240, %v1239
    %v1269 = vpack.c.b16 %v1242, %v1241
    %v1270 = vpack.c.b16 %v1244, %v1243
    %v1271 = vpack.c.b16 %v1246, %v1245
    %v1272 = vpack.c.b16 %v1248, %v1247
    %1297 = vmatprep.subr.bf16.mxu0 0
    %1298 = vmatpush1.bf16.msra.mxu0 %v1256
    %1299 = vmatprep.subr.bf16.mxu0 0
    %1300 = vmatpush1.bf16.msra.mxu0 %v1255
    %1301 = vmatprep.subr.bf16.mxu0 0
    %1302 = vmatpush1.bf16.msra.mxu0 %v1254
    %1303 = vmatprep.subr.bf16.mxu0 0
    %1304 = vmatpush1.bf16.msra.mxu0 %v1253
    %1305 = vmatprep.subr.bf16.mxu0 0
    %1306 = vmatpush1.bf16.msra.mxu0 %v1252
    %1307 = vmatprep.subr.bf16.mxu0 0
    %1308 = vmatpush1.bf16.msra.mxu0 %v1251
    %1309 = vmatprep.subr.bf16.mxu0 0
    %1310 = vmatpush1.bf16.msra.mxu0 %v1250
    %1311 = vmatprep.subr.bf16.mxu0 0
    %1312 = vmatpush1.bf16.msra.mxu0 %v1249
    %1313 = vmatprep.subr.bf16.mxu0 0
    %1314 = vmatpush2.bf16.msra.mxu0 %v1264
    %1315 = vmatprep.subr.bf16.mxu0 0
    %1316 = vmatpush2.bf16.msra.mxu0 %v1263
    %1317 = vmatprep.subr.bf16.mxu0 0
    %1318 = vmatpush2.bf16.msra.mxu0 %v1262
    %1319 = vmatprep.subr.bf16.mxu0 0
    %1320 = vmatpush2.bf16.msra.mxu0 %v1261
    %1321 = vmatprep.subr.bf16.mxu0 0
    %1322 = vmatpush2.bf16.msra.mxu0 %v1260
    %1323 = vmatprep.subr.bf16.mxu0 0
    %1324 = vmatpush2.bf16.msra.mxu0 %v1259
    %1325 = vmatprep.subr.bf16.mxu0 0
    %1326 = vmatpush2.bf16.msra.mxu0 %v1258
    %1327 = vmatprep.subr.bf16.mxu0 0
    %1328 = vmatpush2.bf16.msra.mxu0 %v1257
    %1329 = vmatprep.mubr.bf16.mxu0 %v1068
    %1330 = vmatmul.mubr.bf16.gmra.mxu0 %v1088
    %v1331 = vpop.f32.mrf.mxu0
    %v1332 = vadd.f32 %v1152, %v1331
    %v1333 = vpop.f32.mrf.mxu0
    %v1334 = vpop.f32.mrf.mxu0
    %v1335 = vadd.f32 %v1152, %v1334
    %v1336 = vpop.f32.mrf.mxu0
    %1337 = vmatprep.mubr.bf16.mxu0 %v1069
    %1338 = vmatmul.mubr.bf16.gmra.mxu0 %v1089
    %v1339 = vpop.f32.mrf.mxu0
    %v1340 = vadd.f32 %v1152, %v1339
    %v1341 = vpop.f32.mrf.mxu0
    %v1342 = vpop.f32.mrf.mxu0
    %v1343 = vadd.f32 %v1152, %v1342
    %v1344 = vpop.f32.mrf.mxu0
    %1345 = vdwg.mxu0
    %1346 = vmatprep.subr.bf16.mxu0 0
    %1347 = vmatpush1.bf16.msra.mxu0 %v1272
    %1348 = vmatprep.subr.bf16.mxu0 0
    %1349 = vmatpush1.bf16.msra.mxu0 %v1271
    %1350 = vmatprep.subr.bf16.mxu0 0
    %1351 = vmatpush1.bf16.msra.mxu0 %v1270
    %1352 = vmatprep.subr.bf16.mxu0 0
    %1353 = vmatpush1.bf16.msra.mxu0 %v1269
    %1354 = vmatprep.subr.bf16.mxu0 0
    %1355 = vmatpush1.bf16.msra.mxu0 %v1268
    %1356 = vmatprep.subr.bf16.mxu0 0
    %1357 = vmatpush1.bf16.msra.mxu0 %v1267
    %1358 = vmatprep.subr.bf16.mxu0 0
    %1359 = vmatpush1.bf16.msra.mxu0 %v1266
    %1360 = vmatprep.subr.bf16.mxu0 0
    %1361 = vmatpush1.bf16.msra.mxu0 %v1265
    %1362 = vmatprep.subr.bf16.mxu0 0
    %1363 = vmatpush2.bf16.msra.mxu0 0
    %1364 = vmatprep.subr.bf16.mxu0 0
    %1365 = vmatpush2.bf16.msra.mxu0 0
    %1366 = vmatprep.subr.bf16.mxu0 0
    %1367 = vmatpush2.bf16.msra.mxu0 0
    %1368 = vmatprep.subr.bf16.mxu0 0
    %1369 = vmatpush2.bf16.msra.mxu0 0
    %1370 = vmatprep.subr.bf16.mxu0 0
    %1371 = vmatpush2.bf16.msra.mxu0 0
    %1372 = vmatprep.subr.bf16.mxu0 0
    %1373 = vmatpush2.bf16.msra.mxu0 0
    %1374 = vmatprep.subr.bf16.mxu0 0
    %1375 = vmatpush2.bf16.msra.mxu0 0
    %1376 = vmatprep.subr.bf16.mxu0 0
    %1377 = vmatpush2.bf16.msra.mxu0 0
    %1378 = vmatprep.mubr.bf16.mxu0 0
    %1379 = vmatmul.mubr.bf16.gmra.mxu0 %v1098
    %v1380 = vpop.f32.mrf.mxu0
    %v1381 = vadd.f32 %v1332, %v1380
    %v1382 = vpop.f32.mrf.mxu0
    %v1383 = vpop.f32.mrf.mxu0
    %v1384 = vadd.f32 %v1335, %v1383
    %v1385 = vpop.f32.mrf.mxu0
    %1386 = vmatprep.mubr.bf16.mxu0 0
    %1387 = vmatmul.mubr.bf16.gmra.mxu0 %v1099
    %v1388 = vpop.f32.mrf.mxu0
    %v1389 = vadd.f32 %v1340, %v1388
    %v1390 = vpop.f32.mrf.mxu0
    %v1391 = vpop.f32.mrf.mxu0
    %v1392 = vadd.f32 %v1343, %v1391
    %v1393 = vpop.f32.mrf.mxu0
    %1394 = vdwg.mxu0
    %v1395 = vadd.f32 %v1381, %v733
    %v1396 = vadd.f32 %v1384, %v734
    %v1397 = vadd.f32 %v1389, %v735
    %v1398 = vadd.f32 %v1392, %v736
    %v1399 = vmax.f32 %v1395, 0.0
    %v1400 = vmax.f32 %v1396, 0.0
    %v1401 = vmax.f32 %v1397, 0.0
    %v1402 = vmax.f32 %v1398, 0.0
    %vm1403 = vcmask 261120
    %1404 = vst.msk [vmem:[#allocation8] sm:$0xff] %vm1403, %v1399
    %1405 = vst.msk [vmem:[#allocation8 + $0x8] sm:$0xff] %vm1403, %v1400
    %1406 = vst.msk [vmem:[#allocation8 + $0x10] sm:$0xff] %vm1403, %v1401
    %1407 = vst.msk [vmem:[#allocation8 + $0x18] sm:$0xff] %vm1403, %v1402
    // Predicated region
    $region42: #{tpu_custom_call.1} parent=1 // pred_check
      _
    $region43: #{tpu_custom_call.1} parent=1 // pred_check_branch
      %1409 = sbr.rel (0) target = $region45
    $region44: #{tpu_custom_call.1} parent=1 // pred_region
      %s1411 = ssub.s32 512, 512
      %1412 = vsyncadd [#allocation4], %s1411
      %s1413 = sshll.u32 [#allocation8], 4
      %s1414 = int_to_ptr.vmem [resolvable:$true] %s1413
      %1419 = dma.vmem_to_hbm [thread:$0]  %s1414, 512, %s7, [#allocation4], 128, 128, 8
    $region45: #{tpu_custom_call.1} parent=1 // pred_fallthru
      _
    // Predicated region
    $region46: #{tpu_custom_call.1} parent=1 // pred_check
      _
    $region47: #{tpu_custom_call.1} parent=1 // pred_check_branch
      %1421 = sbr.rel (0) target = $region49
    $region48: #{tpu_custom_call.1} parent=1 // pred_region
      %1422 = dma.done [#allocation4], 512
    $region49: #{tpu_custom_call.1} parent=1 // pred_fallthru
      _
    %1423 = vsyncpa [#allocation3], 1
    %1424 = vsyncpa [#allocation6], 1
    %1425 = vsyncpa [#allocation4], 1

</llo_original>
